<compile_context>
chip_gen: v5e
topology: v5e:2x2
jax: 0.10.0
libtpu: 0.0.40
codegen_flags: <defaults>
</compile_context>

<pallas_src>
import math

import jax
import jax.numpy as jnp
from jax.experimental import pallas as pl
from jax.experimental.pallas import tpu as pltpu


# ----------------------------------------------------------------------------
# Fused U-Net kernel (one batch element per grid step)
# ----------------------------------------------------------------------------

def _unet_kernel(x_ref, *refs):
    (we11, be11, we12, be12, we21, be21, we22, be22,
     wih, whh, blstm,
     wproj, bproj,
     wup1, bup1,
     wd11a, wd11b, bd11,
     wd12, bd12,
     wup2, bup2,
     wd21a, wd21b, bd21,
     wd22, bd22,
     wout, bout,
     out_ref, gx_ref, hs_ref) = refs

    S = x_ref.shape[2]            # T // 4
    H = whh.shape[0]              # LSTM hidden size (32)
    f32 = jnp.float32

    def cdot(a, b):
        return jnp.dot(a, b, preferred_element_type=f32)

    def shift_down(a):            # a'[s] = a[s-1], a'[0] = 0   (left zero pad)
        zero = jnp.zeros((1, a.shape[1]), f32)
        return jnp.concatenate([zero, a[:-1]], axis=0)

    def shift_up(a):              # a'[s] = a[s+1], a'[S-1] = 0 (right zero pad)
        zero = jnp.zeros((1, a.shape[1]), f32)
        return jnp.concatenate([a[1:], zero], axis=0)

    def conv3_2ph(parts, ws, b_ref, relu=True):
        """Conv(k=3, pad=1) on a length-2S sequence stored as phases (g0, g1).

        parts: list of (g0, g1) tuples (channel groups of the input).
        ws:    matching weight refs, each [3, Ci_part, Co] (split-weight form,
               so skip connections never need a channel concat)."""
        bv = b_ref[...].astype(f32)
        o0, o1 = bv, bv
        for (g0, g1), w in zip(parts, ws):
            w0, w1, w2 = w[0], w[1], w[2]
            o0 = o0 + cdot(shift_down(g1), w0) + cdot(g0, w1) + cdot(g1, w2)
            o1 = o1 + cdot(g0, w0) + cdot(g1, w1) + cdot(shift_up(g0), w2)
        if relu:
            o0, o1 = jnp.maximum(o0, 0.0), jnp.maximum(o1, 0.0)
        return o0, o1

    def conv3_4ph(parts, ws, b_ref, relu=True):
        """Conv(k=3, pad=1) on a length-4S sequence stored as phases (h0..h3)."""
        bv = b_ref[...].astype(f32)
        o0, o1, o2, o3 = bv, bv, bv, bv
        for (h0, h1, h2, h3), w in zip(parts, ws):
            w0, w1, w2 = w[0], w[1], w[2]
            o0 = o0 + cdot(shift_down(h3), w0) + cdot(h0, w1) + cdot(h1, w2)
            o1 = o1 + cdot(h0, w0) + cdot(h1, w1) + cdot(h2, w2)
            o2 = o2 + cdot(h1, w0) + cdot(h2, w1) + cdot(h3, w2)
            o3 = o3 + cdot(h2, w0) + cdot(h3, w1) + cdot(shift_up(h0), w2)
        if relu:
            o0, o1, o2, o3 = (jnp.maximum(v, 0.0) for v in (o0, o1, o2, o3))
        return o0, o1, o2, o3

    # -------------------------- encoder -------------------------------------
    x = tuple(x_ref[0, p].astype(f32) for p in range(4))          # 4 x [S, 3]

    e11 = conv3_4ph([x], [we11], be11)                            # 4 x [S, 32]
    e12 = conv3_4ph([e11], [we12], be12)                          # skip

    # MaxPool(k=2, s=2): length 4S -> 2S == elementwise max of phase pairs
    p1 = (jnp.maximum(e12[0], e12[1]), jnp.maximum(e12[2], e12[3]))

    e21 = conv3_2ph([p1], [we21], be21)                           # 2 x [S, 64]
    e22 = conv3_2ph([e21], [we22], be22)                          # skip

    xp2 = jnp.maximum(e22[0], e22[1])                             # [S, 64]
    # (dropout layers are identity in inference mode)

    # -------------------------- LSTM ----------------------------------------
    # Input projection hoisted out of the recurrence: one [S,64]@[64,4H] matmul.
    gx_ref[...] = cdot(xp2, wih[...]) + blstm[...]                # [S, 4H]

    def lstm_step(t, carry):
        h, c = carry                                              # [1, H] each
        gates = gx_ref[pl.ds(t, 1), :] + cdot(h, whh[...])        # [1, 4H]
        i = jax.nn.sigmoid(gates[:, 0:H])
        f = jax.nn.sigmoid(gates[:, H:2 * H])
        g = jnp.tanh(gates[:, 2 * H:3 * H])
        o = jax.nn.sigmoid(gates[:, 3 * H:4 * H])
        c = f * c + i * g
        h = o * jnp.tanh(c)
        hs_ref[pl.ds(t, 1), :] = h
        return h, c

    jax.lax.fori_loop(0, S, lstm_step,
                      (jnp.zeros((1, H), f32), jnp.zeros((1, H), f32)))
    lstm_out = hs_ref[...]                                        # [S, H]

    proj = cdot(lstm_out, wproj[...]) + bproj[...]                # [S, 64]

    # -------------------------- decoder -------------------------------------
    # upconv1: ConvTranspose(k=2, s=2): [S,64] -> 2-phase length-2S, 64 ch
    u1 = (cdot(proj, wup1[0]) + bup1[...],
          cdot(proj, wup1[1]) + bup1[...])

    d11 = conv3_2ph([u1, e22], [wd11a, wd11b], bd11)              # 2 x [S, 64]
    d12 = conv3_2ph([d11], [wd12], bd12)                          # 2 x [S, 64]

    # upconv2: 2-phase length-2S -> 4-phase length-4S, 32 ch
    v = (cdot(d12[0], wup2[0]) + bup2[...],
         cdot(d12[0], wup2[1]) + bup2[...],
         cdot(d12[1], wup2[0]) + bup2[...],
         cdot(d12[1], wup2[1]) + bup2[...])

    d21 = conv3_4ph([v, e12], [wd21a, wd21b], bd21)               # 4 x [S, 32]
    d22 = conv3_4ph([d21], [wd22], bd22)                          # 4 x [S, 32]

    # -------------------------- 1x1 output conv ------------------------------
    for p in range(4):
        y = cdot(d22[p], wout[...]) + bout[...]                   # [S, 3]
        out_ref[0, p] = y.astype(out_ref.dtype)


# ----------------------------------------------------------------------------
# pallas_call wrapper
# ----------------------------------------------------------------------------

def _const_index_map(ndim):
    return lambda b: (0,) * ndim


def _flatten_params(p):
    return (list(p["e11"]) + list(p["e12"]) + list(p["e21"]) + list(p["e22"])
            + list(p["lstm"]) + list(p["proj"]) + list(p["up1"])
            + list(p["d11"]) + list(p["d12"]) + list(p["up2"])
            + list(p["d21"]) + list(p["d22"]) + list(p["out"]))


def eeg_to_meg_unet_forward(x, params):
    """x: [B, 3, T] (PyTorch NCT layout), T % 4 == 0  ->  [B, 3, T]."""
    B, C, T = x.shape
    if T % 4 != 0:
        raise ValueError("time length must be divisible by 4")
    S = T // 4
    H = params["lstm"][1].shape[0]

    # [B, 3, T] -> 4-phase channels-last: xph[b, p, s, c] = x[b, c, 4*s + p]
    xph = jnp.transpose(x.reshape(B, C, S, 4), (0, 3, 2, 1))

    weights = _flatten_params(params)

    out_ph = pl.pallas_call(
        _unet_kernel,
        out_shape=jax.ShapeDtypeStruct((B, 4, S, C), x.dtype),
        grid=(B,),
        in_specs=([pl.BlockSpec((1, 4, S, C), lambda b: (b, 0, 0, 0))]
                  + [pl.BlockSpec(w.shape, _const_index_map(w.ndim))
                     for w in weights]),
        out_specs=pl.BlockSpec((1, 4, S, C), lambda b: (b, 0, 0, 0)),
        scratch_shapes=[
            pltpu.VMEM((S, 4 * H), jnp.float32),   # precomputed LSTM input gates
            pltpu.VMEM((S, H), jnp.float32),       # LSTM hidden-state sequence
        ],
        compiler_params=pltpu.CompilerParams(
            dimension_semantics=("parallel",),     # shard batch across TCs (v7x)
        ),
    )(xph, *weights)

    # out_ph[b, p, s, c] -> out[b, c, 4*s + p]
    return jnp.transpose(out_ph, (0, 3, 2, 1)).reshape(B, C, T)


# ----------------------------------------------------------------------------
# Deterministic synthetic parameters (PyTorch weight layouts converted)
# ----------------------------------------------------------------------------

def init_params(key):
    keys = iter(jax.random.split(key, 32))

    def nrm(shape, scale):
        return jax.random.normal(next(keys), shape, jnp.float32) * scale

    def conv_k3(ci, co):   # nn.Conv2d(ci, co, kernel_size=(1,3)) -> w[k,ci,co], b[1,co]
        w_pt = nrm((co, ci, 1, 3), 1.0 / math.sqrt(ci * 3))
        b = nrm((co,), 0.02)
        return jnp.transpose(w_pt[:, :, 0, :], (2, 1, 0)), b.reshape(1, co)

    def conv_k3_split(ci_a, ci_b, co):   # split along input channels (skip concat removal)
        w, b = conv_k3(ci_a + ci_b, co)
        return w[:, :ci_a, :], w[:, ci_a:, :], b

    def conv_k1(ci, co):   # 1x1 conv -> w[ci,co], b[1,co]
        w_pt = nrm((co, ci, 1), 1.0 / math.sqrt(ci))
        b = nrm((co,), 0.02)
        return jnp.transpose(w_pt[:, :, 0], (1, 0)), b.reshape(1, co)

    def convT_k2(ci, co):  # nn.ConvTranspose2d(ci, co, (1,2), stride (1,2)) -> w[k,ci,co]
        w_pt = nrm((ci, co, 1, 2), 1.0 / math.sqrt(ci * 2))
        b = nrm((co,), 0.02)
        return jnp.transpose(w_pt[:, :, 0, :], (2, 0, 1)), b.reshape(1, co)

    H = 32
    w_ih = nrm((4 * H, 64), 1.0 / math.sqrt(H))    # PyTorch weight_ih_l0
    w_hh = nrm((4 * H, H), 1.0 / math.sqrt(H))     # PyTorch weight_hh_l0
    b_ih = nrm((4 * H,), 0.02)
    b_hh = nrm((4 * H,), 0.02)

    return {
        "e11": conv_k3(3, 32), "e12": conv_k3(32, 32),
        "e21": conv_k3(32, 64), "e22": conv_k3(64, 64),
        "lstm": (jnp.transpose(w_ih, (1, 0)), jnp.transpose(w_hh, (1, 0)),
                 (b_ih + b_hh).reshape(1, 4 * H)),
        "proj": conv_k1(32, 64),
        "up1": convT_k2(64, 64),
        "d11": conv_k3_split(64, 64, 64),
        "d12": conv_k3(64, 64),
        "up2": convT_k2(64, 32),
        "d21": conv_k3_split(32, 32, 32),
        "d22": conv_k3(32, 32),
        "out": conv_k1(32, 3),
    }


# ----------------------------------------------------------------------------
# Plain-JAX reference (full-resolution formulation, for correctness check)
# ----------------------------------------------------------------------------

def reference_forward(x, p):
    B, C, T = x.shape
    h = jnp.transpose(x, (0, 2, 1))                       # [B, T, 3]

    def conv3(a, w, b, relu=True):
        ap = jnp.pad(a, ((0, 0), (1, 1), (0, 0)))
        y = ap[:, :-2] @ w[0] + ap[:, 1:-1] @ w[1] + ap[:, 2:] @ w[2] + b
        return jnp.maximum(y, 0.0) if relu else y

    def pool2(a):
        Bb, L, Ch = a.shape
        return a.reshape(Bb, L // 2, 2, Ch).max(axis=2)

    def up2x(a, w, b):
        Bb, L, _ = a.shape
        y0 = a @ w[0] + b
        y1 = a @ w[1] + b
        return jnp.stack([y0, y1], axis=2).reshape(Bb, 2 * L, -1)

    xe11 = conv3(h, *p["e11"])
    xe12 = conv3(xe11, *p["e12"])
    xp1 = pool2(xe12)
    xe21 = conv3(xp1, *p["e21"])
    xe22 = conv3(xe21, *p["e22"])
    xp2 = pool2(xe22)

    wih_t, whh_t, bl = p["lstm"]
    H = whh_t.shape[0]
    hs = jnp.zeros((B, H), jnp.float32)
    cs = jnp.zeros((B, H), jnp.float32)
    outs = []
    for t in range(xp2.shape[1]):
        gates = xp2[:, t] @ wih_t + hs @ whh_t + bl
        i = jax.nn.sigmoid(gates[:, 0:H])
        f = jax.nn.sigmoid(gates[:, H:2 * H])
        g = jnp.tanh(gates[:, 2 * H:3 * H])
        o = jax.nn.sigmoid(gates[:, 3 * H:4 * H])
        cs = f * cs + i * g
        hs = o * jnp.tanh(cs)
        outs.append(hs)
    lstm_out = jnp.stack(outs, axis=1)                    # [B, T/4, H]

    proj = lstm_out @ p["proj"][0] + p["proj"][1]         # [B, T/4, 64]

    xu1 = up2x(proj, *p["up1"])                           # [B, T/2, 64]
    wd11 = jnp.concatenate([p["d11"][0], p["d11"][1]], axis=1)
    xd11 = conv3(jnp.concatenate([xu1, xe22], axis=-1), wd11, p["d11"][2])
    xd12 = conv3(xd11, *p["d12"])

    xu2 = up2x(xd12, *p["up2"])                           # [B, T, 32]
    wd21 = jnp.concatenate([p["d21"][0], p["d21"][1]], axis=1)
    xd21 = conv3(jnp.concatenate([xu2, xe12], axis=-1), wd21, p["d21"][2])
    xd22 = conv3(xd21, *p["d22"])

    out = xd22 @ p["out"][0] + p["out"][1]                # [B, T, 3]
    return jnp.transpose(out, (0, 2, 1))


if __name__ == "__main__":
    key = jax.random.PRNGKey(0)
    k_param, k_x = jax.random.split(key)
    params = init_params(k_param)

    B, C, T = 2, 3, 16                                    # T divisible by 4
    x = jax.random.normal(k_x, (B, C, T), jnp.float32)

    fwd = jax.jit(eeg_to_meg_unet_forward)
    y = jax.block_until_ready(fwd(x, params))

    assert y.shape == (B, C, T), y.shape
    assert bool(jnp.all(jnp.isfinite(y)))

    # Cross-check the fused Pallas kernel against a plain-JAX reference.
    with jax.default_matmul_precision("highest"):
        y_ref = reference_forward(x, params)
    max_err = float(jnp.max(jnp.abs(y - y_ref)))
    assert max_err < 5e-2, f"Pallas forward deviates from reference: {max_err}"

    print("KERNEL_OK")
</pallas_src>

<mosaic_0001>
module attributes {stable_mosaic.version = 11 : i64} {
  func.func @_unet_kernel(%arg0: i32, %arg1: memref<1x4x4x3xf32, #tpu.memory_space<vmem>>, %arg2: memref<3x3x32xf32, #tpu.memory_space<vmem>>, %arg3: memref<1x32xf32, #tpu.memory_space<vmem>>, %arg4: memref<3x32x32xf32, #tpu.memory_space<vmem>>, %arg5: memref<1x32xf32, #tpu.memory_space<vmem>>, %arg6: memref<3x32x64xf32, #tpu.memory_space<vmem>>, %arg7: memref<1x64xf32, #tpu.memory_space<vmem>>, %arg8: memref<3x64x64xf32, #tpu.memory_space<vmem>>, %arg9: memref<1x64xf32, #tpu.memory_space<vmem>>, %arg10: memref<64x128xf32, #tpu.memory_space<vmem>>, %arg11: memref<32x128xf32, #tpu.memory_space<vmem>>, %arg12: memref<1x128xf32, #tpu.memory_space<vmem>>, %arg13: memref<32x64xf32, #tpu.memory_space<vmem>>, %arg14: memref<1x64xf32, #tpu.memory_space<vmem>>, %arg15: memref<2x64x64xf32, #tpu.memory_space<vmem>>, %arg16: memref<1x64xf32, #tpu.memory_space<vmem>>, %arg17: memref<3x64x64xf32, #tpu.memory_space<vmem>>, %arg18: memref<3x64x64xf32, #tpu.memory_space<vmem>>, %arg19: memref<1x64xf32, #tpu.memory_space<vmem>>, %arg20: memref<3x64x64xf32, #tpu.memory_space<vmem>>, %arg21: memref<1x64xf32, #tpu.memory_space<vmem>>, %arg22: memref<2x64x32xf32, #tpu.memory_space<vmem>>, %arg23: memref<1x32xf32, #tpu.memory_space<vmem>>, %arg24: memref<3x32x32xf32, #tpu.memory_space<vmem>>, %arg25: memref<3x32x32xf32, #tpu.memory_space<vmem>>, %arg26: memref<1x32xf32, #tpu.memory_space<vmem>>, %arg27: memref<3x32x32xf32, #tpu.memory_space<vmem>>, %arg28: memref<1x32xf32, #tpu.memory_space<vmem>>, %arg29: memref<32x3xf32, #tpu.memory_space<vmem>>, %arg30: memref<1x3xf32, #tpu.memory_space<vmem>>, %arg31: memref<1x4x4x3xf32, #tpu.memory_space<vmem>>, %arg32: memref<4x128xf32, #tpu.memory_space<vmem>>, %arg33: memref<4x32xf32, #tpu.memory_space<vmem>>) attributes {dimension_semantics = [#tpu.dimension_semantics<parallel>], iteration_bounds = array<i64: 2>, scalar_prefetch = 0 : i64, scratch_operands = 2 : i64, tpu.core_type = #tpu.core_type<tc>, window_params = [{transform_indices = @transform_0, window_bounds = array<i64: 1, 4, 4, 3>}, {pipeline_mode = #tpu.pipeline_mode<synchronous>, transform_indices = @transform_1, window_bounds = array<i64: 3, 3, 32>}, {pipeline_mode = #tpu.pipeline_mode<synchronous>, transform_indices = @transform_2, window_bounds = array<i64: 1, 32>}, {pipeline_mode = #tpu.pipeline_mode<synchronous>, transform_indices = @transform_3, window_bounds = array<i64: 3, 32, 32>}, {pipeline_mode = #tpu.pipeline_mode<synchronous>, transform_indices = @transform_4, window_bounds = array<i64: 1, 32>}, {pipeline_mode = #tpu.pipeline_mode<synchronous>, transform_indices = @transform_5, window_bounds = array<i64: 3, 32, 64>}, {pipeline_mode = #tpu.pipeline_mode<synchronous>, transform_indices = @transform_6, window_bounds = array<i64: 1, 64>}, {pipeline_mode = #tpu.pipeline_mode<synchronous>, transform_indices = @transform_7, window_bounds = array<i64: 3, 64, 64>}, {pipeline_mode = #tpu.pipeline_mode<synchronous>, transform_indices = @transform_8, window_bounds = array<i64: 1, 64>}, {pipeline_mode = #tpu.pipeline_mode<synchronous>, transform_indices = @transform_9, window_bounds = array<i64: 64, 128>}, {pipeline_mode = #tpu.pipeline_mode<synchronous>, transform_indices = @transform_10, window_bounds = array<i64: 32, 128>}, {pipeline_mode = #tpu.pipeline_mode<synchronous>, transform_indices = @transform_11, window_bounds = array<i64: 1, 128>}, {pipeline_mode = #tpu.pipeline_mode<synchronous>, transform_indices = @transform_12, window_bounds = array<i64: 32, 64>}, {pipeline_mode = #tpu.pipeline_mode<synchronous>, transform_indices = @transform_13, window_bounds = array<i64: 1, 64>}, {pipeline_mode = #tpu.pipeline_mode<synchronous>, transform_indices = @transform_14, window_bounds = array<i64: 2, 64, 64>}, {pipeline_mode = #tpu.pipeline_mode<synchronous>, transform_indices = @transform_15, window_bounds = array<i64: 1, 64>}, {pipeline_mode = #tpu.pipeline_mode<synchronous>, transform_indices = @transform_16, window_bounds = array<i64: 3, 64, 64>}, {pipeline_mode = #tpu.pipeline_mode<synchronous>, transform_indices = @transform_17, window_bounds = array<i64: 3, 64, 64>}, {pipeline_mode = #tpu.pipeline_mode<synchronous>, transform_indices = @transform_18, window_bounds = array<i64: 1, 64>}, {pipeline_mode = #tpu.pipeline_mode<synchronous>, transform_indices = @transform_19, window_bounds = array<i64: 3, 64, 64>}, {pipeline_mode = #tpu.pipeline_mode<synchronous>, transform_indices = @transform_20, window_bounds = array<i64: 1, 64>}, {pipeline_mode = #tpu.pipeline_mode<synchronous>, transform_indices = @transform_21, window_bounds = array<i64: 2, 64, 32>}, {pipeline_mode = #tpu.pipeline_mode<synchronous>, transform_indices = @transform_22, window_bounds = array<i64: 1, 32>}, {pipeline_mode = #tpu.pipeline_mode<synchronous>, transform_indices = @transform_23, window_bounds = array<i64: 3, 32, 32>}, {pipeline_mode = #tpu.pipeline_mode<synchronous>, transform_indices = @transform_24, window_bounds = array<i64: 3, 32, 32>}, {pipeline_mode = #tpu.pipeline_mode<synchronous>, transform_indices = @transform_25, window_bounds = array<i64: 1, 32>}, {pipeline_mode = #tpu.pipeline_mode<synchronous>, transform_indices = @transform_26, window_bounds = array<i64: 3, 32, 32>}, {pipeline_mode = #tpu.pipeline_mode<synchronous>, transform_indices = @transform_27, window_bounds = array<i64: 1, 32>}, {pipeline_mode = #tpu.pipeline_mode<synchronous>, transform_indices = @transform_28, window_bounds = array<i64: 32, 3>}, {pipeline_mode = #tpu.pipeline_mode<synchronous>, transform_indices = @transform_29, window_bounds = array<i64: 1, 3>}, {transform_indices = @transform_30, window_bounds = array<i64: 1, 4, 4, 3>}]} {
    %c0 = arith.constant 0 : index
    %c0_0 = arith.constant 0 : index
    %c0_1 = arith.constant 0 : index
    %c0_2 = arith.constant 0 : index
    %0 = vector.load %arg1[%c0, %c0_0, %c0_1, %c0_2] : memref<1x4x4x3xf32, #tpu.memory_space<vmem>>, vector<1x1x4x3xf32>
    %1 = vector.shape_cast %0 : vector<1x1x4x3xf32> to vector<4x3xf32>
    %c0_3 = arith.constant 0 : index
    %c1 = arith.constant 1 : index
    %c0_4 = arith.constant 0 : index
    %c0_5 = arith.constant 0 : index
    %2 = vector.load %arg1[%c0_3, %c1, %c0_4, %c0_5] : memref<1x4x4x3xf32, #tpu.memory_space<vmem>>, vector<1x1x4x3xf32>
    %3 = vector.shape_cast %2 : vector<1x1x4x3xf32> to vector<4x3xf32>
    %c0_6 = arith.constant 0 : index
    %c2 = arith.constant 2 : index
    %c0_7 = arith.constant 0 : index
    %c0_8 = arith.constant 0 : index
    %4 = vector.load %arg1[%c0_6, %c2, %c0_7, %c0_8] : memref<1x4x4x3xf32, #tpu.memory_space<vmem>>, vector<1x1x4x3xf32>
    %5 = vector.shape_cast %4 : vector<1x1x4x3xf32> to vector<4x3xf32>
    %c0_9 = arith.constant 0 : index
    %c3 = arith.constant 3 : index
    %c0_10 = arith.constant 0 : index
    %c0_11 = arith.constant 0 : index
    %6 = vector.load %arg1[%c0_9, %c3, %c0_10, %c0_11] : memref<1x4x4x3xf32, #tpu.memory_space<vmem>>, vector<1x1x4x3xf32>
    %7 = vector.shape_cast %6 : vector<1x1x4x3xf32> to vector<4x3xf32>
    %c0_12 = arith.constant 0 : index
    %c0_13 = arith.constant 0 : index
    %8 = vector.load %arg3[%c0_12, %c0_13] : memref<1x32xf32, #tpu.memory_space<vmem>>, vector<1x32xf32>
    %c0_14 = arith.constant 0 : index
    %c0_15 = arith.constant 0 : index
    %c0_16 = arith.constant 0 : index
    %9 = vector.load %arg2[%c0_14, %c0_15, %c0_16] : memref<3x3x32xf32, #tpu.memory_space<vmem>>, vector<1x3x32xf32>
    %10 = vector.shape_cast %9 : vector<1x3x32xf32> to vector<3x32xf32>
    %c1_17 = arith.constant 1 : index
    %c0_18 = arith.constant 0 : index
    %c0_19 = arith.constant 0 : index
    %11 = vector.load %arg2[%c1_17, %c0_18, %c0_19] : memref<3x3x32xf32, #tpu.memory_space<vmem>>, vector<1x3x32xf32>
    %12 = vector.shape_cast %11 : vector<1x3x32xf32> to vector<3x32xf32>
    %c2_20 = arith.constant 2 : index
    %c0_21 = arith.constant 0 : index
    %c0_22 = arith.constant 0 : index
    %13 = vector.load %arg2[%c2_20, %c0_21, %c0_22] : memref<3x3x32xf32, #tpu.memory_space<vmem>>, vector<1x3x32xf32>
    %14 = vector.shape_cast %13 : vector<1x3x32xf32> to vector<3x32xf32>
    %cst = arith.constant 0.000000e+00 : f32
    %15 = vector.broadcast %cst : f32 to vector<1x3xf32>
    %16 = vector.extract_strided_slice %7 {offsets = [0, 0], sizes = [3, 3], strides = [1, 1]} : vector<4x3xf32> to vector<3x3xf32>
    %17 = tpu.concatenate %15, %16 in 0 : vector<1x3xf32>, vector<3x3xf32> -> vector<4x3xf32>
    %cst_23 = arith.constant dense<0.000000e+00> : vector<4x32xf32>
    %18 = tpu.matmul %17, %10, %cst_23 {dimension_numbers = #tpu.dot_dimension_numbers<[1], [0], [0], [1], [0, 0, 1, 1], [], []>} : vector<4x3xf32>, vector<3x32xf32>, vector<4x32xf32> -> vector<4x32xf32>
    %19 = vector.broadcast %8 : vector<1x32xf32> to vector<4x32xf32>
    %20 = arith.addf %19, %18 : vector<4x32xf32>
    %cst_24 = arith.constant dense<0.000000e+00> : vector<4x32xf32>
    %21 = tpu.matmul %1, %12, %cst_24 {dimension_numbers = #tpu.dot_dimension_numbers<[1], [0], [0], [1], [0, 0, 1, 1], [], []>} : vector<4x3xf32>, vector<3x32xf32>, vector<4x32xf32> -> vector<4x32xf32>
    %22 = arith.addf %20, %21 : vector<4x32xf32>
    %cst_25 = arith.constant dense<0.000000e+00> : vector<4x32xf32>
    %23 = tpu.matmul %3, %14, %cst_25 {dimension_numbers = #tpu.dot_dimension_numbers<[1], [0], [0], [1], [0, 0, 1, 1], [], []>} : vector<4x3xf32>, vector<3x32xf32>, vector<4x32xf32> -> vector<4x32xf32>
    %24 = arith.addf %22, %23 : vector<4x32xf32>
    %cst_26 = arith.constant dense<0.000000e+00> : vector<4x32xf32>
    %25 = tpu.matmul %1, %10, %cst_26 {dimension_numbers = #tpu.dot_dimension_numbers<[1], [0], [0], [1], [0, 0, 1, 1], [], []>} : vector<4x3xf32>, vector<3x32xf32>, vector<4x32xf32> -> vector<4x32xf32>
    %26 = vector.broadcast %8 : vector<1x32xf32> to vector<4x32xf32>
    %27 = arith.addf %26, %25 : vector<4x32xf32>
    %cst_27 = arith.constant dense<0.000000e+00> : vector<4x32xf32>
    %28 = tpu.matmul %3, %12, %cst_27 {dimension_numbers = #tpu.dot_dimension_numbers<[1], [0], [0], [1], [0, 0, 1, 1], [], []>} : vector<4x3xf32>, vector<3x32xf32>, vector<4x32xf32> -> vector<4x32xf32>
    %29 = arith.addf %27, %28 : vector<4x32xf32>
    %cst_28 = arith.constant dense<0.000000e+00> : vector<4x32xf32>
    %30 = tpu.matmul %5, %14, %cst_28 {dimension_numbers = #tpu.dot_dimension_numbers<[1], [0], [0], [1], [0, 0, 1, 1], [], []>} : vector<4x3xf32>, vector<3x32xf32>, vector<4x32xf32> -> vector<4x32xf32>
    %31 = arith.addf %29, %30 : vector<4x32xf32>
    %cst_29 = arith.constant dense<0.000000e+00> : vector<4x32xf32>
    %32 = tpu.matmul %3, %10, %cst_29 {dimension_numbers = #tpu.dot_dimension_numbers<[1], [0], [0], [1], [0, 0, 1, 1], [], []>} : vector<4x3xf32>, vector<3x32xf32>, vector<4x32xf32> -> vector<4x32xf32>
    %33 = vector.broadcast %8 : vector<1x32xf32> to vector<4x32xf32>
    %34 = arith.addf %33, %32 : vector<4x32xf32>
    %cst_30 = arith.constant dense<0.000000e+00> : vector<4x32xf32>
    %35 = tpu.matmul %5, %12, %cst_30 {dimension_numbers = #tpu.dot_dimension_numbers<[1], [0], [0], [1], [0, 0, 1, 1], [], []>} : vector<4x3xf32>, vector<3x32xf32>, vector<4x32xf32> -> vector<4x32xf32>
    %36 = arith.addf %34, %35 : vector<4x32xf32>
    %cst_31 = arith.constant dense<0.000000e+00> : vector<4x32xf32>
    %37 = tpu.matmul %7, %14, %cst_31 {dimension_numbers = #tpu.dot_dimension_numbers<[1], [0], [0], [1], [0, 0, 1, 1], [], []>} : vector<4x3xf32>, vector<3x32xf32>, vector<4x32xf32> -> vector<4x32xf32>
    %38 = arith.addf %36, %37 : vector<4x32xf32>
    %cst_32 = arith.constant dense<0.000000e+00> : vector<4x32xf32>
    %39 = tpu.matmul %5, %10, %cst_32 {dimension_numbers = #tpu.dot_dimension_numbers<[1], [0], [0], [1], [0, 0, 1, 1], [], []>} : vector<4x3xf32>, vector<3x32xf32>, vector<4x32xf32> -> vector<4x32xf32>
    %40 = vector.broadcast %8 : vector<1x32xf32> to vector<4x32xf32>
    %41 = arith.addf %40, %39 : vector<4x32xf32>
    %cst_33 = arith.constant dense<0.000000e+00> : vector<4x32xf32>
    %42 = tpu.matmul %7, %12, %cst_33 {dimension_numbers = #tpu.dot_dimension_numbers<[1], [0], [0], [1], [0, 0, 1, 1], [], []>} : vector<4x3xf32>, vector<3x32xf32>, vector<4x32xf32> -> vector<4x32xf32>
    %43 = arith.addf %41, %42 : vector<4x32xf32>
    %cst_34 = arith.constant 0.000000e+00 : f32
    %44 = vector.broadcast %cst_34 : f32 to vector<1x3xf32>
    %45 = vector.extract_strided_slice %1 {offsets = [1, 0], sizes = [3, 3], strides = [1, 1]} : vector<4x3xf32> to vector<3x3xf32>
    %46 = tpu.concatenate %45, %44 in 0 : vector<3x3xf32>, vector<1x3xf32> -> vector<4x3xf32>
    %cst_35 = arith.constant dense<0.000000e+00> : vector<4x32xf32>
    %47 = tpu.matmul %46, %14, %cst_35 {dimension_numbers = #tpu.dot_dimension_numbers<[1], [0], [0], [1], [0, 0, 1, 1], [], []>} : vector<4x3xf32>, vector<3x32xf32>, vector<4x32xf32> -> vector<4x32xf32>
    %48 = arith.addf %43, %47 : vector<4x32xf32>
    %cst_36 = arith.constant 0.000000e+00 : f32
    %49 = vector.broadcast %cst_36 : f32 to vector<4x32xf32>
    %50 = arith.maximumf %24, %49 : vector<4x32xf32>
    %cst_37 = arith.constant 0.000000e+00 : f32
    %51 = vector.broadcast %cst_37 : f32 to vector<4x32xf32>
    %52 = arith.maximumf %31, %51 : vector<4x32xf32>
    %cst_38 = arith.constant 0.000000e+00 : f32
    %53 = vector.broadcast %cst_38 : f32 to vector<4x32xf32>
    %54 = arith.maximumf %38, %53 : vector<4x32xf32>
    %cst_39 = arith.constant 0.000000e+00 : f32
    %55 = vector.broadcast %cst_39 : f32 to vector<4x32xf32>
    %56 = arith.maximumf %48, %55 : vector<4x32xf32>
    %c0_40 = arith.constant 0 : index
    %c0_41 = arith.constant 0 : index
    %57 = vector.load %arg5[%c0_40, %c0_41] : memref<1x32xf32, #tpu.memory_space<vmem>>, vector<1x32xf32>
    %c0_42 = arith.constant 0 : index
    %c0_43 = arith.constant 0 : index
    %c0_44 = arith.constant 0 : index
    %58 = vector.load %arg4[%c0_42, %c0_43, %c0_44] : memref<3x32x32xf32, #tpu.memory_space<vmem>>, vector<1x32x32xf32>
    %59 = vector.shape_cast %58 : vector<1x32x32xf32> to vector<32x32xf32>
    %c1_45 = arith.constant 1 : index
    %c0_46 = arith.constant 0 : index
    %c0_47 = arith.constant 0 : index
    %60 = vector.load %arg4[%c1_45, %c0_46, %c0_47] : memref<3x32x32xf32, #tpu.memory_space<vmem>>, vector<1x32x32xf32>
    %61 = vector.shape_cast %60 : vector<1x32x32xf32> to vector<32x32xf32>
    %c2_48 = arith.constant 2 : index
    %c0_49 = arith.constant 0 : index
    %c0_50 = arith.constant 0 : index
    %62 = vector.load %arg4[%c2_48, %c0_49, %c0_50] : memref<3x32x32xf32, #tpu.memory_space<vmem>>, vector<1x32x32xf32>
    %63 = vector.shape_cast %62 : vector<1x32x32xf32> to vector<32x32xf32>
    %cst_51 = arith.constant 0.000000e+00 : f32
    %64 = vector.broadcast %cst_51 : f32 to vector<1x32xf32>
    %65 = vector.extract_strided_slice %56 {offsets = [0, 0], sizes = [3, 32], strides = [1, 1]} : vector<4x32xf32> to vector<3x32xf32>
    %66 = tpu.concatenate %64, %65 in 0 : vector<1x32xf32>, vector<3x32xf32> -> vector<4x32xf32>
    %cst_52 = arith.constant dense<0.000000e+00> : vector<4x32xf32>
    %67 = tpu.matmul %66, %59, %cst_52 {dimension_numbers = #tpu.dot_dimension_numbers<[1], [0], [0], [1], [0, 0, 1, 1], [], []>} : vector<4x32xf32>, vector<32x32xf32>, vector<4x32xf32> -> vector<4x32xf32>
    %68 = vector.broadcast %57 : vector<1x32xf32> to vector<4x32xf32>
    %69 = arith.addf %68, %67 : vector<4x32xf32>
    %cst_53 = arith.constant dense<0.000000e+00> : vector<4x32xf32>
    %70 = tpu.matmul %50, %61, %cst_53 {dimension_numbers = #tpu.dot_dimension_numbers<[1], [0], [0], [1], [0, 0, 1, 1], [], []>} : vector<4x32xf32>, vector<32x32xf32>, vector<4x32xf32> -> vector<4x32xf32>
    %71 = arith.addf %69, %70 : vector<4x32xf32>
    %cst_54 = arith.constant dense<0.000000e+00> : vector<4x32xf32>
    %72 = tpu.matmul %52, %63, %cst_54 {dimension_numbers = #tpu.dot_dimension_numbers<[1], [0], [0], [1], [0, 0, 1, 1], [], []>} : vector<4x32xf32>, vector<32x32xf32>, vector<4x32xf32> -> vector<4x32xf32>
    %73 = arith.addf %71, %72 : vector<4x32xf32>
    %cst_55 = arith.constant dense<0.000000e+00> : vector<4x32xf32>
    %74 = tpu.matmul %50, %59, %cst_55 {dimension_numbers = #tpu.dot_dimension_numbers<[1], [0], [0], [1], [0, 0, 1, 1], [], []>} : vector<4x32xf32>, vector<32x32xf32>, vector<4x32xf32> -> vector<4x32xf32>
    %75 = vector.broadcast %57 : vector<1x32xf32> to vector<4x32xf32>
    %76 = arith.addf %75, %74 : vector<4x32xf32>
    %cst_56 = arith.constant dense<0.000000e+00> : vector<4x32xf32>
    %77 = tpu.matmul %52, %61, %cst_56 {dimension_numbers = #tpu.dot_dimension_numbers<[1], [0], [0], [1], [0, 0, 1, 1], [], []>} : vector<4x32xf32>, vector<32x32xf32>, vector<4x32xf32> -> vector<4x32xf32>
    %78 = arith.addf %76, %77 : vector<4x32xf32>
    %cst_57 = arith.constant dense<0.000000e+00> : vector<4x32xf32>
    %79 = tpu.matmul %54, %63, %cst_57 {dimension_numbers = #tpu.dot_dimension_numbers<[1], [0], [0], [1], [0, 0, 1, 1], [], []>} : vector<4x32xf32>, vector<32x32xf32>, vector<4x32xf32> -> vector<4x32xf32>
    %80 = arith.addf %78, %79 : vector<4x32xf32>
    %cst_58 = arith.constant dense<0.000000e+00> : vector<4x32xf32>
    %81 = tpu.matmul %52, %59, %cst_58 {dimension_numbers = #tpu.dot_dimension_numbers<[1], [0], [0], [1], [0, 0, 1, 1], [], []>} : vector<4x32xf32>, vector<32x32xf32>, vector<4x32xf32> -> vector<4x32xf32>
    %82 = vector.broadcast %57 : vector<1x32xf32> to vector<4x32xf32>
    %83 = arith.addf %82, %81 : vector<4x32xf32>
    %cst_59 = arith.constant dense<0.000000e+00> : vector<4x32xf32>
    %84 = tpu.matmul %54, %61, %cst_59 {dimension_numbers = #tpu.dot_dimension_numbers<[1], [0], [0], [1], [0, 0, 1, 1], [], []>} : vector<4x32xf32>, vector<32x32xf32>, vector<4x32xf32> -> vector<4x32xf32>
    %85 = arith.addf %83, %84 : vector<4x32xf32>
    %cst_60 = arith.constant dense<0.000000e+00> : vector<4x32xf32>
    %86 = tpu.matmul %56, %63, %cst_60 {dimension_numbers = #tpu.dot_dimension_numbers<[1], [0], [0], [1], [0, 0, 1, 1], [], []>} : vector<4x32xf32>, vector<32x32xf32>, vector<4x32xf32> -> vector<4x32xf32>
    %87 = arith.addf %85, %86 : vector<4x32xf32>
    %cst_61 = arith.constant dense<0.000000e+00> : vector<4x32xf32>
    %88 = tpu.matmul %54, %59, %cst_61 {dimension_numbers = #tpu.dot_dimension_numbers<[1], [0], [0], [1], [0, 0, 1, 1], [], []>} : vector<4x32xf32>, vector<32x32xf32>, vector<4x32xf32> -> vector<4x32xf32>
    %89 = vector.broadcast %57 : vector<1x32xf32> to vector<4x32xf32>
    %90 = arith.addf %89, %88 : vector<4x32xf32>
    %cst_62 = arith.constant dense<0.000000e+00> : vector<4x32xf32>
    %91 = tpu.matmul %56, %61, %cst_62 {dimension_numbers = #tpu.dot_dimension_numbers<[1], [0], [0], [1], [0, 0, 1, 1], [], []>} : vector<4x32xf32>, vector<32x32xf32>, vector<4x32xf32> -> vector<4x32xf32>
    %92 = arith.addf %90, %91 : vector<4x32xf32>
    %cst_63 = arith.constant 0.000000e+00 : f32
    %93 = vector.broadcast %cst_63 : f32 to vector<1x32xf32>
    %94 = vector.extract_strided_slice %50 {offsets = [1, 0], sizes = [3, 32], strides = [1, 1]} : vector<4x32xf32> to vector<3x32xf32>
    %95 = tpu.concatenate %94, %93 in 0 : vector<3x32xf32>, vector<1x32xf32> -> vector<4x32xf32>
    %cst_64 = arith.constant dense<0.000000e+00> : vector<4x32xf32>
    %96 = tpu.matmul %95, %63, %cst_64 {dimension_numbers = #tpu.dot_dimension_numbers<[1], [0], [0], [1], [0, 0, 1, 1], [], []>} : vector<4x32xf32>, vector<32x32xf32>, vector<4x32xf32> -> vector<4x32xf32>
    %97 = arith.addf %92, %96 : vector<4x32xf32>
    %cst_65 = arith.constant 0.000000e+00 : f32
    %98 = vector.broadcast %cst_65 : f32 to vector<4x32xf32>
    %99 = arith.maximumf %73, %98 : vector<4x32xf32>
    %cst_66 = arith.constant 0.000000e+00 : f32
    %100 = vector.broadcast %cst_66 : f32 to vector<4x32xf32>
    %101 = arith.maximumf %80, %100 : vector<4x32xf32>
    %cst_67 = arith.constant 0.000000e+00 : f32
    %102 = vector.broadcast %cst_67 : f32 to vector<4x32xf32>
    %103 = arith.maximumf %87, %102 : vector<4x32xf32>
    %cst_68 = arith.constant 0.000000e+00 : f32
    %104 = vector.broadcast %cst_68 : f32 to vector<4x32xf32>
    %105 = arith.maximumf %97, %104 : vector<4x32xf32>
    %106 = arith.maximumf %99, %101 : vector<4x32xf32>
    %107 = arith.maximumf %103, %105 : vector<4x32xf32>
    %c0_69 = arith.constant 0 : index
    %c0_70 = arith.constant 0 : index
    %108 = vector.load %arg7[%c0_69, %c0_70] : memref<1x64xf32, #tpu.memory_space<vmem>>, vector<1x64xf32>
    %c0_71 = arith.constant 0 : index
    %c0_72 = arith.constant 0 : index
    %c0_73 = arith.constant 0 : index
    %109 = vector.load %arg6[%c0_71, %c0_72, %c0_73] : memref<3x32x64xf32, #tpu.memory_space<vmem>>, vector<1x32x64xf32>
    %110 = vector.shape_cast %109 : vector<1x32x64xf32> to vector<32x64xf32>
    %c1_74 = arith.constant 1 : index
    %c0_75 = arith.constant 0 : index
    %c0_76 = arith.constant 0 : index
    %111 = vector.load %arg6[%c1_74, %c0_75, %c0_76] : memref<3x32x64xf32, #tpu.memory_space<vmem>>, vector<1x32x64xf32>
    %112 = vector.shape_cast %111 : vector<1x32x64xf32> to vector<32x64xf32>
    %c2_77 = arith.constant 2 : index
    %c0_78 = arith.constant 0 : index
    %c0_79 = arith.constant 0 : index
    %113 = vector.load %arg6[%c2_77, %c0_78, %c0_79] : memref<3x32x64xf32, #tpu.memory_space<vmem>>, vector<1x32x64xf32>
    %114 = vector.shape_cast %113 : vector<1x32x64xf32> to vector<32x64xf32>
    %cst_80 = arith.constant 0.000000e+00 : f32
    %115 = vector.broadcast %cst_80 : f32 to vector<1x32xf32>
    %116 = vector.extract_strided_slice %107 {offsets = [0, 0], sizes = [3, 32], strides = [1, 1]} : vector<4x32xf32> to vector<3x32xf32>
    %117 = tpu.concatenate %115, %116 in 0 : vector<1x32xf32>, vector<3x32xf32> -> vector<4x32xf32>
    %cst_81 = arith.constant dense<0.000000e+00> : vector<4x64xf32>
    %118 = tpu.matmul %117, %110, %cst_81 {dimension_numbers = #tpu.dot_dimension_numbers<[1], [0], [0], [1], [0, 0, 1, 1], [], []>} : vector<4x32xf32>, vector<32x64xf32>, vector<4x64xf32> -> vector<4x64xf32>
    %119 = vector.broadcast %108 : vector<1x64xf32> to vector<4x64xf32>
    %120 = arith.addf %119, %118 : vector<4x64xf32>
    %cst_82 = arith.constant dense<0.000000e+00> : vector<4x64xf32>
    %121 = tpu.matmul %106, %112, %cst_82 {dimension_numbers = #tpu.dot_dimension_numbers<[1], [0], [0], [1], [0, 0, 1, 1], [], []>} : vector<4x32xf32>, vector<32x64xf32>, vector<4x64xf32> -> vector<4x64xf32>
    %122 = arith.addf %120, %121 : vector<4x64xf32>
    %cst_83 = arith.constant dense<0.000000e+00> : vector<4x64xf32>
    %123 = tpu.matmul %107, %114, %cst_83 {dimension_numbers = #tpu.dot_dimension_numbers<[1], [0], [0], [1], [0, 0, 1, 1], [], []>} : vector<4x32xf32>, vector<32x64xf32>, vector<4x64xf32> -> vector<4x64xf32>
    %124 = arith.addf %122, %123 : vector<4x64xf32>
    %cst_84 = arith.constant dense<0.000000e+00> : vector<4x64xf32>
    %125 = tpu.matmul %106, %110, %cst_84 {dimension_numbers = #tpu.dot_dimension_numbers<[1], [0], [0], [1], [0, 0, 1, 1], [], []>} : vector<4x32xf32>, vector<32x64xf32>, vector<4x64xf32> -> vector<4x64xf32>
    %126 = vector.broadcast %108 : vector<1x64xf32> to vector<4x64xf32>
    %127 = arith.addf %126, %125 : vector<4x64xf32>
    %cst_85 = arith.constant dense<0.000000e+00> : vector<4x64xf32>
    %128 = tpu.matmul %107, %112, %cst_85 {dimension_numbers = #tpu.dot_dimension_numbers<[1], [0], [0], [1], [0, 0, 1, 1], [], []>} : vector<4x32xf32>, vector<32x64xf32>, vector<4x64xf32> -> vector<4x64xf32>
    %129 = arith.addf %127, %128 : vector<4x64xf32>
    %cst_86 = arith.constant 0.000000e+00 : f32
    %130 = vector.broadcast %cst_86 : f32 to vector<1x32xf32>
    %131 = vector.extract_strided_slice %106 {offsets = [1, 0], sizes = [3, 32], strides = [1, 1]} : vector<4x32xf32> to vector<3x32xf32>
    %132 = tpu.concatenate %131, %130 in 0 : vector<3x32xf32>, vector<1x32xf32> -> vector<4x32xf32>
    %cst_87 = arith.constant dense<0.000000e+00> : vector<4x64xf32>
    %133 = tpu.matmul %132, %114, %cst_87 {dimension_numbers = #tpu.dot_dimension_numbers<[1], [0], [0], [1], [0, 0, 1, 1], [], []>} : vector<4x32xf32>, vector<32x64xf32>, vector<4x64xf32> -> vector<4x64xf32>
    %134 = arith.addf %129, %133 : vector<4x64xf32>
    %cst_88 = arith.constant 0.000000e+00 : f32
    %135 = vector.broadcast %cst_88 : f32 to vector<4x64xf32>
    %136 = arith.maximumf %124, %135 : vector<4x64xf32>
    %cst_89 = arith.constant 0.000000e+00 : f32
    %137 = vector.broadcast %cst_89 : f32 to vector<4x64xf32>
    %138 = arith.maximumf %134, %137 : vector<4x64xf32>
    %c0_90 = arith.constant 0 : index
    %c0_91 = arith.constant 0 : index
    %139 = vector.load %arg9[%c0_90, %c0_91] : memref<1x64xf32, #tpu.memory_space<vmem>>, vector<1x64xf32>
    %c0_92 = arith.constant 0 : index
    %c0_93 = arith.constant 0 : index
    %c0_94 = arith.constant 0 : index
    %140 = vector.load %arg8[%c0_92, %c0_93, %c0_94] : memref<3x64x64xf32, #tpu.memory_space<vmem>>, vector<1x64x64xf32>
    %141 = vector.shape_cast %140 : vector<1x64x64xf32> to vector<64x64xf32>
    %c1_95 = arith.constant 1 : index
    %c0_96 = arith.constant 0 : index
    %c0_97 = arith.constant 0 : index
    %142 = vector.load %arg8[%c1_95, %c0_96, %c0_97] : memref<3x64x64xf32, #tpu.memory_space<vmem>>, vector<1x64x64xf32>
    %143 = vector.shape_cast %142 : vector<1x64x64xf32> to vector<64x64xf32>
    %c2_98 = arith.constant 2 : index
    %c0_99 = arith.constant 0 : index
    %c0_100 = arith.constant 0 : index
    %144 = vector.load %arg8[%c2_98, %c0_99, %c0_100] : memref<3x64x64xf32, #tpu.memory_space<vmem>>, vector<1x64x64xf32>
    %145 = vector.shape_cast %144 : vector<1x64x64xf32> to vector<64x64xf32>
    %cst_101 = arith.constant 0.000000e+00 : f32
    %146 = vector.broadcast %cst_101 : f32 to vector<1x64xf32>
    %147 = vector.extract_strided_slice %138 {offsets = [0, 0], sizes = [3, 64], strides = [1, 1]} : vector<4x64xf32> to vector<3x64xf32>
    %148 = tpu.concatenate %146, %147 in 0 : vector<1x64xf32>, vector<3x64xf32> -> vector<4x64xf32>
    %cst_102 = arith.constant dense<0.000000e+00> : vector<4x64xf32>
    %149 = tpu.matmul %148, %141, %cst_102 {dimension_numbers = #tpu.dot_dimension_numbers<[1], [0], [0], [1], [0, 0, 1, 1], [], []>} : vector<4x64xf32>, vector<64x64xf32>, vector<4x64xf32> -> vector<4x64xf32>
    %150 = vector.broadcast %139 : vector<1x64xf32> to vector<4x64xf32>
    %151 = arith.addf %150, %149 : vector<4x64xf32>
    %cst_103 = arith.constant dense<0.000000e+00> : vector<4x64xf32>
    %152 = tpu.matmul %136, %143, %cst_103 {dimension_numbers = #tpu.dot_dimension_numbers<[1], [0], [0], [1], [0, 0, 1, 1], [], []>} : vector<4x64xf32>, vector<64x64xf32>, vector<4x64xf32> -> vector<4x64xf32>
    %153 = arith.addf %151, %152 : vector<4x64xf32>
    %cst_104 = arith.constant dense<0.000000e+00> : vector<4x64xf32>
    %154 = tpu.matmul %138, %145, %cst_104 {dimension_numbers = #tpu.dot_dimension_numbers<[1], [0], [0], [1], [0, 0, 1, 1], [], []>} : vector<4x64xf32>, vector<64x64xf32>, vector<4x64xf32> -> vector<4x64xf32>
    %155 = arith.addf %153, %154 : vector<4x64xf32>
    %cst_105 = arith.constant dense<0.000000e+00> : vector<4x64xf32>
    %156 = tpu.matmul %136, %141, %cst_105 {dimension_numbers = #tpu.dot_dimension_numbers<[1], [0], [0], [1], [0, 0, 1, 1], [], []>} : vector<4x64xf32>, vector<64x64xf32>, vector<4x64xf32> -> vector<4x64xf32>
    %157 = vector.broadcast %139 : vector<1x64xf32> to vector<4x64xf32>
    %158 = arith.addf %157, %156 : vector<4x64xf32>
    %cst_106 = arith.constant dense<0.000000e+00> : vector<4x64xf32>
    %159 = tpu.matmul %138, %143, %cst_106 {dimension_numbers = #tpu.dot_dimension_numbers<[1], [0], [0], [1], [0, 0, 1, 1], [], []>} : vector<4x64xf32>, vector<64x64xf32>, vector<4x64xf32> -> vector<4x64xf32>
    %160 = arith.addf %158, %159 : vector<4x64xf32>
    %cst_107 = arith.constant 0.000000e+00 : f32
    %161 = vector.broadcast %cst_107 : f32 to vector<1x64xf32>
    %162 = vector.extract_strided_slice %136 {offsets = [1, 0], sizes = [3, 64], strides = [1, 1]} : vector<4x64xf32> to vector<3x64xf32>
    %163 = tpu.concatenate %162, %161 in 0 : vector<3x64xf32>, vector<1x64xf32> -> vector<4x64xf32>
    %cst_108 = arith.constant dense<0.000000e+00> : vector<4x64xf32>
    %164 = tpu.matmul %163, %145, %cst_108 {dimension_numbers = #tpu.dot_dimension_numbers<[1], [0], [0], [1], [0, 0, 1, 1], [], []>} : vector<4x64xf32>, vector<64x64xf32>, vector<4x64xf32> -> vector<4x64xf32>
    %165 = arith.addf %160, %164 : vector<4x64xf32>
    %cst_109 = arith.constant 0.000000e+00 : f32
    %166 = vector.broadcast %cst_109 : f32 to vector<4x64xf32>
    %167 = arith.maximumf %155, %166 : vector<4x64xf32>
    %cst_110 = arith.constant 0.000000e+00 : f32
    %168 = vector.broadcast %cst_110 : f32 to vector<4x64xf32>
    %169 = arith.maximumf %165, %168 : vector<4x64xf32>
    %170 = arith.maximumf %167, %169 : vector<4x64xf32>
    %c0_111 = arith.constant 0 : index
    %c0_112 = arith.constant 0 : index
    %171 = vector.load %arg10[%c0_111, %c0_112] : memref<64x128xf32, #tpu.memory_space<vmem>>, vector<64x128xf32>
    %cst_113 = arith.constant dense<0.000000e+00> : vector<4x128xf32>
    %172 = tpu.matmul %170, %171, %cst_113 {dimension_numbers = #tpu.dot_dimension_numbers<[1], [0], [0], [1], [0, 0, 1, 1], [], []>} : vector<4x64xf32>, vector<64x128xf32>, vector<4x128xf32> -> vector<4x128xf32>
    %c0_114 = arith.constant 0 : index
    %c0_115 = arith.constant 0 : index
    %173 = vector.load %arg12[%c0_114, %c0_115] : memref<1x128xf32, #tpu.memory_space<vmem>>, vector<1x128xf32>
    %174 = vector.broadcast %173 : vector<1x128xf32> to vector<4x128xf32>
    %175 = arith.addf %172, %174 : vector<4x128xf32>
    %c0_116 = arith.constant 0 : index
    %c0_117 = arith.constant 0 : index
    %176 = vector.load %arg32[%c0_116, %c0_117] : memref<4x128xf32, #tpu.memory_space<vmem>>, vector<4x128xf32>
    tpu.vector_store %arg32[%c0_116, %c0_117], %175 {strides = array<i32>} : memref<4x128xf32, #tpu.memory_space<vmem>>, vector<4x128xf32>,
    %cst_118 = arith.constant 0.000000e+00 : f32
    %177 = vector.broadcast %cst_118 : f32 to vector<1x32xf32>
    %cst_119 = arith.constant 0.000000e+00 : f32
    %178 = vector.broadcast %cst_119 : f32 to vector<1x32xf32>
    %c0_i32 = arith.constant 0 : i32
    %c4_i32 = arith.constant 4 : i32
    %179 = arith.addi %c0_i32, %c4_i32 : i32
    %c1_i32 = arith.constant 1 : i32
    %180:2 = scf.for %arg34 = %c0_i32 to %179 step %c1_i32 iter_args(%arg35 = %177, %arg36 = %178) -> (vector<1x32xf32>, vector<1x32xf32>)  : i32 {
      %475 = arith.index_cast %arg34 : i32 to index
      %c0_340 = arith.constant 0 : index
      %476 = vector.load %arg32[%475, %c0_340] : memref<4x128xf32, #tpu.memory_space<vmem>>, vector<1x128xf32>
      %c0_341 = arith.constant 0 : index
      %c0_342 = arith.constant 0 : index
      %477 = vector.load %arg11[%c0_341, %c0_342] : memref<32x128xf32, #tpu.memory_space<vmem>>, vector<32x128xf32>
      %cst_343 = arith.constant dense<0.000000e+00> : vector<1x128xf32>
      %478 = tpu.matmul %arg35, %477, %cst_343 {dimension_numbers = #tpu.dot_dimension_numbers<[1], [0], [0], [1], [0, 0, 1, 1], [], []>} : vector<1x32xf32>, vector<32x128xf32>, vector<1x128xf32> -> vector<1x128xf32>
      %479 = arith.addf %476, %478 : vector<1x128xf32>
      %480 = vector.extract_strided_slice %479 {offsets = [0, 0], sizes = [1, 32], strides = [1, 1]} : vector<1x128xf32> to vector<1x32xf32>
      %481 = arith.negf %480 : vector<1x32xf32>
      %482 = math.exp %481 : vector<1x32xf32>
      %cst_344 = arith.constant 1.000000e+00 : f32
      %483 = vector.broadcast %cst_344 : f32 to vector<1x32xf32>
      %484 = arith.addf %483, %482 : vector<1x32xf32>
      %485 = arith.divf %483, %484 : vector<1x32xf32>
      %486 = vector.extract_strided_slice %479 {offsets = [0, 32], sizes = [1, 32], strides = [1, 1]} : vector<1x128xf32> to vector<1x32xf32>
      %487 = arith.negf %486 : vector<1x32xf32>
      %488 = math.exp %487 : vector<1x32xf32>
      %cst_345 = arith.constant 1.000000e+00 : f32
      %489 = vector.broadcast %cst_345 : f32 to vector<1x32xf32>
      %490 = arith.addf %489, %488 : vector<1x32xf32>
      %491 = arith.divf %489, %490 : vector<1x32xf32>
      %492 = vector.extract_strided_slice %479 {offsets = [0, 64], sizes = [1, 32], strides = [1, 1]} : vector<1x128xf32> to vector<1x32xf32>
      %493 = math.tanh %492 : vector<1x32xf32>
      %494 = vector.extract_strided_slice %479 {offsets = [0, 96], sizes = [1, 32], strides = [1, 1]} : vector<1x128xf32> to vector<1x32xf32>
      %495 = arith.negf %494 : vector<1x32xf32>
      %496 = math.exp %495 : vector<1x32xf32>
      %cst_346 = arith.constant 1.000000e+00 : f32
      %497 = vector.broadcast %cst_346 : f32 to vector<1x32xf32>
      %498 = arith.addf %497, %496 : vector<1x32xf32>
      %499 = arith.divf %497, %498 : vector<1x32xf32>
      %500 = arith.mulf %491, %arg36 : vector<1x32xf32>
      %501 = arith.mulf %485, %493 : vector<1x32xf32>
      %502 = arith.addf %500, %501 : vector<1x32xf32>
      %503 = math.tanh %502 : vector<1x32xf32>
      %504 = arith.mulf %499, %503 : vector<1x32xf32>
      %505 = arith.index_cast %arg34 : i32 to index
      %c0_347 = arith.constant 0 : index
      %506 = vector.load %arg33[%505, %c0_347] : memref<4x32xf32, #tpu.memory_space<vmem>>, vector<1x32xf32>
      tpu.vector_store %arg33[%505, %c0_347], %504 {strides = array<i32>} : memref<4x32xf32, #tpu.memory_space<vmem>>, vector<1x32xf32>,
      scf.yield %504, %502 : vector<1x32xf32>, vector<1x32xf32>
    }
    %c4_i32_120 = arith.constant 4 : i32
    %c0_121 = arith.constant 0 : index
    %c0_122 = arith.constant 0 : index
    %181 = vector.load %arg33[%c0_121, %c0_122] : memref<4x32xf32, #tpu.memory_space<vmem>>, vector<4x32xf32>
    %c0_123 = arith.constant 0 : index
    %c0_124 = arith.constant 0 : index
    %182 = vector.load %arg13[%c0_123, %c0_124] : memref<32x64xf32, #tpu.memory_space<vmem>>, vector<32x64xf32>
    %cst_125 = arith.constant dense<0.000000e+00> : vector<4x64xf32>
    %183 = tpu.matmul %181, %182, %cst_125 {dimension_numbers = #tpu.dot_dimension_numbers<[1], [0], [0], [1], [0, 0, 1, 1], [], []>} : vector<4x32xf32>, vector<32x64xf32>, vector<4x64xf32> -> vector<4x64xf32>
    %c0_126 = arith.constant 0 : index
    %c0_127 = arith.constant 0 : index
    %184 = vector.load %arg14[%c0_126, %c0_127] : memref<1x64xf32, #tpu.memory_space<vmem>>, vector<1x64xf32>
    %185 = vector.broadcast %184 : vector<1x64xf32> to vector<4x64xf32>
    %186 = arith.addf %183, %185 : vector<4x64xf32>
    %c0_128 = arith.constant 0 : index
    %c0_129 = arith.constant 0 : index
    %c0_130 = arith.constant 0 : index
    %187 = vector.load %arg15[%c0_128, %c0_129, %c0_130] : memref<2x64x64xf32, #tpu.memory_space<vmem>>, vector<1x64x64xf32>
    %188 = vector.shape_cast %187 : vector<1x64x64xf32> to vector<64x64xf32>
    %cst_131 = arith.constant dense<0.000000e+00> : vector<4x64xf32>
    %189 = tpu.matmul %186, %188, %cst_131 {dimension_numbers = #tpu.dot_dimension_numbers<[1], [0], [0], [1], [0, 0, 1, 1], [], []>} : vector<4x64xf32>, vector<64x64xf32>, vector<4x64xf32> -> vector<4x64xf32>
    %c0_132 = arith.constant 0 : index
    %c0_133 = arith.constant 0 : index
    %190 = vector.load %arg16[%c0_132, %c0_133] : memref<1x64xf32, #tpu.memory_space<vmem>>, vector<1x64xf32>
    %191 = vector.broadcast %190 : vector<1x64xf32> to vector<4x64xf32>
    %192 = arith.addf %189, %191 : vector<4x64xf32>
    %c1_134 = arith.constant 1 : index
    %c0_135 = arith.constant 0 : index
    %c0_136 = arith.constant 0 : index
    %193 = vector.load %arg15[%c1_134, %c0_135, %c0_136] : memref<2x64x64xf32, #tpu.memory_space<vmem>>, vector<1x64x64xf32>
    %194 = vector.shape_cast %193 : vector<1x64x64xf32> to vector<64x64xf32>
    %cst_137 = arith.constant dense<0.000000e+00> : vector<4x64xf32>
    %195 = tpu.matmul %186, %194, %cst_137 {dimension_numbers = #tpu.dot_dimension_numbers<[1], [0], [0], [1], [0, 0, 1, 1], [], []>} : vector<4x64xf32>, vector<64x64xf32>, vector<4x64xf32> -> vector<4x64xf32>
    %c0_138 = arith.constant 0 : index
    %c0_139 = arith.constant 0 : index
    %196 = vector.load %arg16[%c0_138, %c0_139] : memref<1x64xf32, #tpu.memory_space<vmem>>, vector<1x64xf32>
    %197 = vector.broadcast %196 : vector<1x64xf32> to vector<4x64xf32>
    %198 = arith.addf %195, %197 : vector<4x64xf32>
    %c0_140 = arith.constant 0 : index
    %c0_141 = arith.constant 0 : index
    %199 = vector.load %arg19[%c0_140, %c0_141] : memref<1x64xf32, #tpu.memory_space<vmem>>, vector<1x64xf32>
    %c0_142 = arith.constant 0 : index
    %c0_143 = arith.constant 0 : index
    %c0_144 = arith.constant 0 : index
    %200 = vector.load %arg17[%c0_142, %c0_143, %c0_144] : memref<3x64x64xf32, #tpu.memory_space<vmem>>, vector<1x64x64xf32>
    %201 = vector.shape_cast %200 : vector<1x64x64xf32> to vector<64x64xf32>
    %c1_145 = arith.constant 1 : index
    %c0_146 = arith.constant 0 : index
    %c0_147 = arith.constant 0 : index
    %202 = vector.load %arg17[%c1_145, %c0_146, %c0_147] : memref<3x64x64xf32, #tpu.memory_space<vmem>>, vector<1x64x64xf32>
    %203 = vector.shape_cast %202 : vector<1x64x64xf32> to vector<64x64xf32>
    %c2_148 = arith.constant 2 : index
    %c0_149 = arith.constant 0 : index
    %c0_150 = arith.constant 0 : index
    %204 = vector.load %arg17[%c2_148, %c0_149, %c0_150] : memref<3x64x64xf32, #tpu.memory_space<vmem>>, vector<1x64x64xf32>
    %205 = vector.shape_cast %204 : vector<1x64x64xf32> to vector<64x64xf32>
    %cst_151 = arith.constant 0.000000e+00 : f32
    %206 = vector.broadcast %cst_151 : f32 to vector<1x64xf32>
    %207 = vector.extract_strided_slice %198 {offsets = [0, 0], sizes = [3, 64], strides = [1, 1]} : vector<4x64xf32> to vector<3x64xf32>
    %208 = tpu.concatenate %206, %207 in 0 : vector<1x64xf32>, vector<3x64xf32> -> vector<4x64xf32>
    %cst_152 = arith.constant dense<0.000000e+00> : vector<4x64xf32>
    %209 = tpu.matmul %208, %201, %cst_152 {dimension_numbers = #tpu.dot_dimension_numbers<[1], [0], [0], [1], [0, 0, 1, 1], [], []>} : vector<4x64xf32>, vector<64x64xf32>, vector<4x64xf32> -> vector<4x64xf32>
    %210 = vector.broadcast %199 : vector<1x64xf32> to vector<4x64xf32>
    %211 = arith.addf %210, %209 : vector<4x64xf32>
    %cst_153 = arith.constant dense<0.000000e+00> : vector<4x64xf32>
    %212 = tpu.matmul %192, %203, %cst_153 {dimension_numbers = #tpu.dot_dimension_numbers<[1], [0], [0], [1], [0, 0, 1, 1], [], []>} : vector<4x64xf32>, vector<64x64xf32>, vector<4x64xf32> -> vector<4x64xf32>
    %213 = arith.addf %211, %212 : vector<4x64xf32>
    %cst_154 = arith.constant dense<0.000000e+00> : vector<4x64xf32>
    %214 = tpu.matmul %198, %205, %cst_154 {dimension_numbers = #tpu.dot_dimension_numbers<[1], [0], [0], [1], [0, 0, 1, 1], [], []>} : vector<4x64xf32>, vector<64x64xf32>, vector<4x64xf32> -> vector<4x64xf32>
    %215 = arith.addf %213, %214 : vector<4x64xf32>
    %cst_155 = arith.constant dense<0.000000e+00> : vector<4x64xf32>
    %216 = tpu.matmul %192, %201, %cst_155 {dimension_numbers = #tpu.dot_dimension_numbers<[1], [0], [0], [1], [0, 0, 1, 1], [], []>} : vector<4x64xf32>, vector<64x64xf32>, vector<4x64xf32> -> vector<4x64xf32>
    %217 = vector.broadcast %199 : vector<1x64xf32> to vector<4x64xf32>
    %218 = arith.addf %217, %216 : vector<4x64xf32>
    %cst_156 = arith.constant dense<0.000000e+00> : vector<4x64xf32>
    %219 = tpu.matmul %198, %203, %cst_156 {dimension_numbers = #tpu.dot_dimension_numbers<[1], [0], [0], [1], [0, 0, 1, 1], [], []>} : vector<4x64xf32>, vector<64x64xf32>, vector<4x64xf32> -> vector<4x64xf32>
    %220 = arith.addf %218, %219 : vector<4x64xf32>
    %cst_157 = arith.constant 0.000000e+00 : f32
    %221 = vector.broadcast %cst_157 : f32 to vector<1x64xf32>
    %222 = vector.extract_strided_slice %192 {offsets = [1, 0], sizes = [3, 64], strides = [1, 1]} : vector<4x64xf32> to vector<3x64xf32>
    %223 = tpu.concatenate %222, %221 in 0 : vector<3x64xf32>, vector<1x64xf32> -> vector<4x64xf32>
    %cst_158 = arith.constant dense<0.000000e+00> : vector<4x64xf32>
    %224 = tpu.matmul %223, %205, %cst_158 {dimension_numbers = #tpu.dot_dimension_numbers<[1], [0], [0], [1], [0, 0, 1, 1], [], []>} : vector<4x64xf32>, vector<64x64xf32>, vector<4x64xf32> -> vector<4x64xf32>
    %225 = arith.addf %220, %224 : vector<4x64xf32>
    %c0_159 = arith.constant 0 : index
    %c0_160 = arith.constant 0 : index
    %c0_161 = arith.constant 0 : index
    %226 = vector.load %arg18[%c0_159, %c0_160, %c0_161] : memref<3x64x64xf32, #tpu.memory_space<vmem>>, vector<1x64x64xf32>
    %227 = vector.shape_cast %226 : vector<1x64x64xf32> to vector<64x64xf32>
    %c1_162 = arith.constant 1 : index
    %c0_163 = arith.constant 0 : index
    %c0_164 = arith.constant 0 : index
    %228 = vector.load %arg18[%c1_162, %c0_163, %c0_164] : memref<3x64x64xf32, #tpu.memory_space<vmem>>, vector<1x64x64xf32>
    %229 = vector.shape_cast %228 : vector<1x64x64xf32> to vector<64x64xf32>
    %c2_165 = arith.constant 2 : index
    %c0_166 = arith.constant 0 : index
    %c0_167 = arith.constant 0 : index
    %230 = vector.load %arg18[%c2_165, %c0_166, %c0_167] : memref<3x64x64xf32, #tpu.memory_space<vmem>>, vector<1x64x64xf32>
    %231 = vector.shape_cast %230 : vector<1x64x64xf32> to vector<64x64xf32>
    %cst_168 = arith.constant 0.000000e+00 : f32
    %232 = vector.broadcast %cst_168 : f32 to vector<1x64xf32>
    %233 = vector.extract_strided_slice %169 {offsets = [0, 0], sizes = [3, 64], strides = [1, 1]} : vector<4x64xf32> to vector<3x64xf32>
    %234 = tpu.concatenate %232, %233 in 0 : vector<1x64xf32>, vector<3x64xf32> -> vector<4x64xf32>
    %cst_169 = arith.constant dense<0.000000e+00> : vector<4x64xf32>
    %235 = tpu.matmul %234, %227, %cst_169 {dimension_numbers = #tpu.dot_dimension_numbers<[1], [0], [0], [1], [0, 0, 1, 1], [], []>} : vector<4x64xf32>, vector<64x64xf32>, vector<4x64xf32> -> vector<4x64xf32>
    %236 = arith.addf %215, %235 : vector<4x64xf32>
    %cst_170 = arith.constant dense<0.000000e+00> : vector<4x64xf32>
    %237 = tpu.matmul %167, %229, %cst_170 {dimension_numbers = #tpu.dot_dimension_numbers<[1], [0], [0], [1], [0, 0, 1, 1], [], []>} : vector<4x64xf32>, vector<64x64xf32>, vector<4x64xf32> -> vector<4x64xf32>
    %238 = arith.addf %236, %237 : vector<4x64xf32>
    %cst_171 = arith.constant dense<0.000000e+00> : vector<4x64xf32>
    %239 = tpu.matmul %169, %231, %cst_171 {dimension_numbers = #tpu.dot_dimension_numbers<[1], [0], [0], [1], [0, 0, 1, 1], [], []>} : vector<4x64xf32>, vector<64x64xf32>, vector<4x64xf32> -> vector<4x64xf32>
    %240 = arith.addf %238, %239 : vector<4x64xf32>
    %cst_172 = arith.constant dense<0.000000e+00> : vector<4x64xf32>
    %241 = tpu.matmul %167, %227, %cst_172 {dimension_numbers = #tpu.dot_dimension_numbers<[1], [0], [0], [1], [0, 0, 1, 1], [], []>} : vector<4x64xf32>, vector<64x64xf32>, vector<4x64xf32> -> vector<4x64xf32>
    %242 = arith.addf %225, %241 : vector<4x64xf32>
    %cst_173 = arith.constant dense<0.000000e+00> : vector<4x64xf32>
    %243 = tpu.matmul %169, %229, %cst_173 {dimension_numbers = #tpu.dot_dimension_numbers<[1], [0], [0], [1], [0, 0, 1, 1], [], []>} : vector<4x64xf32>, vector<64x64xf32>, vector<4x64xf32> -> vector<4x64xf32>
    %244 = arith.addf %242, %243 : vector<4x64xf32>
    %cst_174 = arith.constant 0.000000e+00 : f32
    %245 = vector.broadcast %cst_174 : f32 to vector<1x64xf32>
    %246 = vector.extract_strided_slice %167 {offsets = [1, 0], sizes = [3, 64], strides = [1, 1]} : vector<4x64xf32> to vector<3x64xf32>
    %247 = tpu.concatenate %246, %245 in 0 : vector<3x64xf32>, vector<1x64xf32> -> vector<4x64xf32>
    %cst_175 = arith.constant dense<0.000000e+00> : vector<4x64xf32>
    %248 = tpu.matmul %247, %231, %cst_175 {dimension_numbers = #tpu.dot_dimension_numbers<[1], [0], [0], [1], [0, 0, 1, 1], [], []>} : vector<4x64xf32>, vector<64x64xf32>, vector<4x64xf32> -> vector<4x64xf32>
    %249 = arith.addf %244, %248 : vector<4x64xf32>
    %cst_176 = arith.constant 0.000000e+00 : f32
    %250 = vector.broadcast %cst_176 : f32 to vector<4x64xf32>
    %251 = arith.maximumf %240, %250 : vector<4x64xf32>
    %cst_177 = arith.constant 0.000000e+00 : f32
    %252 = vector.broadcast %cst_177 : f32 to vector<4x64xf32>
    %253 = arith.maximumf %249, %252 : vector<4x64xf32>
    %c0_178 = arith.constant 0 : index
    %c0_179 = arith.constant 0 : index
    %254 = vector.load %arg21[%c0_178, %c0_179] : memref<1x64xf32, #tpu.memory_space<vmem>>, vector<1x64xf32>
    %c0_180 = arith.constant 0 : index
    %c0_181 = arith.constant 0 : index
    %c0_182 = arith.constant 0 : index
    %255 = vector.load %arg20[%c0_180, %c0_181, %c0_182] : memref<3x64x64xf32, #tpu.memory_space<vmem>>, vector<1x64x64xf32>
    %256 = vector.shape_cast %255 : vector<1x64x64xf32> to vector<64x64xf32>
    %c1_183 = arith.constant 1 : index
    %c0_184 = arith.constant 0 : index
    %c0_185 = arith.constant 0 : index
    %257 = vector.load %arg20[%c1_183, %c0_184, %c0_185] : memref<3x64x64xf32, #tpu.memory_space<vmem>>, vector<1x64x64xf32>
    %258 = vector.shape_cast %257 : vector<1x64x64xf32> to vector<64x64xf32>
    %c2_186 = arith.constant 2 : index
    %c0_187 = arith.constant 0 : index
    %c0_188 = arith.constant 0 : index
    %259 = vector.load %arg20[%c2_186, %c0_187, %c0_188] : memref<3x64x64xf32, #tpu.memory_space<vmem>>, vector<1x64x64xf32>
    %260 = vector.shape_cast %259 : vector<1x64x64xf32> to vector<64x64xf32>
    %cst_189 = arith.constant 0.000000e+00 : f32
    %261 = vector.broadcast %cst_189 : f32 to vector<1x64xf32>
    %262 = vector.extract_strided_slice %253 {offsets = [0, 0], sizes = [3, 64], strides = [1, 1]} : vector<4x64xf32> to vector<3x64xf32>
    %263 = tpu.concatenate %261, %262 in 0 : vector<1x64xf32>, vector<3x64xf32> -> vector<4x64xf32>
    %cst_190 = arith.constant dense<0.000000e+00> : vector<4x64xf32>
    %264 = tpu.matmul %263, %256, %cst_190 {dimension_numbers = #tpu.dot_dimension_numbers<[1], [0], [0], [1], [0, 0, 1, 1], [], []>} : vector<4x64xf32>, vector<64x64xf32>, vector<4x64xf32> -> vector<4x64xf32>
    %265 = vector.broadcast %254 : vector<1x64xf32> to vector<4x64xf32>
    %266 = arith.addf %265, %264 : vector<4x64xf32>
    %cst_191 = arith.constant dense<0.000000e+00> : vector<4x64xf32>
    %267 = tpu.matmul %251, %258, %cst_191 {dimension_numbers = #tpu.dot_dimension_numbers<[1], [0], [0], [1], [0, 0, 1, 1], [], []>} : vector<4x64xf32>, vector<64x64xf32>, vector<4x64xf32> -> vector<4x64xf32>
    %268 = arith.addf %266, %267 : vector<4x64xf32>
    %cst_192 = arith.constant dense<0.000000e+00> : vector<4x64xf32>
    %269 = tpu.matmul %253, %260, %cst_192 {dimension_numbers = #tpu.dot_dimension_numbers<[1], [0], [0], [1], [0, 0, 1, 1], [], []>} : vector<4x64xf32>, vector<64x64xf32>, vector<4x64xf32> -> vector<4x64xf32>
    %270 = arith.addf %268, %269 : vector<4x64xf32>
    %cst_193 = arith.constant dense<0.000000e+00> : vector<4x64xf32>
    %271 = tpu.matmul %251, %256, %cst_193 {dimension_numbers = #tpu.dot_dimension_numbers<[1], [0], [0], [1], [0, 0, 1, 1], [], []>} : vector<4x64xf32>, vector<64x64xf32>, vector<4x64xf32> -> vector<4x64xf32>
    %272 = vector.broadcast %254 : vector<1x64xf32> to vector<4x64xf32>
    %273 = arith.addf %272, %271 : vector<4x64xf32>
    %cst_194 = arith.constant dense<0.000000e+00> : vector<4x64xf32>
    %274 = tpu.matmul %253, %258, %cst_194 {dimension_numbers = #tpu.dot_dimension_numbers<[1], [0], [0], [1], [0, 0, 1, 1], [], []>} : vector<4x64xf32>, vector<64x64xf32>, vector<4x64xf32> -> vector<4x64xf32>
    %275 = arith.addf %273, %274 : vector<4x64xf32>
    %cst_195 = arith.constant 0.000000e+00 : f32
    %276 = vector.broadcast %cst_195 : f32 to vector<1x64xf32>
    %277 = vector.extract_strided_slice %251 {offsets = [1, 0], sizes = [3, 64], strides = [1, 1]} : vector<4x64xf32> to vector<3x64xf32>
    %278 = tpu.concatenate %277, %276 in 0 : vector<3x64xf32>, vector<1x64xf32> -> vector<4x64xf32>
    %cst_196 = arith.constant dense<0.000000e+00> : vector<4x64xf32>
    %279 = tpu.matmul %278, %260, %cst_196 {dimension_numbers = #tpu.dot_dimension_numbers<[1], [0], [0], [1], [0, 0, 1, 1], [], []>} : vector<4x64xf32>, vector<64x64xf32>, vector<4x64xf32> -> vector<4x64xf32>
    %280 = arith.addf %275, %279 : vector<4x64xf32>
    %cst_197 = arith.constant 0.000000e+00 : f32
    %281 = vector.broadcast %cst_197 : f32 to vector<4x64xf32>
    %282 = arith.maximumf %270, %281 : vector<4x64xf32>
    %cst_198 = arith.constant 0.000000e+00 : f32
    %283 = vector.broadcast %cst_198 : f32 to vector<4x64xf32>
    %284 = arith.maximumf %280, %283 : vector<4x64xf32>
    %c0_199 = arith.constant 0 : index
    %c0_200 = arith.constant 0 : index
    %c0_201 = arith.constant 0 : index
    %285 = vector.load %arg22[%c0_199, %c0_200, %c0_201] : memref<2x64x32xf32, #tpu.memory_space<vmem>>, vector<1x64x32xf32>
    %286 = vector.shape_cast %285 : vector<1x64x32xf32> to vector<64x32xf32>
    %cst_202 = arith.constant dense<0.000000e+00> : vector<4x32xf32>
    %287 = tpu.matmul %282, %286, %cst_202 {dimension_numbers = #tpu.dot_dimension_numbers<[1], [0], [0], [1], [0, 0, 1, 1], [], []>} : vector<4x64xf32>, vector<64x32xf32>, vector<4x32xf32> -> vector<4x32xf32>
    %c0_203 = arith.constant 0 : index
    %c0_204 = arith.constant 0 : index
    %288 = vector.load %arg23[%c0_203, %c0_204] : memref<1x32xf32, #tpu.memory_space<vmem>>, vector<1x32xf32>
    %289 = vector.broadcast %288 : vector<1x32xf32> to vector<4x32xf32>
    %290 = arith.addf %287, %289 : vector<4x32xf32>
    %c1_205 = arith.constant 1 : index
    %c0_206 = arith.constant 0 : index
    %c0_207 = arith.constant 0 : index
    %291 = vector.load %arg22[%c1_205, %c0_206, %c0_207] : memref<2x64x32xf32, #tpu.memory_space<vmem>>, vector<1x64x32xf32>
    %292 = vector.shape_cast %291 : vector<1x64x32xf32> to vector<64x32xf32>
    %cst_208 = arith.constant dense<0.000000e+00> : vector<4x32xf32>
    %293 = tpu.matmul %282, %292, %cst_208 {dimension_numbers = #tpu.dot_dimension_numbers<[1], [0], [0], [1], [0, 0, 1, 1], [], []>} : vector<4x64xf32>, vector<64x32xf32>, vector<4x32xf32> -> vector<4x32xf32>
    %c0_209 = arith.constant 0 : index
    %c0_210 = arith.constant 0 : index
    %294 = vector.load %arg23[%c0_209, %c0_210] : memref<1x32xf32, #tpu.memory_space<vmem>>, vector<1x32xf32>
    %295 = vector.broadcast %294 : vector<1x32xf32> to vector<4x32xf32>
    %296 = arith.addf %293, %295 : vector<4x32xf32>
    %c0_211 = arith.constant 0 : index
    %c0_212 = arith.constant 0 : index
    %c0_213 = arith.constant 0 : index
    %297 = vector.load %arg22[%c0_211, %c0_212, %c0_213] : memref<2x64x32xf32, #tpu.memory_space<vmem>>, vector<1x64x32xf32>
    %298 = vector.shape_cast %297 : vector<1x64x32xf32> to vector<64x32xf32>
    %cst_214 = arith.constant dense<0.000000e+00> : vector<4x32xf32>
    %299 = tpu.matmul %284, %298, %cst_214 {dimension_numbers = #tpu.dot_dimension_numbers<[1], [0], [0], [1], [0, 0, 1, 1], [], []>} : vector<4x64xf32>, vector<64x32xf32>, vector<4x32xf32> -> vector<4x32xf32>
    %c0_215 = arith.constant 0 : index
    %c0_216 = arith.constant 0 : index
    %300 = vector.load %arg23[%c0_215, %c0_216] : memref<1x32xf32, #tpu.memory_space<vmem>>, vector<1x32xf32>
    %301 = vector.broadcast %300 : vector<1x32xf32> to vector<4x32xf32>
    %302 = arith.addf %299, %301 : vector<4x32xf32>
    %c1_217 = arith.constant 1 : index
    %c0_218 = arith.constant 0 : index
    %c0_219 = arith.constant 0 : index
    %303 = vector.load %arg22[%c1_217, %c0_218, %c0_219] : memref<2x64x32xf32, #tpu.memory_space<vmem>>, vector<1x64x32xf32>
    %304 = vector.shape_cast %303 : vector<1x64x32xf32> to vector<64x32xf32>
    %cst_220 = arith.constant dense<0.000000e+00> : vector<4x32xf32>
    %305 = tpu.matmul %284, %304, %cst_220 {dimension_numbers = #tpu.dot_dimension_numbers<[1], [0], [0], [1], [0, 0, 1, 1], [], []>} : vector<4x64xf32>, vector<64x32xf32>, vector<4x32xf32> -> vector<4x32xf32>
    %c0_221 = arith.constant 0 : index
    %c0_222 = arith.constant 0 : index
    %306 = vector.load %arg23[%c0_221, %c0_222] : memref<1x32xf32, #tpu.memory_space<vmem>>, vector<1x32xf32>
    %307 = vector.broadcast %306 : vector<1x32xf32> to vector<4x32xf32>
    %308 = arith.addf %305, %307 : vector<4x32xf32>
    %c0_223 = arith.constant 0 : index
    %c0_224 = arith.constant 0 : index
    %309 = vector.load %arg26[%c0_223, %c0_224] : memref<1x32xf32, #tpu.memory_space<vmem>>, vector<1x32xf32>
    %c0_225 = arith.constant 0 : index
    %c0_226 = arith.constant 0 : index
    %c0_227 = arith.constant 0 : index
    %310 = vector.load %arg24[%c0_225, %c0_226, %c0_227] : memref<3x32x32xf32, #tpu.memory_space<vmem>>, vector<1x32x32xf32>
    %311 = vector.shape_cast %310 : vector<1x32x32xf32> to vector<32x32xf32>
    %c1_228 = arith.constant 1 : index
    %c0_229 = arith.constant 0 : index
    %c0_230 = arith.constant 0 : index
    %312 = vector.load %arg24[%c1_228, %c0_229, %c0_230] : memref<3x32x32xf32, #tpu.memory_space<vmem>>, vector<1x32x32xf32>
    %313 = vector.shape_cast %312 : vector<1x32x32xf32> to vector<32x32xf32>
    %c2_231 = arith.constant 2 : index
    %c0_232 = arith.constant 0 : index
    %c0_233 = arith.constant 0 : index
    %314 = vector.load %arg24[%c2_231, %c0_232, %c0_233] : memref<3x32x32xf32, #tpu.memory_space<vmem>>, vector<1x32x32xf32>
    %315 = vector.shape_cast %314 : vector<1x32x32xf32> to vector<32x32xf32>
    %cst_234 = arith.constant 0.000000e+00 : f32
    %316 = vector.broadcast %cst_234 : f32 to vector<1x32xf32>
    %317 = vector.extract_strided_slice %308 {offsets = [0, 0], sizes = [3, 32], strides = [1, 1]} : vector<4x32xf32> to vector<3x32xf32>
    %318 = tpu.concatenate %316, %317 in 0 : vector<1x32xf32>, vector<3x32xf32> -> vector<4x32xf32>
    %cst_235 = arith.constant dense<0.000000e+00> : vector<4x32xf32>
    %319 = tpu.matmul %318, %311, %cst_235 {dimension_numbers = #tpu.dot_dimension_numbers<[1], [0], [0], [1], [0, 0, 1, 1], [], []>} : vector<4x32xf32>, vector<32x32xf32>, vector<4x32xf32> -> vector<4x32xf32>
    %320 = vector.broadcast %309 : vector<1x32xf32> to vector<4x32xf32>
    %321 = arith.addf %320, %319 : vector<4x32xf32>
    %cst_236 = arith.constant dense<0.000000e+00> : vector<4x32xf32>
    %322 = tpu.matmul %290, %313, %cst_236 {dimension_numbers = #tpu.dot_dimension_numbers<[1], [0], [0], [1], [0, 0, 1, 1], [], []>} : vector<4x32xf32>, vector<32x32xf32>, vector<4x32xf32> -> vector<4x32xf32>
    %323 = arith.addf %321, %322 : vector<4x32xf32>
    %cst_237 = arith.constant dense<0.000000e+00> : vector<4x32xf32>
    %324 = tpu.matmul %296, %315, %cst_237 {dimension_numbers = #tpu.dot_dimension_numbers<[1], [0], [0], [1], [0, 0, 1, 1], [], []>} : vector<4x32xf32>, vector<32x32xf32>, vector<4x32xf32> -> vector<4x32xf32>
    %325 = arith.addf %323, %324 : vector<4x32xf32>
    %cst_238 = arith.constant dense<0.000000e+00> : vector<4x32xf32>
    %326 = tpu.matmul %290, %311, %cst_238 {dimension_numbers = #tpu.dot_dimension_numbers<[1], [0], [0], [1], [0, 0, 1, 1], [], []>} : vector<4x32xf32>, vector<32x32xf32>, vector<4x32xf32> -> vector<4x32xf32>
    %327 = vector.broadcast %309 : vector<1x32xf32> to vector<4x32xf32>
    %328 = arith.addf %327, %326 : vector<4x32xf32>
    %cst_239 = arith.constant dense<0.000000e+00> : vector<4x32xf32>
    %329 = tpu.matmul %296, %313, %cst_239 {dimension_numbers = #tpu.dot_dimension_numbers<[1], [0], [0], [1], [0, 0, 1, 1], [], []>} : vector<4x32xf32>, vector<32x32xf32>, vector<4x32xf32> -> vector<4x32xf32>
    %330 = arith.addf %328, %329 : vector<4x32xf32>
    %cst_240 = arith.constant dense<0.000000e+00> : vector<4x32xf32>
    %331 = tpu.matmul %302, %315, %cst_240 {dimension_numbers = #tpu.dot_dimension_numbers<[1], [0], [0], [1], [0, 0, 1, 1], [], []>} : vector<4x32xf32>, vector<32x32xf32>, vector<4x32xf32> -> vector<4x32xf32>
    %332 = arith.addf %330, %331 : vector<4x32xf32>
    %cst_241 = arith.constant dense<0.000000e+00> : vector<4x32xf32>
    %333 = tpu.matmul %296, %311, %cst_241 {dimension_numbers = #tpu.dot_dimension_numbers<[1], [0], [0], [1], [0, 0, 1, 1], [], []>} : vector<4x32xf32>, vector<32x32xf32>, vector<4x32xf32> -> vector<4x32xf32>
    %334 = vector.broadcast %309 : vector<1x32xf32> to vector<4x32xf32>
    %335 = arith.addf %334, %333 : vector<4x32xf32>
    %cst_242 = arith.constant dense<0.000000e+00> : vector<4x32xf32>
    %336 = tpu.matmul %302, %313, %cst_242 {dimension_numbers = #tpu.dot_dimension_numbers<[1], [0], [0], [1], [0, 0, 1, 1], [], []>} : vector<4x32xf32>, vector<32x32xf32>, vector<4x32xf32> -> vector<4x32xf32>
    %337 = arith.addf %335, %336 : vector<4x32xf32>
    %cst_243 = arith.constant dense<0.000000e+00> : vector<4x32xf32>
    %338 = tpu.matmul %308, %315, %cst_243 {dimension_numbers = #tpu.dot_dimension_numbers<[1], [0], [0], [1], [0, 0, 1, 1], [], []>} : vector<4x32xf32>, vector<32x32xf32>, vector<4x32xf32> -> vector<4x32xf32>
    %339 = arith.addf %337, %338 : vector<4x32xf32>
    %cst_244 = arith.constant dense<0.000000e+00> : vector<4x32xf32>
    %340 = tpu.matmul %302, %311, %cst_244 {dimension_numbers = #tpu.dot_dimension_numbers<[1], [0], [0], [1], [0, 0, 1, 1], [], []>} : vector<4x32xf32>, vector<32x32xf32>, vector<4x32xf32> -> vector<4x32xf32>
    %341 = vector.broadcast %309 : vector<1x32xf32> to vector<4x32xf32>
    %342 = arith.addf %341, %340 : vector<4x32xf32>
    %cst_245 = arith.constant dense<0.000000e+00> : vector<4x32xf32>
    %343 = tpu.matmul %308, %313, %cst_245 {dimension_numbers = #tpu.dot_dimension_numbers<[1], [0], [0], [1], [0, 0, 1, 1], [], []>} : vector<4x32xf32>, vector<32x32xf32>, vector<4x32xf32> -> vector<4x32xf32>
    %344 = arith.addf %342, %343 : vector<4x32xf32>
    %cst_246 = arith.constant 0.000000e+00 : f32
    %345 = vector.broadcast %cst_246 : f32 to vector<1x32xf32>
    %346 = vector.extract_strided_slice %290 {offsets = [1, 0], sizes = [3, 32], strides = [1, 1]} : vector<4x32xf32> to vector<3x32xf32>
    %347 = tpu.concatenate %346, %345 in 0 : vector<3x32xf32>, vector<1x32xf32> -> vector<4x32xf32>
    %cst_247 = arith.constant dense<0.000000e+00> : vector<4x32xf32>
    %348 = tpu.matmul %347, %315, %cst_247 {dimension_numbers = #tpu.dot_dimension_numbers<[1], [0], [0], [1], [0, 0, 1, 1], [], []>} : vector<4x32xf32>, vector<32x32xf32>, vector<4x32xf32> -> vector<4x32xf32>
    %349 = arith.addf %344, %348 : vector<4x32xf32>
    %c0_248 = arith.constant 0 : index
    %c0_249 = arith.constant 0 : index
    %c0_250 = arith.constant 0 : index
    %350 = vector.load %arg25[%c0_248, %c0_249, %c0_250] : memref<3x32x32xf32, #tpu.memory_space<vmem>>, vector<1x32x32xf32>
    %351 = vector.shape_cast %350 : vector<1x32x32xf32> to vector<32x32xf32>
    %c1_251 = arith.constant 1 : index
    %c0_252 = arith.constant 0 : index
    %c0_253 = arith.constant 0 : index
    %352 = vector.load %arg25[%c1_251, %c0_252, %c0_253] : memref<3x32x32xf32, #tpu.memory_space<vmem>>, vector<1x32x32xf32>
    %353 = vector.shape_cast %352 : vector<1x32x32xf32> to vector<32x32xf32>
    %c2_254 = arith.constant 2 : index
    %c0_255 = arith.constant 0 : index
    %c0_256 = arith.constant 0 : index
    %354 = vector.load %arg25[%c2_254, %c0_255, %c0_256] : memref<3x32x32xf32, #tpu.memory_space<vmem>>, vector<1x32x32xf32>
    %355 = vector.shape_cast %354 : vector<1x32x32xf32> to vector<32x32xf32>
    %cst_257 = arith.constant 0.000000e+00 : f32
    %356 = vector.broadcast %cst_257 : f32 to vector<1x32xf32>
    %357 = vector.extract_strided_slice %105 {offsets = [0, 0], sizes = [3, 32], strides = [1, 1]} : vector<4x32xf32> to vector<3x32xf32>
    %358 = tpu.concatenate %356, %357 in 0 : vector<1x32xf32>, vector<3x32xf32> -> vector<4x32xf32>
    %cst_258 = arith.constant dense<0.000000e+00> : vector<4x32xf32>
    %359 = tpu.matmul %358, %351, %cst_258 {dimension_numbers = #tpu.dot_dimension_numbers<[1], [0], [0], [1], [0, 0, 1, 1], [], []>} : vector<4x32xf32>, vector<32x32xf32>, vector<4x32xf32> -> vector<4x32xf32>
    %360 = arith.addf %325, %359 : vector<4x32xf32>
    %cst_259 = arith.constant dense<0.000000e+00> : vector<4x32xf32>
    %361 = tpu.matmul %99, %353, %cst_259 {dimension_numbers = #tpu.dot_dimension_numbers<[1], [0], [0], [1], [0, 0, 1, 1], [], []>} : vector<4x32xf32>, vector<32x32xf32>, vector<4x32xf32> -> vector<4x32xf32>
    %362 = arith.addf %360, %361 : vector<4x32xf32>
    %cst_260 = arith.constant dense<0.000000e+00> : vector<4x32xf32>
    %363 = tpu.matmul %101, %355, %cst_260 {dimension_numbers = #tpu.dot_dimension_numbers<[1], [0], [0], [1], [0, 0, 1, 1], [], []>} : vector<4x32xf32>, vector<32x32xf32>, vector<4x32xf32> -> vector<4x32xf32>
    %364 = arith.addf %362, %363 : vector<4x32xf32>
    %cst_261 = arith.constant dense<0.000000e+00> : vector<4x32xf32>
    %365 = tpu.matmul %99, %351, %cst_261 {dimension_numbers = #tpu.dot_dimension_numbers<[1], [0], [0], [1], [0, 0, 1, 1], [], []>} : vector<4x32xf32>, vector<32x32xf32>, vector<4x32xf32> -> vector<4x32xf32>
    %366 = arith.addf %332, %365 : vector<4x32xf32>
    %cst_262 = arith.constant dense<0.000000e+00> : vector<4x32xf32>
    %367 = tpu.matmul %101, %353, %cst_262 {dimension_numbers = #tpu.dot_dimension_numbers<[1], [0], [0], [1], [0, 0, 1, 1], [], []>} : vector<4x32xf32>, vector<32x32xf32>, vector<4x32xf32> -> vector<4x32xf32>
    %368 = arith.addf %366, %367 : vector<4x32xf32>
    %cst_263 = arith.constant dense<0.000000e+00> : vector<4x32xf32>
    %369 = tpu.matmul %103, %355, %cst_263 {dimension_numbers = #tpu.dot_dimension_numbers<[1], [0], [0], [1], [0, 0, 1, 1], [], []>} : vector<4x32xf32>, vector<32x32xf32>, vector<4x32xf32> -> vector<4x32xf32>
    %370 = arith.addf %368, %369 : vector<4x32xf32>
    %cst_264 = arith.constant dense<0.000000e+00> : vector<4x32xf32>
    %371 = tpu.matmul %101, %351, %cst_264 {dimension_numbers = #tpu.dot_dimension_numbers<[1], [0], [0], [1], [0, 0, 1, 1], [], []>} : vector<4x32xf32>, vector<32x32xf32>, vector<4x32xf32> -> vector<4x32xf32>
    %372 = arith.addf %339, %371 : vector<4x32xf32>
    %cst_265 = arith.constant dense<0.000000e+00> : vector<4x32xf32>
    %373 = tpu.matmul %103, %353, %cst_265 {dimension_numbers = #tpu.dot_dimension_numbers<[1], [0], [0], [1], [0, 0, 1, 1], [], []>} : vector<4x32xf32>, vector<32x32xf32>, vector<4x32xf32> -> vector<4x32xf32>
    %374 = arith.addf %372, %373 : vector<4x32xf32>
    %cst_266 = arith.constant dense<0.000000e+00> : vector<4x32xf32>
    %375 = tpu.matmul %105, %355, %cst_266 {dimension_numbers = #tpu.dot_dimension_numbers<[1], [0], [0], [1], [0, 0, 1, 1], [], []>} : vector<4x32xf32>, vector<32x32xf32>, vector<4x32xf32> -> vector<4x32xf32>
    %376 = arith.addf %374, %375 : vector<4x32xf32>
    %cst_267 = arith.constant dense<0.000000e+00> : vector<4x32xf32>
    %377 = tpu.matmul %103, %351, %cst_267 {dimension_numbers = #tpu.dot_dimension_numbers<[1], [0], [0], [1], [0, 0, 1, 1], [], []>} : vector<4x32xf32>, vector<32x32xf32>, vector<4x32xf32> -> vector<4x32xf32>
    %378 = arith.addf %349, %377 : vector<4x32xf32>
    %cst_268 = arith.constant dense<0.000000e+00> : vector<4x32xf32>
    %379 = tpu.matmul %105, %353, %cst_268 {dimension_numbers = #tpu.dot_dimension_numbers<[1], [0], [0], [1], [0, 0, 1, 1], [], []>} : vector<4x32xf32>, vector<32x32xf32>, vector<4x32xf32> -> vector<4x32xf32>
    %380 = arith.addf %378, %379 : vector<4x32xf32>
    %cst_269 = arith.constant 0.000000e+00 : f32
    %381 = vector.broadcast %cst_269 : f32 to vector<1x32xf32>
    %382 = vector.extract_strided_slice %99 {offsets = [1, 0], sizes = [3, 32], strides = [1, 1]} : vector<4x32xf32> to vector<3x32xf32>
    %383 = tpu.concatenate %382, %381 in 0 : vector<3x32xf32>, vector<1x32xf32> -> vector<4x32xf32>
    %cst_270 = arith.constant dense<0.000000e+00> : vector<4x32xf32>
    %384 = tpu.matmul %383, %355, %cst_270 {dimension_numbers = #tpu.dot_dimension_numbers<[1], [0], [0], [1], [0, 0, 1, 1], [], []>} : vector<4x32xf32>, vector<32x32xf32>, vector<4x32xf32> -> vector<4x32xf32>
    %385 = arith.addf %380, %384 : vector<4x32xf32>
    %cst_271 = arith.constant 0.000000e+00 : f32
    %386 = vector.broadcast %cst_271 : f32 to vector<4x32xf32>
    %387 = arith.maximumf %364, %386 : vector<4x32xf32>
    %cst_272 = arith.constant 0.000000e+00 : f32
    %388 = vector.broadcast %cst_272 : f32 to vector<4x32xf32>
    %389 = arith.maximumf %370, %388 : vector<4x32xf32>
    %cst_273 = arith.constant 0.000000e+00 : f32
    %390 = vector.broadcast %cst_273 : f32 to vector<4x32xf32>
    %391 = arith.maximumf %376, %390 : vector<4x32xf32>
    %cst_274 = arith.constant 0.000000e+00 : f32
    %392 = vector.broadcast %cst_274 : f32 to vector<4x32xf32>
    %393 = arith.maximumf %385, %392 : vector<4x32xf32>
    %c0_275 = arith.constant 0 : index
    %c0_276 = arith.constant 0 : index
    %394 = vector.load %arg28[%c0_275, %c0_276] : memref<1x32xf32, #tpu.memory_space<vmem>>, vector<1x32xf32>
    %c0_277 = arith.constant 0 : index
    %c0_278 = arith.constant 0 : index
    %c0_279 = arith.constant 0 : index
    %395 = vector.load %arg27[%c0_277, %c0_278, %c0_279] : memref<3x32x32xf32, #tpu.memory_space<vmem>>, vector<1x32x32xf32>
    %396 = vector.shape_cast %395 : vector<1x32x32xf32> to vector<32x32xf32>
    %c1_280 = arith.constant 1 : index
    %c0_281 = arith.constant 0 : index
    %c0_282 = arith.constant 0 : index
    %397 = vector.load %arg27[%c1_280, %c0_281, %c0_282] : memref<3x32x32xf32, #tpu.memory_space<vmem>>, vector<1x32x32xf32>
    %398 = vector.shape_cast %397 : vector<1x32x32xf32> to vector<32x32xf32>
    %c2_283 = arith.constant 2 : index
    %c0_284 = arith.constant 0 : index
    %c0_285 = arith.constant 0 : index
    %399 = vector.load %arg27[%c2_283, %c0_284, %c0_285] : memref<3x32x32xf32, #tpu.memory_space<vmem>>, vector<1x32x32xf32>
    %400 = vector.shape_cast %399 : vector<1x32x32xf32> to vector<32x32xf32>
    %cst_286 = arith.constant 0.000000e+00 : f32
    %401 = vector.broadcast %cst_286 : f32 to vector<1x32xf32>
    %402 = vector.extract_strided_slice %393 {offsets = [0, 0], sizes = [3, 32], strides = [1, 1]} : vector<4x32xf32> to vector<3x32xf32>
    %403 = tpu.concatenate %401, %402 in 0 : vector<1x32xf32>, vector<3x32xf32> -> vector<4x32xf32>
    %cst_287 = arith.constant dense<0.000000e+00> : vector<4x32xf32>
    %404 = tpu.matmul %403, %396, %cst_287 {dimension_numbers = #tpu.dot_dimension_numbers<[1], [0], [0], [1], [0, 0, 1, 1], [], []>} : vector<4x32xf32>, vector<32x32xf32>, vector<4x32xf32> -> vector<4x32xf32>
    %405 = vector.broadcast %394 : vector<1x32xf32> to vector<4x32xf32>
    %406 = arith.addf %405, %404 : vector<4x32xf32>
    %cst_288 = arith.constant dense<0.000000e+00> : vector<4x32xf32>
    %407 = tpu.matmul %387, %398, %cst_288 {dimension_numbers = #tpu.dot_dimension_numbers<[1], [0], [0], [1], [0, 0, 1, 1], [], []>} : vector<4x32xf32>, vector<32x32xf32>, vector<4x32xf32> -> vector<4x32xf32>
    %408 = arith.addf %406, %407 : vector<4x32xf32>
    %cst_289 = arith.constant dense<0.000000e+00> : vector<4x32xf32>
    %409 = tpu.matmul %389, %400, %cst_289 {dimension_numbers = #tpu.dot_dimension_numbers<[1], [0], [0], [1], [0, 0, 1, 1], [], []>} : vector<4x32xf32>, vector<32x32xf32>, vector<4x32xf32> -> vector<4x32xf32>
    %410 = arith.addf %408, %409 : vector<4x32xf32>
    %cst_290 = arith.constant dense<0.000000e+00> : vector<4x32xf32>
    %411 = tpu.matmul %387, %396, %cst_290 {dimension_numbers = #tpu.dot_dimension_numbers<[1], [0], [0], [1], [0, 0, 1, 1], [], []>} : vector<4x32xf32>, vector<32x32xf32>, vector<4x32xf32> -> vector<4x32xf32>
    %412 = vector.broadcast %394 : vector<1x32xf32> to vector<4x32xf32>
    %413 = arith.addf %412, %411 : vector<4x32xf32>
    %cst_291 = arith.constant dense<0.000000e+00> : vector<4x32xf32>
    %414 = tpu.matmul %389, %398, %cst_291 {dimension_numbers = #tpu.dot_dimension_numbers<[1], [0], [0], [1], [0, 0, 1, 1], [], []>} : vector<4x32xf32>, vector<32x32xf32>, vector<4x32xf32> -> vector<4x32xf32>
    %415 = arith.addf %413, %414 : vector<4x32xf32>
    %cst_292 = arith.constant dense<0.000000e+00> : vector<4x32xf32>
    %416 = tpu.matmul %391, %400, %cst_292 {dimension_numbers = #tpu.dot_dimension_numbers<[1], [0], [0], [1], [0, 0, 1, 1], [], []>} : vector<4x32xf32>, vector<32x32xf32>, vector<4x32xf32> -> vector<4x32xf32>
    %417 = arith.addf %415, %416 : vector<4x32xf32>
    %cst_293 = arith.constant dense<0.000000e+00> : vector<4x32xf32>
    %418 = tpu.matmul %389, %396, %cst_293 {dimension_numbers = #tpu.dot_dimension_numbers<[1], [0], [0], [1], [0, 0, 1, 1], [], []>} : vector<4x32xf32>, vector<32x32xf32>, vector<4x32xf32> -> vector<4x32xf32>
    %419 = vector.broadcast %394 : vector<1x32xf32> to vector<4x32xf32>
    %420 = arith.addf %419, %418 : vector<4x32xf32>
    %cst_294 = arith.constant dense<0.000000e+00> : vector<4x32xf32>
    %421 = tpu.matmul %391, %398, %cst_294 {dimension_numbers = #tpu.dot_dimension_numbers<[1], [0], [0], [1], [0, 0, 1, 1], [], []>} : vector<4x32xf32>, vector<32x32xf32>, vector<4x32xf32> -> vector<4x32xf32>
    %422 = arith.addf %420, %421 : vector<4x32xf32>
    %cst_295 = arith.constant dense<0.000000e+00> : vector<4x32xf32>
    %423 = tpu.matmul %393, %400, %cst_295 {dimension_numbers = #tpu.dot_dimension_numbers<[1], [0], [0], [1], [0, 0, 1, 1], [], []>} : vector<4x32xf32>, vector<32x32xf32>, vector<4x32xf32> -> vector<4x32xf32>
    %424 = arith.addf %422, %423 : vector<4x32xf32>
    %cst_296 = arith.constant dense<0.000000e+00> : vector<4x32xf32>
    %425 = tpu.matmul %391, %396, %cst_296 {dimension_numbers = #tpu.dot_dimension_numbers<[1], [0], [0], [1], [0, 0, 1, 1], [], []>} : vector<4x32xf32>, vector<32x32xf32>, vector<4x32xf32> -> vector<4x32xf32>
    %426 = vector.broadcast %394 : vector<1x32xf32> to vector<4x32xf32>
    %427 = arith.addf %426, %425 : vector<4x32xf32>
    %cst_297 = arith.constant dense<0.000000e+00> : vector<4x32xf32>
    %428 = tpu.matmul %393, %398, %cst_297 {dimension_numbers = #tpu.dot_dimension_numbers<[1], [0], [0], [1], [0, 0, 1, 1], [], []>} : vector<4x32xf32>, vector<32x32xf32>, vector<4x32xf32> -> vector<4x32xf32>
    %429 = arith.addf %427, %428 : vector<4x32xf32>
    %cst_298 = arith.constant 0.000000e+00 : f32
    %430 = vector.broadcast %cst_298 : f32 to vector<1x32xf32>
    %431 = vector.extract_strided_slice %387 {offsets = [1, 0], sizes = [3, 32], strides = [1, 1]} : vector<4x32xf32> to vector<3x32xf32>
    %432 = tpu.concatenate %431, %430 in 0 : vector<3x32xf32>, vector<1x32xf32> -> vector<4x32xf32>
    %cst_299 = arith.constant dense<0.000000e+00> : vector<4x32xf32>
    %433 = tpu.matmul %432, %400, %cst_299 {dimension_numbers = #tpu.dot_dimension_numbers<[1], [0], [0], [1], [0, 0, 1, 1], [], []>} : vector<4x32xf32>, vector<32x32xf32>, vector<4x32xf32> -> vector<4x32xf32>
    %434 = arith.addf %429, %433 : vector<4x32xf32>
    %cst_300 = arith.constant 0.000000e+00 : f32
    %435 = vector.broadcast %cst_300 : f32 to vector<4x32xf32>
    %436 = arith.maximumf %410, %435 : vector<4x32xf32>
    %cst_301 = arith.constant 0.000000e+00 : f32
    %437 = vector.broadcast %cst_301 : f32 to vector<4x32xf32>
    %438 = arith.maximumf %417, %437 : vector<4x32xf32>
    %cst_302 = arith.constant 0.000000e+00 : f32
    %439 = vector.broadcast %cst_302 : f32 to vector<4x32xf32>
    %440 = arith.maximumf %424, %439 : vector<4x32xf32>
    %cst_303 = arith.constant 0.000000e+00 : f32
    %441 = vector.broadcast %cst_303 : f32 to vector<4x32xf32>
    %442 = arith.maximumf %434, %441 : vector<4x32xf32>
    %c0_304 = arith.constant 0 : index
    %c0_305 = arith.constant 0 : index
    %443 = vector.load %arg29[%c0_304, %c0_305] : memref<32x3xf32, #tpu.memory_space<vmem>>, vector<32x3xf32>
    %cst_306 = arith.constant dense<0.000000e+00> : vector<4x3xf32>
    %444 = tpu.matmul %436, %443, %cst_306 {dimension_numbers = #tpu.dot_dimension_numbers<[1], [0], [0], [1], [0, 0, 1, 1], [], []>} : vector<4x32xf32>, vector<32x3xf32>, vector<4x3xf32> -> vector<4x3xf32>
    %c0_307 = arith.constant 0 : index
    %c0_308 = arith.constant 0 : index
    %445 = vector.load %arg30[%c0_307, %c0_308] : memref<1x3xf32, #tpu.memory_space<vmem>>, vector<1x3xf32>
    %446 = vector.broadcast %445 : vector<1x3xf32> to vector<4x3xf32>
    %447 = arith.addf %444, %446 : vector<4x3xf32>
    %c0_309 = arith.constant 0 : index
    %c0_310 = arith.constant 0 : index
    %c0_311 = arith.constant 0 : index
    %c0_312 = arith.constant 0 : index
    %448 = vector.load %arg31[%c0_309, %c0_310, %c0_311, %c0_312] : memref<1x4x4x3xf32, #tpu.memory_space<vmem>>, vector<1x1x4x3xf32>
    %449 = vector.shape_cast %448 : vector<1x1x4x3xf32> to vector<4x3xf32>
    %450 = vector.shape_cast %447 : vector<4x3xf32> to vector<1x1x4x3xf32>
    tpu.vector_store %arg31[%c0_309, %c0_310, %c0_311, %c0_312], %450 {strides = array<i32>} : memref<1x4x4x3xf32, #tpu.memory_space<vmem>>, vector<1x1x4x3xf32>,
    %c0_313 = arith.constant 0 : index
    %c0_314 = arith.constant 0 : index
    %451 = vector.load %arg29[%c0_313, %c0_314] : memref<32x3xf32, #tpu.memory_space<vmem>>, vector<32x3xf32>
    %cst_315 = arith.constant dense<0.000000e+00> : vector<4x3xf32>
    %452 = tpu.matmul %438, %451, %cst_315 {dimension_numbers = #tpu.dot_dimension_numbers<[1], [0], [0], [1], [0, 0, 1, 1], [], []>} : vector<4x32xf32>, vector<32x3xf32>, vector<4x3xf32> -> vector<4x3xf32>
    %c0_316 = arith.constant 0 : index
    %c0_317 = arith.constant 0 : index
    %453 = vector.load %arg30[%c0_316, %c0_317] : memref<1x3xf32, #tpu.memory_space<vmem>>, vector<1x3xf32>
    %454 = vector.broadcast %453 : vector<1x3xf32> to vector<4x3xf32>
    %455 = arith.addf %452, %454 : vector<4x3xf32>
    %c0_318 = arith.constant 0 : index
    %c1_319 = arith.constant 1 : index
    %c0_320 = arith.constant 0 : index
    %c0_321 = arith.constant 0 : index
    %456 = vector.load %arg31[%c0_318, %c1_319, %c0_320, %c0_321] : memref<1x4x4x3xf32, #tpu.memory_space<vmem>>, vector<1x1x4x3xf32>
    %457 = vector.shape_cast %456 : vector<1x1x4x3xf32> to vector<4x3xf32>
    %458 = vector.shape_cast %455 : vector<4x3xf32> to vector<1x1x4x3xf32>
    tpu.vector_store %arg31[%c0_318, %c1_319, %c0_320, %c0_321], %458 {strides = array<i32>} : memref<1x4x4x3xf32, #tpu.memory_space<vmem>>, vector<1x1x4x3xf32>,
    %c0_322 = arith.constant 0 : index
    %c0_323 = arith.constant 0 : index
    %459 = vector.load %arg29[%c0_322, %c0_323] : memref<32x3xf32, #tpu.memory_space<vmem>>, vector<32x3xf32>
    %cst_324 = arith.constant dense<0.000000e+00> : vector<4x3xf32>
    %460 = tpu.matmul %440, %459, %cst_324 {dimension_numbers = #tpu.dot_dimension_numbers<[1], [0], [0], [1], [0, 0, 1, 1], [], []>} : vector<4x32xf32>, vector<32x3xf32>, vector<4x3xf32> -> vector<4x3xf32>
    %c0_325 = arith.constant 0 : index
    %c0_326 = arith.constant 0 : index
    %461 = vector.load %arg30[%c0_325, %c0_326] : memref<1x3xf32, #tpu.memory_space<vmem>>, vector<1x3xf32>
    %462 = vector.broadcast %461 : vector<1x3xf32> to vector<4x3xf32>
    %463 = arith.addf %460, %462 : vector<4x3xf32>
    %c0_327 = arith.constant 0 : index
    %c2_328 = arith.constant 2 : index
    %c0_329 = arith.constant 0 : index
    %c0_330 = arith.constant 0 : index
    %464 = vector.load %arg31[%c0_327, %c2_328, %c0_329, %c0_330] : memref<1x4x4x3xf32, #tpu.memory_space<vmem>>, vector<1x1x4x3xf32>
    %465 = vector.shape_cast %464 : vector<1x1x4x3xf32> to vector<4x3xf32>
    %466 = vector.shape_cast %463 : vector<4x3xf32> to vector<1x1x4x3xf32>
    tpu.vector_store %arg31[%c0_327, %c2_328, %c0_329, %c0_330], %466 {strides = array<i32>} : memref<1x4x4x3xf32, #tpu.memory_space<vmem>>, vector<1x1x4x3xf32>,
    %c0_331 = arith.constant 0 : index
    %c0_332 = arith.constant 0 : index
    %467 = vector.load %arg29[%c0_331, %c0_332] : memref<32x3xf32, #tpu.memory_space<vmem>>, vector<32x3xf32>
    %cst_333 = arith.constant dense<0.000000e+00> : vector<4x3xf32>
    %468 = tpu.matmul %442, %467, %cst_333 {dimension_numbers = #tpu.dot_dimension_numbers<[1], [0], [0], [1], [0, 0, 1, 1], [], []>} : vector<4x32xf32>, vector<32x3xf32>, vector<4x3xf32> -> vector<4x3xf32>
    %c0_334 = arith.constant 0 : index
    %c0_335 = arith.constant 0 : index
    %469 = vector.load %arg30[%c0_334, %c0_335] : memref<1x3xf32, #tpu.memory_space<vmem>>, vector<1x3xf32>
    %470 = vector.broadcast %469 : vector<1x3xf32> to vector<4x3xf32>
    %471 = arith.addf %468, %470 : vector<4x3xf32>
    %c0_336 = arith.constant 0 : index
    %c3_337 = arith.constant 3 : index
    %c0_338 = arith.constant 0 : index
    %c0_339 = arith.constant 0 : index
    %472 = vector.load %arg31[%c0_336, %c3_337, %c0_338, %c0_339] : memref<1x4x4x3xf32, #tpu.memory_space<vmem>>, vector<1x1x4x3xf32>
    %473 = vector.shape_cast %472 : vector<1x1x4x3xf32> to vector<4x3xf32>
    %474 = vector.shape_cast %471 : vector<4x3xf32> to vector<1x1x4x3xf32>
    tpu.vector_store %arg31[%c0_336, %c3_337, %c0_338, %c0_339], %474 {strides = array<i32>} : memref<1x4x4x3xf32, #tpu.memory_space<vmem>>, vector<1x1x4x3xf32>,
    return
  }
  func.func @transform_0(%arg0: i32) -> (i32, i32, i32, i32) {
    %c0_i32 = arith.constant 0 : i32
    %c0_i32_0 = arith.constant 0 : i32
    %c0_i32_1 = arith.constant 0 : i32
    %c0_i32_2 = arith.constant 0 : i32
    return %arg0, %c0_i32, %c0_i32_0, %c0_i32_1 : i32, i32, i32, i32
  }
  func.func @transform_1(%arg0: i32) -> (i32, i32, i32) {
    %c0_i32 = arith.constant 0 : i32
    %c0_i32_0 = arith.constant 0 : i32
    %c0_i32_1 = arith.constant 0 : i32
    %c0_i32_2 = arith.constant 0 : i32
    return %c0_i32, %c0_i32_0, %c0_i32_1 : i32, i32, i32
  }
  func.func @transform_2(%arg0: i32) -> (i32, i32) {
    %c0_i32 = arith.constant 0 : i32
    %c0_i32_0 = arith.constant 0 : i32
    %c0_i32_1 = arith.constant 0 : i32
    return %c0_i32, %c0_i32_0 : i32, i32
  }
  func.func @transform_3(%arg0: i32) -> (i32, i32, i32) {
    %c0_i32 = arith.constant 0 : i32
    %c0_i32_0 = arith.constant 0 : i32
    %c0_i32_1 = arith.constant 0 : i32
    %c0_i32_2 = arith.constant 0 : i32
    return %c0_i32, %c0_i32_0, %c0_i32_1 : i32, i32, i32
  }
  func.func @transform_4(%arg0: i32) -> (i32, i32) {
    %c0_i32 = arith.constant 0 : i32
    %c0_i32_0 = arith.constant 0 : i32
    %c0_i32_1 = arith.constant 0 : i32
    return %c0_i32, %c0_i32_0 : i32, i32
  }
  func.func @transform_5(%arg0: i32) -> (i32, i32, i32) {
    %c0_i32 = arith.constant 0 : i32
    %c0_i32_0 = arith.constant 0 : i32
    %c0_i32_1 = arith.constant 0 : i32
    %c0_i32_2 = arith.constant 0 : i32
    return %c0_i32, %c0_i32_0, %c0_i32_1 : i32, i32, i32
  }
  func.func @transform_6(%arg0: i32) -> (i32, i32) {
    %c0_i32 = arith.constant 0 : i32
    %c0_i32_0 = arith.constant 0 : i32
    %c0_i32_1 = arith.constant 0 : i32
    return %c0_i32, %c0_i32_0 : i32, i32
  }
  func.func @transform_7(%arg0: i32) -> (i32, i32, i32) {
    %c0_i32 = arith.constant 0 : i32
    %c0_i32_0 = arith.constant 0 : i32
    %c0_i32_1 = arith.constant 0 : i32
    %c0_i32_2 = arith.constant 0 : i32
    return %c0_i32, %c0_i32_0, %c0_i32_1 : i32, i32, i32
  }
  func.func @transform_8(%arg0: i32) -> (i32, i32) {
    %c0_i32 = arith.constant 0 : i32
    %c0_i32_0 = arith.constant 0 : i32
    %c0_i32_1 = arith.constant 0 : i32
    return %c0_i32, %c0_i32_0 : i32, i32
  }
  func.func @transform_9(%arg0: i32) -> (i32, i32) {
    %c0_i32 = arith.constant 0 : i32
    %c0_i32_0 = arith.constant 0 : i32
    %c0_i32_1 = arith.constant 0 : i32
    return %c0_i32, %c0_i32_0 : i32, i32
  }
  func.func @transform_10(%arg0: i32) -> (i32, i32) {
    %c0_i32 = arith.constant 0 : i32
    %c0_i32_0 = arith.constant 0 : i32
    %c0_i32_1 = arith.constant 0 : i32
    return %c0_i32, %c0_i32_0 : i32, i32
  }
  func.func @transform_11(%arg0: i32) -> (i32, i32) {
    %c0_i32 = arith.constant 0 : i32
    %c0_i32_0 = arith.constant 0 : i32
    %c0_i32_1 = arith.constant 0 : i32
    return %c0_i32, %c0_i32_0 : i32, i32
  }
  func.func @transform_12(%arg0: i32) -> (i32, i32) {
    %c0_i32 = arith.constant 0 : i32
    %c0_i32_0 = arith.constant 0 : i32
    %c0_i32_1 = arith.constant 0 : i32
    return %c0_i32, %c0_i32_0 : i32, i32
  }
  func.func @transform_13(%arg0: i32) -> (i32, i32) {
    %c0_i32 = arith.constant 0 : i32
    %c0_i32_0 = arith.constant 0 : i32
    %c0_i32_1 = arith.constant 0 : i32
    return %c0_i32, %c0_i32_0 : i32, i32
  }
  func.func @transform_14(%arg0: i32) -> (i32, i32, i32) {
    %c0_i32 = arith.constant 0 : i32
    %c0_i32_0 = arith.constant 0 : i32
    %c0_i32_1 = arith.constant 0 : i32
    %c0_i32_2 = arith.constant 0 : i32
    return %c0_i32, %c0_i32_0, %c0_i32_1 : i32, i32, i32
  }
  func.func @transform_15(%arg0: i32) -> (i32, i32) {
    %c0_i32 = arith.constant 0 : i32
    %c0_i32_0 = arith.constant 0 : i32
    %c0_i32_1 = arith.constant 0 : i32
    return %c0_i32, %c0_i32_0 : i32, i32
  }
  func.func @transform_16(%arg0: i32) -> (i32, i32, i32) {
    %c0_i32 = arith.constant 0 : i32
    %c0_i32_0 = arith.constant 0 : i32
    %c0_i32_1 = arith.constant 0 : i32
    %c0_i32_2 = arith.constant 0 : i32
    return %c0_i32, %c0_i32_0, %c0_i32_1 : i32, i32, i32
  }
  func.func @transform_17(%arg0: i32) -> (i32, i32, i32) {
    %c0_i32 = arith.constant 0 : i32
    %c0_i32_0 = arith.constant 0 : i32
    %c0_i32_1 = arith.constant 0 : i32
    %c0_i32_2 = arith.constant 0 : i32
    return %c0_i32, %c0_i32_0, %c0_i32_1 : i32, i32, i32
  }
  func.func @transform_18(%arg0: i32) -> (i32, i32) {
    %c0_i32 = arith.constant 0 : i32
    %c0_i32_0 = arith.constant 0 : i32
    %c0_i32_1 = arith.constant 0 : i32
    return %c0_i32, %c0_i32_0 : i32, i32
  }
  func.func @transform_19(%arg0: i32) -> (i32, i32, i32) {
    %c0_i32 = arith.constant 0 : i32
    %c0_i32_0 = arith.constant 0 : i32
    %c0_i32_1 = arith.constant 0 : i32
    %c0_i32_2 = arith.constant 0 : i32
    return %c0_i32, %c0_i32_0, %c0_i32_1 : i32, i32, i32
  }
  func.func @transform_20(%arg0: i32) -> (i32, i32) {
    %c0_i32 = arith.constant 0 : i32
    %c0_i32_0 = arith.constant 0 : i32
    %c0_i32_1 = arith.constant 0 : i32
    return %c0_i32, %c0_i32_0 : i32, i32
  }
  func.func @transform_21(%arg0: i32) -> (i32, i32, i32) {
    %c0_i32 = arith.constant 0 : i32
    %c0_i32_0 = arith.constant 0 : i32
    %c0_i32_1 = arith.constant 0 : i32
    %c0_i32_2 = arith.constant 0 : i32
    return %c0_i32, %c0_i32_0, %c0_i32_1 : i32, i32, i32
  }
  func.func @transform_22(%arg0: i32) -> (i32, i32) {
    %c0_i32 = arith.constant 0 : i32
    %c0_i32_0 = arith.constant 0 : i32
    %c0_i32_1 = arith.constant 0 : i32
    return %c0_i32, %c0_i32_0 : i32, i32
  }
  func.func @transform_23(%arg0: i32) -> (i32, i32, i32) {
    %c0_i32 = arith.constant 0 : i32
    %c0_i32_0 = arith.constant 0 : i32
    %c0_i32_1 = arith.constant 0 : i32
    %c0_i32_2 = arith.constant 0 : i32
    return %c0_i32, %c0_i32_0, %c0_i32_1 : i32, i32, i32
  }
  func.func @transform_24(%arg0: i32) -> (i32, i32, i32) {
    %c0_i32 = arith.constant 0 : i32
    %c0_i32_0 = arith.constant 0 : i32
    %c0_i32_1 = arith.constant 0 : i32
    %c0_i32_2 = arith.constant 0 : i32
    return %c0_i32, %c0_i32_0, %c0_i32_1 : i32, i32, i32
  }
  func.func @transform_25(%arg0: i32) -> (i32, i32) {
    %c0_i32 = arith.constant 0 : i32
    %c0_i32_0 = arith.constant 0 : i32
    %c0_i32_1 = arith.constant 0 : i32
    return %c0_i32, %c0_i32_0 : i32, i32
  }
  func.func @transform_26(%arg0: i32) -> (i32, i32, i32) {
    %c0_i32 = arith.constant 0 : i32
    %c0_i32_0 = arith.constant 0 : i32
    %c0_i32_1 = arith.constant 0 : i32
    %c0_i32_2 = arith.constant 0 : i32
    return %c0_i32, %c0_i32_0, %c0_i32_1 : i32, i32, i32
  }
  func.func @transform_27(%arg0: i32) -> (i32, i32) {
    %c0_i32 = arith.constant 0 : i32
    %c0_i32_0 = arith.constant 0 : i32
    %c0_i32_1 = arith.constant 0 : i32
    return %c0_i32, %c0_i32_0 : i32, i32
  }
  func.func @transform_28(%arg0: i32) -> (i32, i32) {
    %c0_i32 = arith.constant 0 : i32
    %c0_i32_0 = arith.constant 0 : i32
    %c0_i32_1 = arith.constant 0 : i32
    return %c0_i32, %c0_i32_0 : i32, i32
  }
  func.func @transform_29(%arg0: i32) -> (i32, i32) {
    %c0_i32 = arith.constant 0 : i32
    %c0_i32_0 = arith.constant 0 : i32
    %c0_i32_1 = arith.constant 0 : i32
    return %c0_i32, %c0_i32_0 : i32, i32
  }
  func.func @transform_30(%arg0: i32) -> (i32, i32, i32, i32) {
    %c0_i32 = arith.constant 0 : i32
    %c0_i32_0 = arith.constant 0 : i32
    %c0_i32_1 = arith.constant 0 : i32
    %c0_i32_2 = arith.constant 0 : i32
    return %arg0, %c0_i32, %c0_i32_0, %c0_i32_1 : i32, i32, i32, i32
  }
}

</mosaic_0001>

<llo_original>
// kernel: eeg_to_meg_unet_forward.1
$region0: #{eeg_to_meg_unet_forward.1}
  #allocation0 [shape = 'u32[]', space=smem, size = 0x4, offset = 0x4, fixed_abs, tag = 'smem constant byte address 0x4 - core index']
  #allocation1 [shape = 'u32[72,128]{1,0:T(1,128)}', space=vmem, size = 0x9000, scoped, tag = 'internal scratch']
  #allocation2 [shape = 'f32[4,128]{1,0:T(4,128)}', space=vmem, size = 0x800, scoped, tag = 'scratch operand']
  #allocation3 [shape = 'f32[4,32]{1,0:T(4,128)}', space=vmem, size = 0x800, scoped, tag = 'scratch operand']
  %s0 = inlined_call_operand.smem [shape: u32[31], index: -1, kind: input, shape index: {}]
  %s1 = sld [smem:[%s0]]
  %s2 = scalar_lea.smem %s0, 1
  %s3 = sld [smem:[%s2]]
  %s4 = scalar_lea.smem %s0, 2
  %s5 = sld [smem:[%s4]]
  %s6 = scalar_lea.smem %s0, 3
  %s7 = sld [smem:[%s6]]
  %s8 = scalar_lea.smem %s0, 4
  %s9 = sld [smem:[%s8]]
  %s10 = scalar_lea.smem %s0, 5
  %s11 = sld [smem:[%s10]]
  %s12 = scalar_lea.smem %s0, 6
  %s13 = sld [smem:[%s12]]
  %s14 = scalar_lea.smem %s0, 7
  %s15 = sld [smem:[%s14]]
  %s16 = scalar_lea.smem %s0, 8
  %s17 = sld [smem:[%s16]]
  %s18 = scalar_lea.smem %s0, 9
  %s19 = sld [smem:[%s18]]
  %s20 = scalar_lea.smem %s0, 10
  %s21 = sld [smem:[%s20]]
  %s22 = scalar_lea.smem %s0, 11
  %s23 = sld [smem:[%s22]]
  %s24 = scalar_lea.smem %s0, 12
  %s25 = sld [smem:[%s24]]
  %s26 = scalar_lea.smem %s0, 13
  %s27 = sld [smem:[%s26]]
  %s28 = scalar_lea.smem %s0, 14
  %s29 = sld [smem:[%s28]]
  %s30 = scalar_lea.smem %s0, 15
  %s31 = sld [smem:[%s30]]
  %s32 = scalar_lea.smem %s0, 16
  %s33 = sld [smem:[%s32]]
  %s34 = scalar_lea.smem %s0, 17
  %s35 = sld [smem:[%s34]]
  %s36 = scalar_lea.smem %s0, 18
  %s37 = sld [smem:[%s36]]
  %s38 = scalar_lea.smem %s0, 19
  %s39 = sld [smem:[%s38]]
  %s40 = scalar_lea.smem %s0, 20
  %s41 = sld [smem:[%s40]]
  %s42 = scalar_lea.smem %s0, 21
  %s43 = sld [smem:[%s42]]
  %s44 = scalar_lea.smem %s0, 22
  %s45 = sld [smem:[%s44]]
  %s46 = scalar_lea.smem %s0, 23
  %s47 = sld [smem:[%s46]]
  %s48 = scalar_lea.smem %s0, 24
  %s49 = sld [smem:[%s48]]
  %s50 = scalar_lea.smem %s0, 25
  %s51 = sld [smem:[%s50]]
  %s52 = scalar_lea.smem %s0, 26
  %s53 = sld [smem:[%s52]]
  %s54 = scalar_lea.smem %s0, 27
  %s55 = sld [smem:[%s54]]
  %s56 = scalar_lea.smem %s0, 28
  %s57 = sld [smem:[%s56]]
  %s58 = scalar_lea.smem %s0, 29
  %s59 = sld [smem:[%s58]]
  %s60 = scalar_lea.smem %s0, 30
  %s61 = sld [smem:[%s60]]
  %s62 = sld [smem:[#allocation0]]
  $region220: #{eeg_to_meg_unet_forward.1} parent=0
    _
  %s64 = ssub.s32 1, %s62
  %s65 = scalar_select 0, %s64, %s62
  $region1: #{eeg_to_meg_unet_forward.1} parent=0
    #allocation4 [shape = 'u8[6144]{0}', space=vmem, size = 0x1800, scoped, tag = 'input window, operand 1, single buffered']
    #allocation5 [shape = 's32[2]{0}', space=sflag, size = 0x8, scoped, tag = 'scoped memory for eeg_to_meg_unet_forward.1']
    #allocation6 [shape = 'u8[49152]{0}', space=vmem, size = 0xc000, scoped, tag = 'input window, operand 3, single buffered']
    #allocation7 [shape = 's32[1]{0}', space=sflag, size = 0x4, scoped, tag = 'scoped memory for eeg_to_meg_unet_forward.1']
    #allocation8 [shape = 'u8[49152]{0}', space=vmem, size = 0xc000, scoped, tag = 'input window, operand 5, single buffered']
    #allocation9 [shape = 'u8[32768]{0}', space=vmem, size = 0x8000, scoped, tag = 'input window, operand 9, single buffered']
    #allocation10 [shape = 's32[1]{0}', space=sflag, size = 0x4, scoped, tag = 'scoped memory for eeg_to_meg_unet_forward.1']
    #allocation11 [shape = 'u8[65536]{0}', space=vmem, size = 0x10000, scoped, tag = 'input window, operand 14, single buffered']
    #allocation12 [shape = 'u8[98304]{0}', space=vmem, size = 0x18000, scoped, tag = 'input window, operand 16, single buffered']
    #allocation13 [shape = 's32[1]{0}', space=sflag, size = 0x4, scoped, tag = 'scoped memory for eeg_to_meg_unet_forward.1']
    #allocation14 [shape = 'u8[98304]{0}', space=vmem, size = 0x18000, scoped, tag = 'input window, operand 17, single buffered']
    #allocation15 [shape = 'u8[512]{0}', space=vmem, size = 0x400, scoped, tag = 'input window, operand 18, single buffered']
    #allocation16 [shape = 's32[1]{0}', space=sflag, size = 0x4, scoped, tag = 'scoped memory for eeg_to_meg_unet_forward.1']
    #allocation17 [shape = 'u8[98304]{0}', space=vmem, size = 0x18000, scoped, tag = 'input window, operand 19, single buffered']
    #allocation18 [shape = 'u8[512]{0}', space=vmem, size = 0x400, scoped, tag = 'input window, operand 20, single buffered']
    #allocation19 [shape = 's32[1]{0}', space=sflag, size = 0x4, scoped, tag = 'scoped memory for eeg_to_meg_unet_forward.1']
    #allocation20 [shape = 'u8[49152]{0}', space=vmem, size = 0xc000, scoped, tag = 'input window, operand 23, single buffered']
    #allocation21 [shape = 'u8[49152]{0}', space=vmem, size = 0xc000, scoped, tag = 'input window, operand 24, single buffered']
    #allocation22 [shape = 's32[1]{0}', space=sflag, size = 0x4, scoped, tag = 'scoped memory for eeg_to_meg_unet_forward.1']
    #allocation23 [shape = 'u8[512]{0}', space=vmem, size = 0x400, scoped, tag = 'input window, operand 25, single buffered']
    #allocation24 [shape = 'u8[49152]{0}', space=vmem, size = 0xc000, scoped, tag = 'input window, operand 26, single buffered']
    #allocation25 [shape = 's32[1]{0}', space=sflag, size = 0x4, scoped, tag = 'scoped memory for eeg_to_meg_unet_forward.1']
    #allocation26 [shape = 'u8[512]{0}', space=vmem, size = 0x400, scoped, tag = 'input window, operand 27, single buffered']
    %66 = vsyncpa [#allocation5], 0
    %67 = vsyncpa [#allocation7], 0
    %68 = vsyncpa [#allocation10], 0
    %69 = vsyncpa [#allocation13], 0
    %70 = vsyncpa [#allocation16], 0
    %71 = vsyncpa [#allocation19], 0
    %72 = vsyncpa [#allocation22], 0
    %73 = vsyncpa [#allocation25], 0
    loop: start=0, step=1, limit=4
    $region2: #{eeg_to_meg_unet_forward.1} parent=1 // loop_pre_header
      _
    $region3: #{eeg_to_meg_unet_forward.1} parent=1 // loop_header
      %s75 = sphi 0, %s79
      %p76 = scmp.ge.s32.totalorder %s75, 4
      %s85 = sphi 0, %s87
      %s88 = sphi 0, %s85
      %s89 = sphi 0, %s88
      %s105 = sphi 0, %s89
      %s109 = sphi 0, %s109
      %s111 = sphi 0, %s109
      %s112 = sphi 0, %s111
      %s126 = sphi 0, %s112
      %s130 = sphi 0, %s130
      %s132 = sphi 0, %s130
      %s133 = sphi 0, %s132
      %s147 = sphi 0, %s133
      %s151 = sphi 0, %s151
      %s153 = sphi 0, %s151
      %s154 = sphi 0, %s153
      %s168 = sphi 0, %s154
      %s172 = sphi 0, %s172
      %s174 = sphi 0, %s172
      %s175 = sphi 0, %s174
      %s189 = sphi 0, %s175
      %s193 = sphi 0, %s193
      %s195 = sphi 0, %s193
      %s196 = sphi 0, %s195
      %s210 = sphi 0, %s196
      %s214 = sphi 0, %s214
      %s216 = sphi 0, %s214
      %s217 = sphi 0, %s216
      %s231 = sphi 0, %s217
      %s235 = sphi 0, %s235
      %s237 = sphi 0, %s235
      %s238 = sphi 0, %s237
      %s252 = sphi 0, %s238
      %s256 = sphi 0, %s256
      %s258 = sphi 0, %s256
      %s259 = sphi 0, %s258
      %s273 = sphi 0, %s259
      %s277 = sphi 0, %s277
      %s279 = sphi 0, %s277
      %s280 = sphi 0, %s279
      %s294 = sphi 0, %s280
      %s298 = sphi 0, %s298
      %s300 = sphi 0, %s298
      %s301 = sphi 0, %s300
      %s315 = sphi 0, %s301
      %s319 = sphi 0, %s319
      %s321 = sphi 0, %s319
      %s322 = sphi 0, %s321
      %s336 = sphi 0, %s322
      %s340 = sphi 0, %s340
      %s342 = sphi 0, %s340
      %s343 = sphi 0, %s342
      %s357 = sphi 0, %s343
      %s361 = sphi 0, %s361
      %s363 = sphi 0, %s361
      %s364 = sphi 0, %s363
      %s378 = sphi 0, %s364
      %s382 = sphi 0, %s382
      %s384 = sphi 0, %s382
      %s385 = sphi 0, %s384
      %s399 = sphi 0, %s385
      %s403 = sphi 0, %s403
      %s405 = sphi 0, %s403
      %s406 = sphi 0, %s405
      %s420 = sphi 0, %s406
      %s424 = sphi 0, %s424
      %s426 = sphi 0, %s424
      %s427 = sphi 0, %s426
      %s441 = sphi 0, %s427
      %s445 = sphi 0, %s445
      %s447 = sphi 0, %s445
      %s448 = sphi 0, %s447
      %s462 = sphi 0, %s448
      %s466 = sphi 0, %s466
      %s468 = sphi 0, %s466
      %s469 = sphi 0, %s468
      %s483 = sphi 0, %s469
      %s487 = sphi 0, %s487
      %s489 = sphi 0, %s487
      %s490 = sphi 0, %s489
      %s504 = sphi 0, %s490
      %s508 = sphi 0, %s508
      %s510 = sphi 0, %s508
      %s511 = sphi 0, %s510
      %s525 = sphi 0, %s511
      %s529 = sphi 0, %s529
      %s531 = sphi 0, %s529
      %s532 = sphi 0, %s531
      %s546 = sphi 0, %s532
      %s550 = sphi 0, %s550
      %s552 = sphi 0, %s550
      %s553 = sphi 0, %s552
      %s567 = sphi 0, %s553
      %s571 = sphi 0, %s571
      %s573 = sphi 0, %s571
      %s574 = sphi 0, %s573
      %s588 = sphi 0, %s574
      %s592 = sphi 0, %s592
      %s594 = sphi 0, %s592
      %s595 = sphi 0, %s594
      %s609 = sphi 0, %s595
      %s613 = sphi 0, %s613
      %s615 = sphi 0, %s613
      %s616 = sphi 0, %s615
      %s630 = sphi 0, %s616
      %s634 = sphi 0, %s634
      %s636 = sphi 0, %s634
      %s637 = sphi 0, %s636
      %s651 = sphi 0, %s637
      %s655 = sphi 0, %s655
      %s657 = sphi 0, %s655
      %s658 = sphi 0, %s657
      %s672 = sphi 0, %s658
      %s676 = sphi 0, %s676
      %s678 = sphi 0, %s676
      %s679 = sphi 0, %s678
      %s693 = sphi 0, %s679
      %s697 = sphi 0, %s697
      %s699 = sphi 0, %s697
      %s700 = sphi 0, %s699
      %s714 = sphi 0, %s700
      %s720 = sphi 0, %s722
      %s723 = sphi 0, %s720
      %s724 = sphi 0, %s723
      %s740 = sphi 0, %s724
    $region4: #{eeg_to_meg_unet_forward.1} parent=1 // loop_header_branch
      %78 = sbr.rel (%p76) target = $region8
    $region5: #{eeg_to_meg_unet_forward.1} parent=1 // loop_body
      %s80 = ssub.s32 %s75, 1
      %s81 = ssub.s32 %s75, 2
      %s82 = sadd.s32 %s75, 1
      %s83 = ssub.s32 %s75, %s82
      %p84 = scmp.eq.s32.totalorder %s83, 0
      %s86 = sadd.s32 %s85, 1
      %s87 = scalar_select %p84, %s85, %s86
      %p90 = pneg %p84
      %p91 = scmp.eq.s32.totalorder %s75, 1
      %p92 = por %p90, %p91
      %p93 = scmp.ne.s32.totalorder %s85, %s88
      %p94 = scmp.eq.s32.totalorder %s75, 0
      %p95 = por %p93, %p94
      %p96 = scmp.ne.s32.totalorder %s85, %s88
      %p97 = scmp.eq.s32.totalorder %s80, 1
      %p98 = por %p96, %p97
      %p99 = scmp.ne.s32.totalorder %s88, %s89
      %p100 = scmp.eq.s32.totalorder %s80, 0
      %p101 = por %p99, %p100
      %p102 = scmp.ne.s32.totalorder %s88, %s89
      %p103 = scmp.eq.s32.totalorder %s81, 1
      %p104 = por %p102, %p103
      %p106 = scmp.ne.s32.totalorder %s89, %s105
      %p107 = scmp.eq.s32.totalorder %s81, 0
      %p108 = por %p106, %p107
      %s110 = sadd.s32 %s109, 1
      %p113 = scmp.eq.s32.totalorder %s75, 1
      %p114 = scmp.ne.s32.totalorder %s109, %s111
      %p115 = scmp.eq.s32.totalorder %s75, 0
      %p116 = por %p114, %p115
      %p117 = scmp.ne.s32.totalorder %s109, %s111
      %p118 = scmp.eq.s32.totalorder %s80, 1
      %p119 = por %p117, %p118
      %p120 = scmp.ne.s32.totalorder %s111, %s112
      %p121 = scmp.eq.s32.totalorder %s80, 0
      %p122 = por %p120, %p121
      %p123 = scmp.ne.s32.totalorder %s111, %s112
      %p124 = scmp.eq.s32.totalorder %s81, 1
      %p125 = por %p123, %p124
      %p127 = scmp.ne.s32.totalorder %s112, %s126
      %p128 = scmp.eq.s32.totalorder %s81, 0
      %p129 = por %p127, %p128
      %s131 = sadd.s32 %s130, 1
      %p134 = scmp.eq.s32.totalorder %s75, 1
      %p135 = scmp.ne.s32.totalorder %s130, %s132
      %p136 = scmp.eq.s32.totalorder %s75, 0
      %p137 = por %p135, %p136
      %p138 = scmp.ne.s32.totalorder %s130, %s132
      %p139 = scmp.eq.s32.totalorder %s80, 1
      %p140 = por %p138, %p139
      %p141 = scmp.ne.s32.totalorder %s132, %s133
      %p142 = scmp.eq.s32.totalorder %s80, 0
      %p143 = por %p141, %p142
      %p144 = scmp.ne.s32.totalorder %s132, %s133
      %p145 = scmp.eq.s32.totalorder %s81, 1
      %p146 = por %p144, %p145
      %p148 = scmp.ne.s32.totalorder %s133, %s147
      %p149 = scmp.eq.s32.totalorder %s81, 0
      %p150 = por %p148, %p149
      %s152 = sadd.s32 %s151, 1
      %p155 = scmp.eq.s32.totalorder %s75, 1
      %p156 = scmp.ne.s32.totalorder %s151, %s153
      %p157 = scmp.eq.s32.totalorder %s75, 0
      %p158 = por %p156, %p157
      %p159 = scmp.ne.s32.totalorder %s151, %s153
      %p160 = scmp.eq.s32.totalorder %s80, 1
      %p161 = por %p159, %p160
      %p162 = scmp.ne.s32.totalorder %s153, %s154
      %p163 = scmp.eq.s32.totalorder %s80, 0
      %p164 = por %p162, %p163
      %p165 = scmp.ne.s32.totalorder %s153, %s154
      %p166 = scmp.eq.s32.totalorder %s81, 1
      %p167 = por %p165, %p166
      %p169 = scmp.ne.s32.totalorder %s154, %s168
      %p170 = scmp.eq.s32.totalorder %s81, 0
      %p171 = por %p169, %p170
      %s173 = sadd.s32 %s172, 1
      %p176 = scmp.eq.s32.totalorder %s75, 1
      %p177 = scmp.ne.s32.totalorder %s172, %s174
      %p178 = scmp.eq.s32.totalorder %s75, 0
      %p179 = por %p177, %p178
      %p180 = scmp.ne.s32.totalorder %s172, %s174
      %p181 = scmp.eq.s32.totalorder %s80, 1
      %p182 = por %p180, %p181
      %p183 = scmp.ne.s32.totalorder %s174, %s175
      %p184 = scmp.eq.s32.totalorder %s80, 0
      %p185 = por %p183, %p184
      %p186 = scmp.ne.s32.totalorder %s174, %s175
      %p187 = scmp.eq.s32.totalorder %s81, 1
      %p188 = por %p186, %p187
      %p190 = scmp.ne.s32.totalorder %s175, %s189
      %p191 = scmp.eq.s32.totalorder %s81, 0
      %p192 = por %p190, %p191
      %s194 = sadd.s32 %s193, 1
      %p197 = scmp.eq.s32.totalorder %s75, 1
      %p198 = scmp.ne.s32.totalorder %s193, %s195
      %p199 = scmp.eq.s32.totalorder %s75, 0
      %p200 = por %p198, %p199
      %p201 = scmp.ne.s32.totalorder %s193, %s195
      %p202 = scmp.eq.s32.totalorder %s80, 1
      %p203 = por %p201, %p202
      %p204 = scmp.ne.s32.totalorder %s195, %s196
      %p205 = scmp.eq.s32.totalorder %s80, 0
      %p206 = por %p204, %p205
      %p207 = scmp.ne.s32.totalorder %s195, %s196
      %p208 = scmp.eq.s32.totalorder %s81, 1
      %p209 = por %p207, %p208
      %p211 = scmp.ne.s32.totalorder %s196, %s210
      %p212 = scmp.eq.s32.totalorder %s81, 0
      %p213 = por %p211, %p212
      %s215 = sadd.s32 %s214, 1
      %p218 = scmp.eq.s32.totalorder %s75, 1
      %p219 = scmp.ne.s32.totalorder %s214, %s216
      %p220 = scmp.eq.s32.totalorder %s75, 0
      %p221 = por %p219, %p220
      %p222 = scmp.ne.s32.totalorder %s214, %s216
      %p223 = scmp.eq.s32.totalorder %s80, 1
      %p224 = por %p222, %p223
      %p225 = scmp.ne.s32.totalorder %s216, %s217
      %p226 = scmp.eq.s32.totalorder %s80, 0
      %p227 = por %p225, %p226
      %p228 = scmp.ne.s32.totalorder %s216, %s217
      %p229 = scmp.eq.s32.totalorder %s81, 1
      %p230 = por %p228, %p229
      %p232 = scmp.ne.s32.totalorder %s217, %s231
      %p233 = scmp.eq.s32.totalorder %s81, 0
      %p234 = por %p232, %p233
      %s236 = sadd.s32 %s235, 1
      %p239 = scmp.eq.s32.totalorder %s75, 1
      %p240 = scmp.ne.s32.totalorder %s235, %s237
      %p241 = scmp.eq.s32.totalorder %s75, 0
      %p242 = por %p240, %p241
      %p243 = scmp.ne.s32.totalorder %s235, %s237
      %p244 = scmp.eq.s32.totalorder %s80, 1
      %p245 = por %p243, %p244
      %p246 = scmp.ne.s32.totalorder %s237, %s238
      %p247 = scmp.eq.s32.totalorder %s80, 0
      %p248 = por %p246, %p247
      %p249 = scmp.ne.s32.totalorder %s237, %s238
      %p250 = scmp.eq.s32.totalorder %s81, 1
      %p251 = por %p249, %p250
      %p253 = scmp.ne.s32.totalorder %s238, %s252
      %p254 = scmp.eq.s32.totalorder %s81, 0
      %p255 = por %p253, %p254
      %s257 = sadd.s32 %s256, 1
      %p260 = scmp.eq.s32.totalorder %s75, 1
      %p261 = scmp.ne.s32.totalorder %s256, %s258
      %p262 = scmp.eq.s32.totalorder %s75, 0
      %p263 = por %p261, %p262
      %p264 = scmp.ne.s32.totalorder %s256, %s258
      %p265 = scmp.eq.s32.totalorder %s80, 1
      %p266 = por %p264, %p265
      %p267 = scmp.ne.s32.totalorder %s258, %s259
      %p268 = scmp.eq.s32.totalorder %s80, 0
      %p269 = por %p267, %p268
      %p270 = scmp.ne.s32.totalorder %s258, %s259
      %p271 = scmp.eq.s32.totalorder %s81, 1
      %p272 = por %p270, %p271
      %p274 = scmp.ne.s32.totalorder %s259, %s273
      %p275 = scmp.eq.s32.totalorder %s81, 0
      %p276 = por %p274, %p275
      %s278 = sadd.s32 %s277, 1
      %p281 = scmp.eq.s32.totalorder %s75, 1
      %p282 = scmp.ne.s32.totalorder %s277, %s279
      %p283 = scmp.eq.s32.totalorder %s75, 0
      %p284 = por %p282, %p283
      %p285 = scmp.ne.s32.totalorder %s277, %s279
      %p286 = scmp.eq.s32.totalorder %s80, 1
      %p287 = por %p285, %p286
      %p288 = scmp.ne.s32.totalorder %s279, %s280
      %p289 = scmp.eq.s32.totalorder %s80, 0
      %p290 = por %p288, %p289
      %p291 = scmp.ne.s32.totalorder %s279, %s280
      %p292 = scmp.eq.s32.totalorder %s81, 1
      %p293 = por %p291, %p292
      %p295 = scmp.ne.s32.totalorder %s280, %s294
      %p296 = scmp.eq.s32.totalorder %s81, 0
      %p297 = por %p295, %p296
      %s299 = sadd.s32 %s298, 1
      %p302 = scmp.eq.s32.totalorder %s75, 1
      %p303 = scmp.ne.s32.totalorder %s298, %s300
      %p304 = scmp.eq.s32.totalorder %s75, 0
      %p305 = por %p303, %p304
      %p306 = scmp.ne.s32.totalorder %s298, %s300
      %p307 = scmp.eq.s32.totalorder %s80, 1
      %p308 = por %p306, %p307
      %p309 = scmp.ne.s32.totalorder %s300, %s301
      %p310 = scmp.eq.s32.totalorder %s80, 0
      %p311 = por %p309, %p310
      %p312 = scmp.ne.s32.totalorder %s300, %s301
      %p313 = scmp.eq.s32.totalorder %s81, 1
      %p314 = por %p312, %p313
      %p316 = scmp.ne.s32.totalorder %s301, %s315
      %p317 = scmp.eq.s32.totalorder %s81, 0
      %p318 = por %p316, %p317
      %s320 = sadd.s32 %s319, 1
      %p323 = scmp.eq.s32.totalorder %s75, 1
      %p324 = scmp.ne.s32.totalorder %s319, %s321
      %p325 = scmp.eq.s32.totalorder %s75, 0
      %p326 = por %p324, %p325
      %p327 = scmp.ne.s32.totalorder %s319, %s321
      %p328 = scmp.eq.s32.totalorder %s80, 1
      %p329 = por %p327, %p328
      %p330 = scmp.ne.s32.totalorder %s321, %s322
      %p331 = scmp.eq.s32.totalorder %s80, 0
      %p332 = por %p330, %p331
      %p333 = scmp.ne.s32.totalorder %s321, %s322
      %p334 = scmp.eq.s32.totalorder %s81, 1
      %p335 = por %p333, %p334
      %p337 = scmp.ne.s32.totalorder %s322, %s336
      %p338 = scmp.eq.s32.totalorder %s81, 0
      %p339 = por %p337, %p338
      %s341 = sadd.s32 %s340, 1
      %p344 = scmp.eq.s32.totalorder %s75, 1
      %p345 = scmp.ne.s32.totalorder %s340, %s342
      %p346 = scmp.eq.s32.totalorder %s75, 0
      %p347 = por %p345, %p346
      %p348 = scmp.ne.s32.totalorder %s340, %s342
      %p349 = scmp.eq.s32.totalorder %s80, 1
      %p350 = por %p348, %p349
      %p351 = scmp.ne.s32.totalorder %s342, %s343
      %p352 = scmp.eq.s32.totalorder %s80, 0
      %p353 = por %p351, %p352
      %p354 = scmp.ne.s32.totalorder %s342, %s343
      %p355 = scmp.eq.s32.totalorder %s81, 1
      %p356 = por %p354, %p355
      %p358 = scmp.ne.s32.totalorder %s343, %s357
      %p359 = scmp.eq.s32.totalorder %s81, 0
      %p360 = por %p358, %p359
      %s362 = sadd.s32 %s361, 1
      %p365 = scmp.eq.s32.totalorder %s75, 1
      %p366 = scmp.ne.s32.totalorder %s361, %s363
      %p367 = scmp.eq.s32.totalorder %s75, 0
      %p368 = por %p366, %p367
      %p369 = scmp.ne.s32.totalorder %s361, %s363
      %p370 = scmp.eq.s32.totalorder %s80, 1
      %p371 = por %p369, %p370
      %p372 = scmp.ne.s32.totalorder %s363, %s364
      %p373 = scmp.eq.s32.totalorder %s80, 0
      %p374 = por %p372, %p373
      %p375 = scmp.ne.s32.totalorder %s363, %s364
      %p376 = scmp.eq.s32.totalorder %s81, 1
      %p377 = por %p375, %p376
      %p379 = scmp.ne.s32.totalorder %s364, %s378
      %p380 = scmp.eq.s32.totalorder %s81, 0
      %p381 = por %p379, %p380
      %s383 = sadd.s32 %s382, 1
      %p386 = scmp.eq.s32.totalorder %s75, 1
      %p387 = scmp.ne.s32.totalorder %s382, %s384
      %p388 = scmp.eq.s32.totalorder %s75, 0
      %p389 = por %p387, %p388
      %p390 = scmp.ne.s32.totalorder %s382, %s384
      %p391 = scmp.eq.s32.totalorder %s80, 1
      %p392 = por %p390, %p391
      %p393 = scmp.ne.s32.totalorder %s384, %s385
      %p394 = scmp.eq.s32.totalorder %s80, 0
      %p395 = por %p393, %p394
      %p396 = scmp.ne.s32.totalorder %s384, %s385
      %p397 = scmp.eq.s32.totalorder %s81, 1
      %p398 = por %p396, %p397
      %p400 = scmp.ne.s32.totalorder %s385, %s399
      %p401 = scmp.eq.s32.totalorder %s81, 0
      %p402 = por %p400, %p401
      %s404 = sadd.s32 %s403, 1
      %p407 = scmp.eq.s32.totalorder %s75, 1
      %p408 = scmp.ne.s32.totalorder %s403, %s405
      %p409 = scmp.eq.s32.totalorder %s75, 0
      %p410 = por %p408, %p409
      %p411 = scmp.ne.s32.totalorder %s403, %s405
      %p412 = scmp.eq.s32.totalorder %s80, 1
      %p413 = por %p411, %p412
      %p414 = scmp.ne.s32.totalorder %s405, %s406
      %p415 = scmp.eq.s32.totalorder %s80, 0
      %p416 = por %p414, %p415
      %p417 = scmp.ne.s32.totalorder %s405, %s406
      %p418 = scmp.eq.s32.totalorder %s81, 1
      %p419 = por %p417, %p418
      %p421 = scmp.ne.s32.totalorder %s406, %s420
      %p422 = scmp.eq.s32.totalorder %s81, 0
      %p423 = por %p421, %p422
      %s425 = sadd.s32 %s424, 1
      %p428 = scmp.eq.s32.totalorder %s75, 1
      %p429 = scmp.ne.s32.totalorder %s424, %s426
      %p430 = scmp.eq.s32.totalorder %s75, 0
      %p431 = por %p429, %p430
      %p432 = scmp.ne.s32.totalorder %s424, %s426
      %p433 = scmp.eq.s32.totalorder %s80, 1
      %p434 = por %p432, %p433
      %p435 = scmp.ne.s32.totalorder %s426, %s427
      %p436 = scmp.eq.s32.totalorder %s80, 0
      %p437 = por %p435, %p436
      %p438 = scmp.ne.s32.totalorder %s426, %s427
      %p439 = scmp.eq.s32.totalorder %s81, 1
      %p440 = por %p438, %p439
      %p442 = scmp.ne.s32.totalorder %s427, %s441
      %p443 = scmp.eq.s32.totalorder %s81, 0
      %p444 = por %p442, %p443
      %s446 = sadd.s32 %s445, 1
      %p449 = scmp.eq.s32.totalorder %s75, 1
      %p450 = scmp.ne.s32.totalorder %s445, %s447
      %p451 = scmp.eq.s32.totalorder %s75, 0
      %p452 = por %p450, %p451
      %p453 = scmp.ne.s32.totalorder %s445, %s447
      %p454 = scmp.eq.s32.totalorder %s80, 1
      %p455 = por %p453, %p454
      %p456 = scmp.ne.s32.totalorder %s447, %s448
      %p457 = scmp.eq.s32.totalorder %s80, 0
      %p458 = por %p456, %p457
      %p459 = scmp.ne.s32.totalorder %s447, %s448
      %p460 = scmp.eq.s32.totalorder %s81, 1
      %p461 = por %p459, %p460
      %p463 = scmp.ne.s32.totalorder %s448, %s462
      %p464 = scmp.eq.s32.totalorder %s81, 0
      %p465 = por %p463, %p464
      %s467 = sadd.s32 %s466, 1
      %p470 = scmp.eq.s32.totalorder %s75, 1
      %p471 = scmp.ne.s32.totalorder %s466, %s468
      %p472 = scmp.eq.s32.totalorder %s75, 0
      %p473 = por %p471, %p472
      %p474 = scmp.ne.s32.totalorder %s466, %s468
      %p475 = scmp.eq.s32.totalorder %s80, 1
      %p476 = por %p474, %p475
      %p477 = scmp.ne.s32.totalorder %s468, %s469
      %p478 = scmp.eq.s32.totalorder %s80, 0
      %p479 = por %p477, %p478
      %p480 = scmp.ne.s32.totalorder %s468, %s469
      %p481 = scmp.eq.s32.totalorder %s81, 1
      %p482 = por %p480, %p481
      %p484 = scmp.ne.s32.totalorder %s469, %s483
      %p485 = scmp.eq.s32.totalorder %s81, 0
      %p486 = por %p484, %p485
      %s488 = sadd.s32 %s487, 1
      %p491 = scmp.eq.s32.totalorder %s75, 1
      %p492 = scmp.ne.s32.totalorder %s487, %s489
      %p493 = scmp.eq.s32.totalorder %s75, 0
      %p494 = por %p492, %p493
      %p495 = scmp.ne.s32.totalorder %s487, %s489
      %p496 = scmp.eq.s32.totalorder %s80, 1
      %p497 = por %p495, %p496
      %p498 = scmp.ne.s32.totalorder %s489, %s490
      %p499 = scmp.eq.s32.totalorder %s80, 0
      %p500 = por %p498, %p499
      %p501 = scmp.ne.s32.totalorder %s489, %s490
      %p502 = scmp.eq.s32.totalorder %s81, 1
      %p503 = por %p501, %p502
      %p505 = scmp.ne.s32.totalorder %s490, %s504
      %p506 = scmp.eq.s32.totalorder %s81, 0
      %p507 = por %p505, %p506
      %s509 = sadd.s32 %s508, 1
      %p512 = scmp.eq.s32.totalorder %s75, 1
      %p513 = scmp.ne.s32.totalorder %s508, %s510
      %p514 = scmp.eq.s32.totalorder %s75, 0
      %p515 = por %p513, %p514
      %p516 = scmp.ne.s32.totalorder %s508, %s510
      %p517 = scmp.eq.s32.totalorder %s80, 1
      %p518 = por %p516, %p517
      %p519 = scmp.ne.s32.totalorder %s510, %s511
      %p520 = scmp.eq.s32.totalorder %s80, 0
      %p521 = por %p519, %p520
      %p522 = scmp.ne.s32.totalorder %s510, %s511
      %p523 = scmp.eq.s32.totalorder %s81, 1
      %p524 = por %p522, %p523
      %p526 = scmp.ne.s32.totalorder %s511, %s525
      %p527 = scmp.eq.s32.totalorder %s81, 0
      %p528 = por %p526, %p527
      %s530 = sadd.s32 %s529, 1
      %p533 = scmp.eq.s32.totalorder %s75, 1
      %p534 = scmp.ne.s32.totalorder %s529, %s531
      %p535 = scmp.eq.s32.totalorder %s75, 0
      %p536 = por %p534, %p535
      %p537 = scmp.ne.s32.totalorder %s529, %s531
      %p538 = scmp.eq.s32.totalorder %s80, 1
      %p539 = por %p537, %p538
      %p540 = scmp.ne.s32.totalorder %s531, %s532
      %p541 = scmp.eq.s32.totalorder %s80, 0
      %p542 = por %p540, %p541
      %p543 = scmp.ne.s32.totalorder %s531, %s532
      %p544 = scmp.eq.s32.totalorder %s81, 1
      %p545 = por %p543, %p544
      %p547 = scmp.ne.s32.totalorder %s532, %s546
      %p548 = scmp.eq.s32.totalorder %s81, 0
      %p549 = por %p547, %p548
      %s551 = sadd.s32 %s550, 1
      %p554 = scmp.eq.s32.totalorder %s75, 1
      %p555 = scmp.ne.s32.totalorder %s550, %s552
      %p556 = scmp.eq.s32.totalorder %s75, 0
      %p557 = por %p555, %p556
      %p558 = scmp.ne.s32.totalorder %s550, %s552
      %p559 = scmp.eq.s32.totalorder %s80, 1
      %p560 = por %p558, %p559
      %p561 = scmp.ne.s32.totalorder %s552, %s553
      %p562 = scmp.eq.s32.totalorder %s80, 0
      %p563 = por %p561, %p562
      %p564 = scmp.ne.s32.totalorder %s552, %s553
      %p565 = scmp.eq.s32.totalorder %s81, 1
      %p566 = por %p564, %p565
      %p568 = scmp.ne.s32.totalorder %s553, %s567
      %p569 = scmp.eq.s32.totalorder %s81, 0
      %p570 = por %p568, %p569
      %s572 = sadd.s32 %s571, 1
      %p575 = scmp.eq.s32.totalorder %s75, 1
      %p576 = scmp.ne.s32.totalorder %s571, %s573
      %p577 = scmp.eq.s32.totalorder %s75, 0
      %p578 = por %p576, %p577
      %p579 = scmp.ne.s32.totalorder %s571, %s573
      %p580 = scmp.eq.s32.totalorder %s80, 1
      %p581 = por %p579, %p580
      %p582 = scmp.ne.s32.totalorder %s573, %s574
      %p583 = scmp.eq.s32.totalorder %s80, 0
      %p584 = por %p582, %p583
      %p585 = scmp.ne.s32.totalorder %s573, %s574
      %p586 = scmp.eq.s32.totalorder %s81, 1
      %p587 = por %p585, %p586
      %p589 = scmp.ne.s32.totalorder %s574, %s588
      %p590 = scmp.eq.s32.totalorder %s81, 0
      %p591 = por %p589, %p590
      %s593 = sadd.s32 %s592, 1
      %p596 = scmp.eq.s32.totalorder %s75, 1
      %p597 = scmp.ne.s32.totalorder %s592, %s594
      %p598 = scmp.eq.s32.totalorder %s75, 0
      %p599 = por %p597, %p598
      %p600 = scmp.ne.s32.totalorder %s592, %s594
      %p601 = scmp.eq.s32.totalorder %s80, 1
      %p602 = por %p600, %p601
      %p603 = scmp.ne.s32.totalorder %s594, %s595
      %p604 = scmp.eq.s32.totalorder %s80, 0
      %p605 = por %p603, %p604
      %p606 = scmp.ne.s32.totalorder %s594, %s595
      %p607 = scmp.eq.s32.totalorder %s81, 1
      %p608 = por %p606, %p607
      %p610 = scmp.ne.s32.totalorder %s595, %s609
      %p611 = scmp.eq.s32.totalorder %s81, 0
      %p612 = por %p610, %p611
      %s614 = sadd.s32 %s613, 1
      %p617 = scmp.eq.s32.totalorder %s75, 1
      %p618 = scmp.ne.s32.totalorder %s613, %s615
      %p619 = scmp.eq.s32.totalorder %s75, 0
      %p620 = por %p618, %p619
      %p621 = scmp.ne.s32.totalorder %s613, %s615
      %p622 = scmp.eq.s32.totalorder %s80, 1
      %p623 = por %p621, %p622
      %p624 = scmp.ne.s32.totalorder %s615, %s616
      %p625 = scmp.eq.s32.totalorder %s80, 0
      %p626 = por %p624, %p625
      %p627 = scmp.ne.s32.totalorder %s615, %s616
      %p628 = scmp.eq.s32.totalorder %s81, 1
      %p629 = por %p627, %p628
      %p631 = scmp.ne.s32.totalorder %s616, %s630
      %p632 = scmp.eq.s32.totalorder %s81, 0
      %p633 = por %p631, %p632
      %s635 = sadd.s32 %s634, 1
      %p638 = scmp.eq.s32.totalorder %s75, 1
      %p639 = scmp.ne.s32.totalorder %s634, %s636
      %p640 = scmp.eq.s32.totalorder %s75, 0
      %p641 = por %p639, %p640
      %p642 = scmp.ne.s32.totalorder %s634, %s636
      %p643 = scmp.eq.s32.totalorder %s80, 1
      %p644 = por %p642, %p643
      %p645 = scmp.ne.s32.totalorder %s636, %s637
      %p646 = scmp.eq.s32.totalorder %s80, 0
      %p647 = por %p645, %p646
      %p648 = scmp.ne.s32.totalorder %s636, %s637
      %p649 = scmp.eq.s32.totalorder %s81, 1
      %p650 = por %p648, %p649
      %p652 = scmp.ne.s32.totalorder %s637, %s651
      %p653 = scmp.eq.s32.totalorder %s81, 0
      %p654 = por %p652, %p653
      %s656 = sadd.s32 %s655, 1
      %p659 = scmp.eq.s32.totalorder %s75, 1
      %p660 = scmp.ne.s32.totalorder %s655, %s657
      %p661 = scmp.eq.s32.totalorder %s75, 0
      %p662 = por %p660, %p661
      %p663 = scmp.ne.s32.totalorder %s655, %s657
      %p664 = scmp.eq.s32.totalorder %s80, 1
      %p665 = por %p663, %p664
      %p666 = scmp.ne.s32.totalorder %s657, %s658
      %p667 = scmp.eq.s32.totalorder %s80, 0
      %p668 = por %p666, %p667
      %p669 = scmp.ne.s32.totalorder %s657, %s658
      %p670 = scmp.eq.s32.totalorder %s81, 1
      %p671 = por %p669, %p670
      %p673 = scmp.ne.s32.totalorder %s658, %s672
      %p674 = scmp.eq.s32.totalorder %s81, 0
      %p675 = por %p673, %p674
      %s677 = sadd.s32 %s676, 1
      %p680 = scmp.eq.s32.totalorder %s75, 1
      %p681 = scmp.ne.s32.totalorder %s676, %s678
      %p682 = scmp.eq.s32.totalorder %s75, 0
      %p683 = por %p681, %p682
      %p684 = scmp.ne.s32.totalorder %s676, %s678
      %p685 = scmp.eq.s32.totalorder %s80, 1
      %p686 = por %p684, %p685
      %p687 = scmp.ne.s32.totalorder %s678, %s679
      %p688 = scmp.eq.s32.totalorder %s80, 0
      %p689 = por %p687, %p688
      %p690 = scmp.ne.s32.totalorder %s678, %s679
      %p691 = scmp.eq.s32.totalorder %s81, 1
      %p692 = por %p690, %p691
      %p694 = scmp.ne.s32.totalorder %s679, %s693
      %p695 = scmp.eq.s32.totalorder %s81, 0
      %p696 = por %p694, %p695
      %s698 = sadd.s32 %s697, 1
      %p701 = scmp.eq.s32.totalorder %s75, 1
      %p702 = scmp.ne.s32.totalorder %s697, %s699
      %p703 = scmp.eq.s32.totalorder %s75, 0
      %p704 = por %p702, %p703
      %p705 = scmp.ne.s32.totalorder %s697, %s699
      %p706 = scmp.eq.s32.totalorder %s80, 1
      %p707 = por %p705, %p706
      %p708 = scmp.ne.s32.totalorder %s699, %s700
      %p709 = scmp.eq.s32.totalorder %s80, 0
      %p710 = por %p708, %p709
      %p711 = scmp.ne.s32.totalorder %s699, %s700
      %p712 = scmp.eq.s32.totalorder %s81, 1
      %p713 = por %p711, %p712
      %p715 = scmp.ne.s32.totalorder %s700, %s714
      %p716 = scmp.eq.s32.totalorder %s81, 0
      %p717 = por %p715, %p716
      %s718 = ssub.s32 %s75, %s82
      %p719 = scmp.eq.s32.totalorder %s718, 0
      %s721 = sadd.s32 %s720, 1
      %s722 = scalar_select %p719, %s720, %s721
      %p725 = pneg %p719
      %p726 = scmp.eq.s32.totalorder %s75, 1
      %p727 = por %p725, %p726
      %p728 = scmp.ne.s32.totalorder %s720, %s723
      %p729 = scmp.eq.s32.totalorder %s75, 0
      %p730 = por %p728, %p729
      %p731 = scmp.ne.s32.totalorder %s720, %s723
      %p732 = scmp.eq.s32.totalorder %s80, 1
      %p733 = por %p731, %p732
      %p734 = scmp.ne.s32.totalorder %s723, %s724
      %p735 = scmp.eq.s32.totalorder %s80, 0
      %p736 = por %p734, %p735
      %p737 = scmp.ne.s32.totalorder %s723, %s724
      %p738 = scmp.eq.s32.totalorder %s81, 1
      %p739 = por %p737, %p738
      %p741 = scmp.ne.s32.totalorder %s724, %s740
      %p742 = scmp.eq.s32.totalorder %s81, 0
      %p743 = por %p741, %p742
      %p744 = scmp.le.s32.totalorder 1, %s75
      %p745 = scmp.lt.s32.totalorder %s75, 3
      %p746 = pnand %p744, %p745
      %p747 = pneg %p746
      // Predicated region
      $region9: #{eeg_to_meg_unet_forward.1} parent=5 // pred_check
        _
      $region10: #{eeg_to_meg_unet_forward.1} parent=5 // pred_check_branch
        %749 = sbr.rel (%p746) target = $region12
      $region11: #{eeg_to_meg_unet_forward.1} parent=5 // pred_region
        %s750 = ssub.s32 %s75, 1
        // Predicated region
        $region13: #{eeg_to_meg_unet_forward.1} parent=11 // pred_check
          %p751 = pneg %p122
        $region14: #{eeg_to_meg_unet_forward.1} parent=11 // pred_check_branch
          %753 = sbr.rel (%p751) target = $region16
        $region15: #{eeg_to_meg_unet_forward.1} parent=11 // pred_region
          %755 = vsyncadd [#allocation5], 0
          %s756 = sshll.u32 %s3, 4
          %s757 = int_to_ptr.hbm [resolvable:$true] %s756
          %s758 = sshll.u32 [#allocation4], 4
          %s759 = int_to_ptr.vmem [resolvable:$true] %s758
          %764 = dma.hbm_to_vmem [thread:$0]  %s757, 192, %s759, [#allocation5], 64, 64, 4
        $region16: #{eeg_to_meg_unet_forward.1} parent=11 // pred_fallthru
          _
        // Predicated region
        $region17: #{eeg_to_meg_unet_forward.1} parent=11 // pred_check
          %p765 = pneg %p143
        $region18: #{eeg_to_meg_unet_forward.1} parent=11 // pred_check_branch
          %767 = sbr.rel (%p765) target = $region20
        $region19: #{eeg_to_meg_unet_forward.1} parent=11 // pred_region
          _
        $region20: #{eeg_to_meg_unet_forward.1} parent=11 // pred_fallthru
          _
        // Predicated region
        $region21: #{eeg_to_meg_unet_forward.1} parent=11 // pred_check
          %p768 = pneg %p164
        $region22: #{eeg_to_meg_unet_forward.1} parent=11 // pred_check_branch
          %770 = sbr.rel (%p768) target = $region24
        $region23: #{eeg_to_meg_unet_forward.1} parent=11 // pred_region
          %772 = vsyncadd [#allocation7], 0
          %s773 = sshll.u32 %s7, 4
          %s774 = int_to_ptr.hbm [resolvable:$true] %s773
          %s775 = sshll.u32 [#allocation6], 4
          %s776 = int_to_ptr.vmem [resolvable:$true] %s775
          %781 = dma.hbm_to_vmem [thread:$0]  %s774, 1536, %s776, [#allocation7], 128, 128, 8
        $region24: #{eeg_to_meg_unet_forward.1} parent=11 // pred_fallthru
          _
        // Predicated region
        $region25: #{eeg_to_meg_unet_forward.1} parent=11 // pred_check
          %p782 = pneg %p185
        $region26: #{eeg_to_meg_unet_forward.1} parent=11 // pred_check_branch
          %784 = sbr.rel (%p782) target = $region28
        $region27: #{eeg_to_meg_unet_forward.1} parent=11 // pred_region
          _
        $region28: #{eeg_to_meg_unet_forward.1} parent=11 // pred_fallthru
          _
        // Predicated region
        $region29: #{eeg_to_meg_unet_forward.1} parent=11 // pred_check
          %p785 = pneg %p206
        $region30: #{eeg_to_meg_unet_forward.1} parent=11 // pred_check_branch
          %787 = sbr.rel (%p785) target = $region32
        $region31: #{eeg_to_meg_unet_forward.1} parent=11 // pred_region
          %789 = vsyncadd [#allocation7], 0
          %s790 = sshll.u32 %s11, 4
          %s791 = int_to_ptr.hbm [resolvable:$true] %s790
          %s792 = sshll.u32 [#allocation8], 4
          %s793 = int_to_ptr.vmem [resolvable:$true] %s792
          %798 = dma.hbm_to_vmem [thread:$0]  %s791, 1536, %s793, [#allocation7], 128, 128, 8
        $region32: #{eeg_to_meg_unet_forward.1} parent=11 // pred_fallthru
          _
        // Predicated region
        $region33: #{eeg_to_meg_unet_forward.1} parent=11 // pred_check
          %p799 = pneg %p227
        $region34: #{eeg_to_meg_unet_forward.1} parent=11 // pred_check_branch
          %801 = sbr.rel (%p799) target = $region36
        $region35: #{eeg_to_meg_unet_forward.1} parent=11 // pred_region
          _
        $region36: #{eeg_to_meg_unet_forward.1} parent=11 // pred_fallthru
          _
        // Predicated region
        $region37: #{eeg_to_meg_unet_forward.1} parent=11 // pred_check
          %p802 = pneg %p248
        $region38: #{eeg_to_meg_unet_forward.1} parent=11 // pred_check_branch
          %804 = sbr.rel (%p802) target = $region40
        $region39: #{eeg_to_meg_unet_forward.1} parent=11 // pred_region
          _
        $region40: #{eeg_to_meg_unet_forward.1} parent=11 // pred_fallthru
          _
        // Predicated region
        $region41: #{eeg_to_meg_unet_forward.1} parent=11 // pred_check
          %p805 = pneg %p269
        $region42: #{eeg_to_meg_unet_forward.1} parent=11 // pred_check_branch
          %807 = sbr.rel (%p805) target = $region44
        $region43: #{eeg_to_meg_unet_forward.1} parent=11 // pred_region
          _
        $region44: #{eeg_to_meg_unet_forward.1} parent=11 // pred_fallthru
          _
        // Predicated region
        $region45: #{eeg_to_meg_unet_forward.1} parent=11 // pred_check
          %p808 = pneg %p290
        $region46: #{eeg_to_meg_unet_forward.1} parent=11 // pred_check_branch
          %810 = sbr.rel (%p808) target = $region48
        $region47: #{eeg_to_meg_unet_forward.1} parent=11 // pred_region
          %812 = vsyncadd [#allocation10], 0
          %s813 = sshll.u32 %s19, 4
          %s814 = int_to_ptr.hbm [resolvable:$true] %s813
          %s815 = sshll.u32 [#allocation9], 4
          %s816 = int_to_ptr.vmem [resolvable:$true] %s815
          %821 = dma.hbm_to_vmem [thread:$0]  %s814, 1024, %s816, [#allocation10], 128, 128, 8
        $region48: #{eeg_to_meg_unet_forward.1} parent=11 // pred_fallthru
          _
        // Predicated region
        $region49: #{eeg_to_meg_unet_forward.1} parent=11 // pred_check
          %p822 = pneg %p311
        $region50: #{eeg_to_meg_unet_forward.1} parent=11 // pred_check_branch
          %824 = sbr.rel (%p822) target = $region52
        $region51: #{eeg_to_meg_unet_forward.1} parent=11 // pred_region
          _
        $region52: #{eeg_to_meg_unet_forward.1} parent=11 // pred_fallthru
          _
        // Predicated region
        $region53: #{eeg_to_meg_unet_forward.1} parent=11 // pred_check
          %p825 = pneg %p332
        $region54: #{eeg_to_meg_unet_forward.1} parent=11 // pred_check_branch
          %827 = sbr.rel (%p825) target = $region56
        $region55: #{eeg_to_meg_unet_forward.1} parent=11 // pred_region
          _
        $region56: #{eeg_to_meg_unet_forward.1} parent=11 // pred_fallthru
          _
        // Predicated region
        $region57: #{eeg_to_meg_unet_forward.1} parent=11 // pred_check
          %p828 = pneg %p353
        $region58: #{eeg_to_meg_unet_forward.1} parent=11 // pred_check_branch
          %830 = sbr.rel (%p828) target = $region60
        $region59: #{eeg_to_meg_unet_forward.1} parent=11 // pred_region
          _
        $region60: #{eeg_to_meg_unet_forward.1} parent=11 // pred_fallthru
          _
        // Predicated region
        $region61: #{eeg_to_meg_unet_forward.1} parent=11 // pred_check
          %p831 = pneg %p374
        $region62: #{eeg_to_meg_unet_forward.1} parent=11 // pred_check_branch
          %833 = sbr.rel (%p831) target = $region64
        $region63: #{eeg_to_meg_unet_forward.1} parent=11 // pred_region
          _
        $region64: #{eeg_to_meg_unet_forward.1} parent=11 // pred_fallthru
          _
        // Predicated region
        $region65: #{eeg_to_meg_unet_forward.1} parent=11 // pred_check
          %p834 = pneg %p395
        $region66: #{eeg_to_meg_unet_forward.1} parent=11 // pred_check_branch
          %836 = sbr.rel (%p834) target = $region68
        $region67: #{eeg_to_meg_unet_forward.1} parent=11 // pred_region
          %838 = vsyncadd [#allocation10], 0
          %s839 = sshll.u32 %s29, 4
          %s840 = int_to_ptr.hbm [resolvable:$true] %s839
          %s841 = sshll.u32 [#allocation11], 4
          %s842 = int_to_ptr.vmem [resolvable:$true] %s841
          %847 = dma.hbm_to_vmem [thread:$0]  %s840, 2048, %s842, [#allocation10], 128, 128, 8
        $region68: #{eeg_to_meg_unet_forward.1} parent=11 // pred_fallthru
          _
        // Predicated region
        $region69: #{eeg_to_meg_unet_forward.1} parent=11 // pred_check
          %p848 = pneg %p416
        $region70: #{eeg_to_meg_unet_forward.1} parent=11 // pred_check_branch
          %850 = sbr.rel (%p848) target = $region72
        $region71: #{eeg_to_meg_unet_forward.1} parent=11 // pred_region
          _
        $region72: #{eeg_to_meg_unet_forward.1} parent=11 // pred_fallthru
          _
        // Predicated region
        $region73: #{eeg_to_meg_unet_forward.1} parent=11 // pred_check
          %p851 = pneg %p437
        $region74: #{eeg_to_meg_unet_forward.1} parent=11 // pred_check_branch
          %853 = sbr.rel (%p851) target = $region76
        $region75: #{eeg_to_meg_unet_forward.1} parent=11 // pred_region
          %855 = vsyncadd [#allocation13], 0
          %s856 = sshll.u32 %s33, 4
          %s857 = int_to_ptr.hbm [resolvable:$true] %s856
          %s858 = sshll.u32 [#allocation12], 4
          %s859 = int_to_ptr.vmem [resolvable:$true] %s858
          %864 = dma.hbm_to_vmem [thread:$0]  %s857, 3072, %s859, [#allocation13], 128, 128, 8
        $region76: #{eeg_to_meg_unet_forward.1} parent=11 // pred_fallthru
          _
        // Predicated region
        $region77: #{eeg_to_meg_unet_forward.1} parent=11 // pred_check
          %p865 = pneg %p458
        $region78: #{eeg_to_meg_unet_forward.1} parent=11 // pred_check_branch
          %867 = sbr.rel (%p865) target = $region80
        $region79: #{eeg_to_meg_unet_forward.1} parent=11 // pred_region
          %869 = vsyncadd [#allocation13], 0
          %s870 = sshll.u32 %s35, 4
          %s871 = int_to_ptr.hbm [resolvable:$true] %s870
          %s872 = sshll.u32 [#allocation14], 4
          %s873 = int_to_ptr.vmem [resolvable:$true] %s872
          %878 = dma.hbm_to_vmem [thread:$0]  %s871, 3072, %s873, [#allocation13], 128, 128, 8
        $region80: #{eeg_to_meg_unet_forward.1} parent=11 // pred_fallthru
          _
        // Predicated region
        $region81: #{eeg_to_meg_unet_forward.1} parent=11 // pred_check
          %p879 = pneg %p479
        $region82: #{eeg_to_meg_unet_forward.1} parent=11 // pred_check_branch
          %881 = sbr.rel (%p879) target = $region84
        $region83: #{eeg_to_meg_unet_forward.1} parent=11 // pred_region
          %883 = vsyncadd [#allocation16], 0
          %s885 = sshll.u32 %s37, 4
          %s886 = int_to_ptr.hbm [resolvable:$true] %s885
          %s887 = sshll.u32 [#allocation15], 4
          %s888 = int_to_ptr.vmem [resolvable:$true] %s887
          %890 = dma.hbm_to_vmem [thread:$0]  %s886, 16, %s888, [#allocation16]
        $region84: #{eeg_to_meg_unet_forward.1} parent=11 // pred_fallthru
          _
        // Predicated region
        $region85: #{eeg_to_meg_unet_forward.1} parent=11 // pred_check
          %p891 = pneg %p500
        $region86: #{eeg_to_meg_unet_forward.1} parent=11 // pred_check_branch
          %893 = sbr.rel (%p891) target = $region88
        $region87: #{eeg_to_meg_unet_forward.1} parent=11 // pred_region
          %895 = vsyncadd [#allocation16], 0
          %s896 = sshll.u32 %s39, 4
          %s897 = int_to_ptr.hbm [resolvable:$true] %s896
          %s898 = sshll.u32 [#allocation17], 4
          %s899 = int_to_ptr.vmem [resolvable:$true] %s898
          %904 = dma.hbm_to_vmem [thread:$0]  %s897, 3072, %s899, [#allocation16], 128, 128, 8
        $region88: #{eeg_to_meg_unet_forward.1} parent=11 // pred_fallthru
          _
        // Predicated region
        $region89: #{eeg_to_meg_unet_forward.1} parent=11 // pred_check
          %p905 = pneg %p521
        $region90: #{eeg_to_meg_unet_forward.1} parent=11 // pred_check_branch
          %907 = sbr.rel (%p905) target = $region92
        $region91: #{eeg_to_meg_unet_forward.1} parent=11 // pred_region
          %909 = vsyncadd [#allocation19], 0
          %s911 = sshll.u32 %s41, 4
          %s912 = int_to_ptr.hbm [resolvable:$true] %s911
          %s913 = sshll.u32 [#allocation18], 4
          %s914 = int_to_ptr.vmem [resolvable:$true] %s913
          %916 = dma.hbm_to_vmem [thread:$0]  %s912, 16, %s914, [#allocation19]
        $region92: #{eeg_to_meg_unet_forward.1} parent=11 // pred_fallthru
          _
        // Predicated region
        $region93: #{eeg_to_meg_unet_forward.1} parent=11 // pred_check
          %p917 = pneg %p542
        $region94: #{eeg_to_meg_unet_forward.1} parent=11 // pred_check_branch
          %919 = sbr.rel (%p917) target = $region96
        $region95: #{eeg_to_meg_unet_forward.1} parent=11 // pred_region
          _
        $region96: #{eeg_to_meg_unet_forward.1} parent=11 // pred_fallthru
          _
        // Predicated region
        $region97: #{eeg_to_meg_unet_forward.1} parent=11 // pred_check
          %p920 = pneg %p563
        $region98: #{eeg_to_meg_unet_forward.1} parent=11 // pred_check_branch
          %922 = sbr.rel (%p920) target = $region100
        $region99: #{eeg_to_meg_unet_forward.1} parent=11 // pred_region
          _
        $region100: #{eeg_to_meg_unet_forward.1} parent=11 // pred_fallthru
          _
        // Predicated region
        $region101: #{eeg_to_meg_unet_forward.1} parent=11 // pred_check
          %p923 = pneg %p584
        $region102: #{eeg_to_meg_unet_forward.1} parent=11 // pred_check_branch
          %925 = sbr.rel (%p923) target = $region104
        $region103: #{eeg_to_meg_unet_forward.1} parent=11 // pred_region
          %927 = vsyncadd [#allocation19], 0
          %s928 = sshll.u32 %s47, 4
          %s929 = int_to_ptr.hbm [resolvable:$true] %s928
          %s930 = sshll.u32 [#allocation20], 4
          %s931 = int_to_ptr.vmem [resolvable:$true] %s930
          %936 = dma.hbm_to_vmem [thread:$0]  %s929, 1536, %s931, [#allocation19], 128, 128, 8
        $region104: #{eeg_to_meg_unet_forward.1} parent=11 // pred_fallthru
          _
        // Predicated region
        $region105: #{eeg_to_meg_unet_forward.1} parent=11 // pred_check
          %p937 = pneg %p605
        $region106: #{eeg_to_meg_unet_forward.1} parent=11 // pred_check_branch
          %939 = sbr.rel (%p937) target = $region108
        $region107: #{eeg_to_meg_unet_forward.1} parent=11 // pred_region
          %941 = vsyncadd [#allocation22], 0
          %s942 = sshll.u32 %s49, 4
          %s943 = int_to_ptr.hbm [resolvable:$true] %s942
          %s944 = sshll.u32 [#allocation21], 4
          %s945 = int_to_ptr.vmem [resolvable:$true] %s944
          %950 = dma.hbm_to_vmem [thread:$0]  %s943, 1536, %s945, [#allocation22], 128, 128, 8
        $region108: #{eeg_to_meg_unet_forward.1} parent=11 // pred_fallthru
          _
        // Predicated region
        $region109: #{eeg_to_meg_unet_forward.1} parent=11 // pred_check
          %p951 = pneg %p626
        $region110: #{eeg_to_meg_unet_forward.1} parent=11 // pred_check_branch
          %953 = sbr.rel (%p951) target = $region112
        $region111: #{eeg_to_meg_unet_forward.1} parent=11 // pred_region
          %955 = vsyncadd [#allocation22], 0
          %s957 = sshll.u32 %s51, 4
          %s958 = int_to_ptr.hbm [resolvable:$true] %s957
          %s959 = sshll.u32 [#allocation23], 4
          %s960 = int_to_ptr.vmem [resolvable:$true] %s959
          %962 = dma.hbm_to_vmem [thread:$0]  %s958, 16, %s960, [#allocation22]
        $region112: #{eeg_to_meg_unet_forward.1} parent=11 // pred_fallthru
          _
        // Predicated region
        $region113: #{eeg_to_meg_unet_forward.1} parent=11 // pred_check
          %p963 = pneg %p647
        $region114: #{eeg_to_meg_unet_forward.1} parent=11 // pred_check_branch
          %965 = sbr.rel (%p963) target = $region116
        $region115: #{eeg_to_meg_unet_forward.1} parent=11 // pred_region
          %967 = vsyncadd [#allocation25], 0
          %s968 = sshll.u32 %s53, 4
          %s969 = int_to_ptr.hbm [resolvable:$true] %s968
          %s970 = sshll.u32 [#allocation24], 4
          %s971 = int_to_ptr.vmem [resolvable:$true] %s970
          %976 = dma.hbm_to_vmem [thread:$0]  %s969, 1536, %s971, [#allocation25], 128, 128, 8
        $region116: #{eeg_to_meg_unet_forward.1} parent=11 // pred_fallthru
          _
        // Predicated region
        $region117: #{eeg_to_meg_unet_forward.1} parent=11 // pred_check
          %p977 = pneg %p668
        $region118: #{eeg_to_meg_unet_forward.1} parent=11 // pred_check_branch
          %979 = sbr.rel (%p977) target = $region120
        $region119: #{eeg_to_meg_unet_forward.1} parent=11 // pred_region
          %981 = vsyncadd [#allocation25], 0
          %s983 = sshll.u32 %s55, 4
          %s984 = int_to_ptr.hbm [resolvable:$true] %s983
          %s985 = sshll.u32 [#allocation26], 4
          %s986 = int_to_ptr.vmem [resolvable:$true] %s985
          %988 = dma.hbm_to_vmem [thread:$0]  %s984, 16, %s986, [#allocation25]
        $region120: #{eeg_to_meg_unet_forward.1} parent=11 // pred_fallthru
          _
        // Predicated region
        $region121: #{eeg_to_meg_unet_forward.1} parent=11 // pred_check
          %p989 = pneg %p689
        $region122: #{eeg_to_meg_unet_forward.1} parent=11 // pred_check_branch
          %991 = sbr.rel (%p989) target = $region124
        $region123: #{eeg_to_meg_unet_forward.1} parent=11 // pred_region
          _
        $region124: #{eeg_to_meg_unet_forward.1} parent=11 // pred_fallthru
          _
        // Predicated region
        $region125: #{eeg_to_meg_unet_forward.1} parent=11 // pred_check
          %p992 = pneg %p710
        $region126: #{eeg_to_meg_unet_forward.1} parent=11 // pred_check_branch
          %994 = sbr.rel (%p992) target = $region128
        $region127: #{eeg_to_meg_unet_forward.1} parent=11 // pred_region
          _
        $region128: #{eeg_to_meg_unet_forward.1} parent=11 // pred_fallthru
          _
      $region12: #{eeg_to_meg_unet_forward.1} parent=5 // pred_fallthru
        _
      %p995 = scmp.lt.s32.totalorder %s75, 2
      // Predicated region
      $region129: #{eeg_to_meg_unet_forward.1} parent=5 // pred_check
        %p996 = pneg %p995
      $region130: #{eeg_to_meg_unet_forward.1} parent=5 // pred_check_branch
        %998 = sbr.rel (%p996) target = $region132
      $region131: #{eeg_to_meg_unet_forward.1} parent=5 // pred_region
        // Predicated region
        $region133: #{eeg_to_meg_unet_forward.1} parent=131 // pred_check
          %p999 = pneg %p95
        $region134: #{eeg_to_meg_unet_forward.1} parent=131 // pred_check_branch
          %1001 = sbr.rel (%p999) target = $region136
        $region135: #{eeg_to_meg_unet_forward.1} parent=131 // pred_region
          %p1002 = scmp.lt.s32.totalorder %s75, 1
          %s1003 = scalar_select %p1002, %s75, 1
          %s1004 = smul.addr %s1003, 4
          %s1005 = smul.addr %s1004, 4
          %s1006 = scalar_lea.vmem %s1, %s1005
        $region136: #{eeg_to_meg_unet_forward.1} parent=131 // pred_fallthru
          _
      $region132: #{eeg_to_meg_unet_forward.1} parent=5 // pred_fallthru
        _
      %p1007 = scmp.le.s32.totalorder 1, %s75
      %p1008 = scmp.lt.s32.totalorder %s75, 3
      %p1009 = pnand %p1007, %p1008
      %p1010 = pneg %p1009
      // Predicated region
      $region137: #{eeg_to_meg_unet_forward.1} parent=5 // pred_check
        _
      $region138: #{eeg_to_meg_unet_forward.1} parent=5 // pred_check_branch
        %1012 = sbr.rel (%p1009) target = $region140
      $region139: #{eeg_to_meg_unet_forward.1} parent=5 // pred_region
        %s1013 = ssub.s32 %s75, 1
        // Predicated region
        $region141: #{eeg_to_meg_unet_forward.1} parent=139 // pred_check
          %p1014 = pneg %p122
        $region142: #{eeg_to_meg_unet_forward.1} parent=139 // pred_check_branch
          %1016 = sbr.rel (%p1014) target = $region144
        $region143: #{eeg_to_meg_unet_forward.1} parent=139 // pred_region
          %1018 = dma.done [#allocation5], 192
        $region144: #{eeg_to_meg_unet_forward.1} parent=139 // pred_fallthru
          _
        // Predicated region
        $region145: #{eeg_to_meg_unet_forward.1} parent=139 // pred_check
          %p1019 = pneg %p164
        $region146: #{eeg_to_meg_unet_forward.1} parent=139 // pred_check_branch
          %1021 = sbr.rel (%p1019) target = $region148
        $region147: #{eeg_to_meg_unet_forward.1} parent=139 // pred_region
          %1023 = dma.done [#allocation7], 1536
        $region148: #{eeg_to_meg_unet_forward.1} parent=139 // pred_fallthru
          _
        // Predicated region
        $region149: #{eeg_to_meg_unet_forward.1} parent=139 // pred_check
          %p1024 = pneg %p206
        $region150: #{eeg_to_meg_unet_forward.1} parent=139 // pred_check_branch
          %1026 = sbr.rel (%p1024) target = $region152
        $region151: #{eeg_to_meg_unet_forward.1} parent=139 // pred_region
          %1028 = dma.done [#allocation7], 1536
        $region152: #{eeg_to_meg_unet_forward.1} parent=139 // pred_fallthru
          _
        // Predicated region
        $region153: #{eeg_to_meg_unet_forward.1} parent=139 // pred_check
          %p1029 = pneg %p290
        $region154: #{eeg_to_meg_unet_forward.1} parent=139 // pred_check_branch
          %1031 = sbr.rel (%p1029) target = $region156
        $region155: #{eeg_to_meg_unet_forward.1} parent=139 // pred_region
          %1033 = dma.done [#allocation10], 1024
        $region156: #{eeg_to_meg_unet_forward.1} parent=139 // pred_fallthru
          _
        // Predicated region
        $region157: #{eeg_to_meg_unet_forward.1} parent=139 // pred_check
          %p1034 = pneg %p395
        $region158: #{eeg_to_meg_unet_forward.1} parent=139 // pred_check_branch
          %1036 = sbr.rel (%p1034) target = $region160
        $region159: #{eeg_to_meg_unet_forward.1} parent=139 // pred_region
          %1038 = dma.done [#allocation10], 2048
        $region160: #{eeg_to_meg_unet_forward.1} parent=139 // pred_fallthru
          _
        // Predicated region
        $region161: #{eeg_to_meg_unet_forward.1} parent=139 // pred_check
          %p1039 = pneg %p437
        $region162: #{eeg_to_meg_unet_forward.1} parent=139 // pred_check_branch
          %1041 = sbr.rel (%p1039) target = $region164
        $region163: #{eeg_to_meg_unet_forward.1} parent=139 // pred_region
          %1043 = dma.done [#allocation13], 3072
        $region164: #{eeg_to_meg_unet_forward.1} parent=139 // pred_fallthru
          _
        // Predicated region
        $region165: #{eeg_to_meg_unet_forward.1} parent=139 // pred_check
          %p1044 = pneg %p458
        $region166: #{eeg_to_meg_unet_forward.1} parent=139 // pred_check_branch
          %1046 = sbr.rel (%p1044) target = $region168
        $region167: #{eeg_to_meg_unet_forward.1} parent=139 // pred_region
          %1048 = dma.done [#allocation13], 3072
        $region168: #{eeg_to_meg_unet_forward.1} parent=139 // pred_fallthru
          _
        // Predicated region
        $region169: #{eeg_to_meg_unet_forward.1} parent=139 // pred_check
          %p1049 = pneg %p479
        $region170: #{eeg_to_meg_unet_forward.1} parent=139 // pred_check_branch
          %1051 = sbr.rel (%p1049) target = $region172
        $region171: #{eeg_to_meg_unet_forward.1} parent=139 // pred_region
          %1053 = dma.done [#allocation16], 16
        $region172: #{eeg_to_meg_unet_forward.1} parent=139 // pred_fallthru
          _
        // Predicated region
        $region173: #{eeg_to_meg_unet_forward.1} parent=139 // pred_check
          %p1054 = pneg %p500
        $region174: #{eeg_to_meg_unet_forward.1} parent=139 // pred_check_branch
          %1056 = sbr.rel (%p1054) target = $region176
        $region175: #{eeg_to_meg_unet_forward.1} parent=139 // pred_region
          %1058 = dma.done [#allocation16], 3072
        $region176: #{eeg_to_meg_unet_forward.1} parent=139 // pred_fallthru
          _
        // Predicated region
        $region177: #{eeg_to_meg_unet_forward.1} parent=139 // pred_check
          %p1059 = pneg %p521
        $region178: #{eeg_to_meg_unet_forward.1} parent=139 // pred_check_branch
          %1061 = sbr.rel (%p1059) target = $region180
        $region179: #{eeg_to_meg_unet_forward.1} parent=139 // pred_region
          %1063 = dma.done [#allocation19], 16
        $region180: #{eeg_to_meg_unet_forward.1} parent=139 // pred_fallthru
          _
        // Predicated region
        $region181: #{eeg_to_meg_unet_forward.1} parent=139 // pred_check
          %p1064 = pneg %p584
        $region182: #{eeg_to_meg_unet_forward.1} parent=139 // pred_check_branch
          %1066 = sbr.rel (%p1064) target = $region184
        $region183: #{eeg_to_meg_unet_forward.1} parent=139 // pred_region
          %1068 = dma.done [#allocation19], 1536
        $region184: #{eeg_to_meg_unet_forward.1} parent=139 // pred_fallthru
          _
        // Predicated region
        $region185: #{eeg_to_meg_unet_forward.1} parent=139 // pred_check
          %p1069 = pneg %p605
        $region186: #{eeg_to_meg_unet_forward.1} parent=139 // pred_check_branch
          %1071 = sbr.rel (%p1069) target = $region188
        $region187: #{eeg_to_meg_unet_forward.1} parent=139 // pred_region
          %1073 = dma.done [#allocation22], 1536
        $region188: #{eeg_to_meg_unet_forward.1} parent=139 // pred_fallthru
          _
        // Predicated region
        $region189: #{eeg_to_meg_unet_forward.1} parent=139 // pred_check
          %p1074 = pneg %p626
        $region190: #{eeg_to_meg_unet_forward.1} parent=139 // pred_check_branch
          %1076 = sbr.rel (%p1074) target = $region192
        $region191: #{eeg_to_meg_unet_forward.1} parent=139 // pred_region
          %1078 = dma.done [#allocation22], 16
        $region192: #{eeg_to_meg_unet_forward.1} parent=139 // pred_fallthru
          _
        // Predicated region
        $region193: #{eeg_to_meg_unet_forward.1} parent=139 // pred_check
          %p1079 = pneg %p647
        $region194: #{eeg_to_meg_unet_forward.1} parent=139 // pred_check_branch
          %1081 = sbr.rel (%p1079) target = $region196
        $region195: #{eeg_to_meg_unet_forward.1} parent=139 // pred_region
          %1083 = dma.done [#allocation25], 1536
        $region196: #{eeg_to_meg_unet_forward.1} parent=139 // pred_fallthru
          _
        // Predicated region
        $region197: #{eeg_to_meg_unet_forward.1} parent=139 // pred_check
          %p1084 = pneg %p668
        $region198: #{eeg_to_meg_unet_forward.1} parent=139 // pred_check_branch
          %1086 = sbr.rel (%p1084) target = $region200
        $region199: #{eeg_to_meg_unet_forward.1} parent=139 // pred_region
          %1088 = dma.done [#allocation25], 16
        $region200: #{eeg_to_meg_unet_forward.1} parent=139 // pred_fallthru
          _
        %p1089 = scmp.lt.s32.totalorder %s80, 1
        %s1090 = scalar_select %p1089, %s80, 1
        %s1091 = smul.addr %s1090, 4
        %s1092 = smul.addr %s1091, 4
        %s1093 = scalar_lea.vmem %s1, %s1092
        %p1094 = pneg %p101
        %p1095 = pneg %p98
        %p1096 = pneg %p122
        %p1097 = pneg %p119
        %p1098 = pneg %p143
        %p1099 = pneg %p140
        %p1100 = pneg %p164
        %p1101 = pneg %p161
        %p1102 = pneg %p185
        %p1103 = pneg %p182
        %p1104 = pneg %p206
        %p1105 = pneg %p203
        %p1106 = pneg %p227
        %p1107 = pneg %p224
        %p1108 = pneg %p248
        %p1109 = pneg %p245
        %p1110 = pneg %p269
        %p1111 = pneg %p266
        %p1112 = pneg %p290
        %p1113 = pneg %p287
        %p1114 = pneg %p311
        %p1115 = pneg %p308
        %p1116 = pneg %p332
        %p1117 = pneg %p329
        %p1118 = pneg %p353
        %p1119 = pneg %p350
        %p1120 = pneg %p374
        %p1121 = pneg %p371
        %p1122 = pneg %p395
        %p1123 = pneg %p392
        %p1124 = pneg %p416
        %p1125 = pneg %p413
        %p1126 = pneg %p437
        %p1127 = pneg %p434
        %p1128 = pneg %p458
        %p1129 = pneg %p455
        %p1130 = pneg %p479
        %p1131 = pneg %p476
        %p1132 = pneg %p500
        %p1133 = pneg %p497
        %p1134 = pneg %p521
        %p1135 = pneg %p518
        %p1136 = pneg %p542
        %p1137 = pneg %p539
        %p1138 = pneg %p563
        %p1139 = pneg %p560
        %p1140 = pneg %p584
        %p1141 = pneg %p581
        %p1142 = pneg %p605
        %p1143 = pneg %p602
        %p1144 = pneg %p626
        %p1145 = pneg %p623
        %p1146 = pneg %p647
        %p1147 = pneg %p644
        %p1148 = pneg %p668
        %p1149 = pneg %p665
        %p1150 = pneg %p689
        %p1151 = pneg %p686
        %p1152 = pneg %p710
        %p1153 = pneg %p707
        %p1154 = pneg %p736
        %p1155 = pneg %p733
        %p1156 = scmp.lt.s32.totalorder %s80, 1
        %s1157 = scalar_select %p1156, %s80, 1
        %s1158 = smul.addr %s1157, 4
        %s1159 = smul.addr %s1158, 4
        %s1160 = scalar_lea.vmem %s61, %s1159
        %p1161 = scmp.lt.s32.totalorder %s80, 1
        %s1162 = scalar_select %p1161, %s80, 1
        %s1163 = smul.addr %s1162, 4
        %s1164 = smul.addr %s1163, 4
        %s1165 = scalar_lea.vmem %s1, %s1164
        %p1166 = scmp.lt.s32.totalorder %s80, 1
        %s1167 = scalar_select %p1166, %s80, 1
        %s1168 = smul.addr %s1167, 4
        %s1169 = smul.addr %s1168, 4
        %s1170 = scalar_lea.vmem %s61, %s1169
        %v1171 = vld [vmem:[%s1165] sm:$0xf]
        %s1172 = scalar_lea.vmem %s1165, 4
        %v1173 = vld [vmem:[%s1172] sm:$0xf]
        %s1174 = scalar_lea.vmem %s1165, 8
        %v1175 = vld [vmem:[%s1174] sm:$0xf]
        %s1176 = scalar_lea.vmem %s1165, 12
        %v1177 = vld [vmem:[%s1176] sm:$0xf]
        %v1178 = vld [vmem:[%s5] sm:$0x1]
        %v1179 = vld [vmem:[#allocation4] sm:$0x7]
        %s1180 = scalar_lea.vmem [#allocation4], 4
        %v1181 = vld [vmem:[%s1180] sm:$0x7]
        %s1182 = scalar_lea.vmem [#allocation4], 8
        %v1183 = vld [vmem:[%s1182] sm:$0x7]
        %v1185 = vrot.slane %v1177, 7
        %vm1187 = vcmask 1040384
        %v1188 = vsel %vm1187, 0.0, %v1185
        %vm1189 = vcmask 23552
        %v1191 = vsel %vm1189, %v1188, 0
        %vm1193 = vcmask 1042432
        %v1195 = vsel %vm1193, %v1179, 0
        %1197 = vmatpush.msra.mxu0 0.0
        %1198 = vmatpush.msra.mxu0 0.0
        %1199 = vmatpush.msra.mxu0 0.0
        %1200 = vmatpush.msra.mxu0 0.0
        %1201 = vmatpush.msra.mxu0 0.0
        %1202 = vmatpush.msra.mxu0 0.0
        %1203 = vmatpush.msra.mxu0 0.0
        %1204 = vmatpush.msra.mxu0 0.0
        %1205 = vmatpush.msra.mxu0 0.0
        %1206 = vmatpush.msra.mxu0 0.0
        %1207 = vmatpush.msra.mxu0 0.0
        %1208 = vmatpush.msra.mxu0 0.0
        %1209 = vmatpush.msra.mxu0 0.0
        %1210 = vmatpush.msra.mxu0 0.0
        %1211 = vmatpush.msra.mxu0 0.0
        %1212 = vmatpush.msra.mxu0 %v1195
        %1213 = vmatmul.f32.gmra.mxu0 %v1191
        %v1214 = vpop.f32.mrf.mxu0
        %v1215 = vadd.f32 0.0, %v1214
        %1216 = vdwg.mxu0
        %v1218 = vperm.slane %v1178, 0
        %v1220 = vadd.f32 %v1218, %v1215
        %v1222 = vsel %vm1189, %v1171, 0
        %v1225 = vsel %vm1193, %v1181, 0
        %1227 = vmatpush.msra.mxu0 0.0
        %1228 = vmatpush.msra.mxu0 0.0
        %1229 = vmatpush.msra.mxu0 0.0
        %1230 = vmatpush.msra.mxu0 0.0
        %1231 = vmatpush.msra.mxu0 0.0
        %1232 = vmatpush.msra.mxu0 0.0
        %1233 = vmatpush.msra.mxu0 0.0
        %1234 = vmatpush.msra.mxu0 0.0
        %1235 = vmatpush.msra.mxu0 0.0
        %1236 = vmatpush.msra.mxu0 0.0
        %1237 = vmatpush.msra.mxu0 0.0
        %1238 = vmatpush.msra.mxu0 0.0
        %1239 = vmatpush.msra.mxu0 0.0
        %1240 = vmatpush.msra.mxu0 0.0
        %1241 = vmatpush.msra.mxu0 0.0
        %1242 = vmatpush.msra.mxu0 %v1225
        %1243 = vmatmul.f32.gmra.mxu0 %v1222
        %v1244 = vpop.f32.mrf.mxu0
        %v1245 = vadd.f32 0.0, %v1244
        %1246 = vdwg.mxu0
        %v1247 = vadd.f32 %v1220, %v1245
        %v1249 = vsel %vm1189, %v1173, 0
        %v1252 = vsel %vm1193, %v1183, 0
        %1254 = vmatpush.msra.mxu0 0.0
        %1255 = vmatpush.msra.mxu0 0.0
        %1256 = vmatpush.msra.mxu0 0.0
        %1257 = vmatpush.msra.mxu0 0.0
        %1258 = vmatpush.msra.mxu0 0.0
        %1259 = vmatpush.msra.mxu0 0.0
        %1260 = vmatpush.msra.mxu0 0.0
        %1261 = vmatpush.msra.mxu0 0.0
        %1262 = vmatpush.msra.mxu0 0.0
        %1263 = vmatpush.msra.mxu0 0.0
        %1264 = vmatpush.msra.mxu0 0.0
        %1265 = vmatpush.msra.mxu0 0.0
        %1266 = vmatpush.msra.mxu0 0.0
        %1267 = vmatpush.msra.mxu0 0.0
        %1268 = vmatpush.msra.mxu0 0.0
        %1269 = vmatpush.msra.mxu0 %v1252
        %1270 = vmatmul.f32.gmra.mxu0 %v1249
        %v1271 = vpop.f32.mrf.mxu0
        %v1272 = vadd.f32 0.0, %v1271
        %1273 = vdwg.mxu0
        %v1274 = vadd.f32 %v1247, %v1272
        %1275 = vmatpush.msra.mxu0 0.0
        %1276 = vmatpush.msra.mxu0 0.0
        %1277 = vmatpush.msra.mxu0 0.0
        %1278 = vmatpush.msra.mxu0 0.0
        %1279 = vmatpush.msra.mxu0 0.0
        %1280 = vmatpush.msra.mxu0 0.0
        %1281 = vmatpush.msra.mxu0 0.0
        %1282 = vmatpush.msra.mxu0 0.0
        %1283 = vmatpush.msra.mxu0 0.0
        %1284 = vmatpush.msra.mxu0 0.0
        %1285 = vmatpush.msra.mxu0 0.0
        %1286 = vmatpush.msra.mxu0 0.0
        %1287 = vmatpush.msra.mxu0 0.0
        %1288 = vmatpush.msra.mxu0 0.0
        %1289 = vmatpush.msra.mxu0 0.0
        %1290 = vmatpush.msra.mxu0 %v1195
        %1291 = vmatmul.f32.gmra.mxu0 %v1222
        %v1292 = vpop.f32.mrf.mxu0
        %v1293 = vadd.f32 0.0, %v1292
        %1294 = vdwg.mxu0
        %v1295 = vadd.f32 %v1218, %v1293
        %1296 = vmatpush.msra.mxu0 0.0
        %1297 = vmatpush.msra.mxu0 0.0
        %1298 = vmatpush.msra.mxu0 0.0
        %1299 = vmatpush.msra.mxu0 0.0
        %1300 = vmatpush.msra.mxu0 0.0
        %1301 = vmatpush.msra.mxu0 0.0
        %1302 = vmatpush.msra.mxu0 0.0
        %1303 = vmatpush.msra.mxu0 0.0
        %1304 = vmatpush.msra.mxu0 0.0
        %1305 = vmatpush.msra.mxu0 0.0
        %1306 = vmatpush.msra.mxu0 0.0
        %1307 = vmatpush.msra.mxu0 0.0
        %1308 = vmatpush.msra.mxu0 0.0
        %1309 = vmatpush.msra.mxu0 0.0
        %1310 = vmatpush.msra.mxu0 0.0
        %1311 = vmatpush.msra.mxu0 %v1225
        %1312 = vmatmul.f32.gmra.mxu0 %v1249
        %v1313 = vpop.f32.mrf.mxu0
        %v1314 = vadd.f32 0.0, %v1313
        %1315 = vdwg.mxu0
        %v1316 = vadd.f32 %v1295, %v1314
        %v1318 = vsel %vm1189, %v1175, 0
        %1320 = vmatpush.msra.mxu0 0.0
        %1321 = vmatpush.msra.mxu0 0.0
        %1322 = vmatpush.msra.mxu0 0.0
        %1323 = vmatpush.msra.mxu0 0.0
        %1324 = vmatpush.msra.mxu0 0.0
        %1325 = vmatpush.msra.mxu0 0.0
        %1326 = vmatpush.msra.mxu0 0.0
        %1327 = vmatpush.msra.mxu0 0.0
        %1328 = vmatpush.msra.mxu0 0.0
        %1329 = vmatpush.msra.mxu0 0.0
        %1330 = vmatpush.msra.mxu0 0.0
        %1331 = vmatpush.msra.mxu0 0.0
        %1332 = vmatpush.msra.mxu0 0.0
        %1333 = vmatpush.msra.mxu0 0.0
        %1334 = vmatpush.msra.mxu0 0.0
        %1335 = vmatpush.msra.mxu0 %v1252
        %1336 = vmatmul.f32.gmra.mxu0 %v1318
        %v1337 = vpop.f32.mrf.mxu0
        %v1338 = vadd.f32 0.0, %v1337
        %1339 = vdwg.mxu0
        %v1340 = vadd.f32 %v1316, %v1338
        %1341 = vmatpush.msra.mxu0 0.0
        %1342 = vmatpush.msra.mxu0 0.0
        %1343 = vmatpush.msra.mxu0 0.0
        %1344 = vmatpush.msra.mxu0 0.0
        %1345 = vmatpush.msra.mxu0 0.0
        %1346 = vmatpush.msra.mxu0 0.0
        %1347 = vmatpush.msra.mxu0 0.0
        %1348 = vmatpush.msra.mxu0 0.0
        %1349 = vmatpush.msra.mxu0 0.0
        %1350 = vmatpush.msra.mxu0 0.0
        %1351 = vmatpush.msra.mxu0 0.0
        %1352 = vmatpush.msra.mxu0 0.0
        %1353 = vmatpush.msra.mxu0 0.0
        %1354 = vmatpush.msra.mxu0 0.0
        %1355 = vmatpush.msra.mxu0 0.0
        %1356 = vmatpush.msra.mxu0 %v1195
        %1357 = vmatmul.f32.gmra.mxu0 %v1249
        %v1358 = vpop.f32.mrf.mxu0
        %v1359 = vadd.f32 0.0, %v1358
        %1360 = vdwg.mxu0
        %v1361 = vadd.f32 %v1218, %v1359
        %1362 = vmatpush.msra.mxu0 0.0
        %1363 = vmatpush.msra.mxu0 0.0
        %1364 = vmatpush.msra.mxu0 0.0
        %1365 = vmatpush.msra.mxu0 0.0
        %1366 = vmatpush.msra.mxu0 0.0
        %1367 = vmatpush.msra.mxu0 0.0
        %1368 = vmatpush.msra.mxu0 0.0
        %1369 = vmatpush.msra.mxu0 0.0
        %1370 = vmatpush.msra.mxu0 0.0
        %1371 = vmatpush.msra.mxu0 0.0
        %1372 = vmatpush.msra.mxu0 0.0
        %1373 = vmatpush.msra.mxu0 0.0
        %1374 = vmatpush.msra.mxu0 0.0
        %1375 = vmatpush.msra.mxu0 0.0
        %1376 = vmatpush.msra.mxu0 0.0
        %1377 = vmatpush.msra.mxu0 %v1225
        %1378 = vmatmul.f32.gmra.mxu0 %v1318
        %v1379 = vpop.f32.mrf.mxu0
        %v1380 = vadd.f32 0.0, %v1379
        %1381 = vdwg.mxu0
        %v1382 = vadd.f32 %v1361, %v1380
        %v1383 = vsel %vm1189, %v1177, 0
        %1385 = vmatpush.msra.mxu0 0.0
        %1386 = vmatpush.msra.mxu0 0.0
        %1387 = vmatpush.msra.mxu0 0.0
        %1388 = vmatpush.msra.mxu0 0.0
        %1389 = vmatpush.msra.mxu0 0.0
        %1390 = vmatpush.msra.mxu0 0.0
        %1391 = vmatpush.msra.mxu0 0.0
        %1392 = vmatpush.msra.mxu0 0.0
        %1393 = vmatpush.msra.mxu0 0.0
        %1394 = vmatpush.msra.mxu0 0.0
        %1395 = vmatpush.msra.mxu0 0.0
        %1396 = vmatpush.msra.mxu0 0.0
        %1397 = vmatpush.msra.mxu0 0.0
        %1398 = vmatpush.msra.mxu0 0.0
        %1399 = vmatpush.msra.mxu0 0.0
        %1400 = vmatpush.msra.mxu0 %v1252
        %1401 = vmatmul.f32.gmra.mxu0 %v1383
        %v1402 = vpop.f32.mrf.mxu0
        %v1403 = vadd.f32 0.0, %v1402
        %1404 = vdwg.mxu0
        %v1405 = vadd.f32 %v1382, %v1403
        %1406 = vmatpush.msra.mxu0 0.0
        %1407 = vmatpush.msra.mxu0 0.0
        %1408 = vmatpush.msra.mxu0 0.0
        %1409 = vmatpush.msra.mxu0 0.0
        %1410 = vmatpush.msra.mxu0 0.0
        %1411 = vmatpush.msra.mxu0 0.0
        %1412 = vmatpush.msra.mxu0 0.0
        %1413 = vmatpush.msra.mxu0 0.0
        %1414 = vmatpush.msra.mxu0 0.0
        %1415 = vmatpush.msra.mxu0 0.0
        %1416 = vmatpush.msra.mxu0 0.0
        %1417 = vmatpush.msra.mxu0 0.0
        %1418 = vmatpush.msra.mxu0 0.0
        %1419 = vmatpush.msra.mxu0 0.0
        %1420 = vmatpush.msra.mxu0 0.0
        %1421 = vmatpush.msra.mxu0 %v1195
        %1422 = vmatmul.f32.gmra.mxu0 %v1318
        %v1423 = vpop.f32.mrf.mxu0
        %v1424 = vadd.f32 0.0, %v1423
        %1425 = vdwg.mxu0
        %v1426 = vadd.f32 %v1218, %v1424
        %1427 = vmatpush.msra.mxu0 0.0
        %1428 = vmatpush.msra.mxu0 0.0
        %1429 = vmatpush.msra.mxu0 0.0
        %1430 = vmatpush.msra.mxu0 0.0
        %1431 = vmatpush.msra.mxu0 0.0
        %1432 = vmatpush.msra.mxu0 0.0
        %1433 = vmatpush.msra.mxu0 0.0
        %1434 = vmatpush.msra.mxu0 0.0
        %1435 = vmatpush.msra.mxu0 0.0
        %1436 = vmatpush.msra.mxu0 0.0
        %1437 = vmatpush.msra.mxu0 0.0
        %1438 = vmatpush.msra.mxu0 0.0
        %1439 = vmatpush.msra.mxu0 0.0
        %1440 = vmatpush.msra.mxu0 0.0
        %1441 = vmatpush.msra.mxu0 0.0
        %1442 = vmatpush.msra.mxu0 %v1225
        %1443 = vmatmul.f32.gmra.mxu0 %v1383
        %v1444 = vpop.f32.mrf.mxu0
        %v1445 = vadd.f32 0.0, %v1444
        %1446 = vdwg.mxu0
        %v1447 = vadd.f32 %v1426, %v1445
        %v1448 = vrot.slane %v1171, 1
        %v1450 = vsel %vm1193, %v1448, 0.0
        %v1452 = vsel %vm1189, %v1450, 0
        %1454 = vmatpush.msra.mxu0 0.0
        %1455 = vmatpush.msra.mxu0 0.0
        %1456 = vmatpush.msra.mxu0 0.0
        %1457 = vmatpush.msra.mxu0 0.0
        %1458 = vmatpush.msra.mxu0 0.0
        %1459 = vmatpush.msra.mxu0 0.0
        %1460 = vmatpush.msra.mxu0 0.0
        %1461 = vmatpush.msra.mxu0 0.0
        %1462 = vmatpush.msra.mxu0 0.0
        %1463 = vmatpush.msra.mxu0 0.0
        %1464 = vmatpush.msra.mxu0 0.0
        %1465 = vmatpush.msra.mxu0 0.0
        %1466 = vmatpush.msra.mxu0 0.0
        %1467 = vmatpush.msra.mxu0 0.0
        %1468 = vmatpush.msra.mxu0 0.0
        %1469 = vmatpush.msra.mxu0 %v1252
        %1470 = vmatmul.f32.gmra.mxu0 %v1452
        %v1471 = vpop.f32.mrf.mxu0
        %v1472 = vadd.f32 0.0, %v1471
        %1473 = vdwg.mxu0
        %v1474 = vadd.f32 %v1447, %v1472
        %v1475 = vmax.f32 %v1274, 0.0
        %v1476 = vmax.f32 %v1340, 0.0
        %v1477 = vmax.f32 %v1405, 0.0
        %v1478 = vmax.f32 %v1474, 0.0
        %v1479 = vld [vmem:[%s9] sm:$0x1]
        %v1480 = vld [vmem:[#allocation6] sm:$0xff]
        %v1481 = vld [vmem:[#allocation6 + $0x8] sm:$0xff]
        %v1482 = vld [vmem:[#allocation6 + $0x10] sm:$0xff]
        %v1483 = vld [vmem:[#allocation6 + $0x18] sm:$0xff]
        %s1484 = scalar_lea.vmem [#allocation6], 32
        %v1485 = vld [vmem:[%s1484] sm:$0xff]
        %v1486 = vld [vmem:[%s1484 + $0x8] sm:$0xff]
        %v1487 = vld [vmem:[%s1484 + $0x10] sm:$0xff]
        %v1488 = vld [vmem:[%s1484 + $0x18] sm:$0xff]
        %s1489 = scalar_lea.vmem [#allocation6], 64
        %v1490 = vld [vmem:[%s1489] sm:$0xff]
        %v1491 = vld [vmem:[%s1489 + $0x8] sm:$0xff]
        %v1492 = vld [vmem:[%s1489 + $0x10] sm:$0xff]
        %v1493 = vld [vmem:[%s1489 + $0x18] sm:$0xff]
        %v1495 = vrot.slane %v1478, 7
        %v1497 = vsel %vm1187, 0.0, %v1495
        %vm1498 = vcmask 261120
        %v1500 = vsel %vm1498, %v1497, 0
        %1502 = vmatpush.msra.mxu0 0.0
        %1503 = vmatpush.msra.mxu0 0.0
        %1504 = vmatpush.msra.mxu0 0.0
        %1505 = vmatpush.msra.mxu0 0.0
        %1506 = vmatpush.msra.mxu0 0.0
        %1507 = vmatpush.msra.mxu0 0.0
        %1508 = vmatpush.msra.mxu0 0.0
        %1509 = vmatpush.msra.mxu0 0.0
        %1510 = vmatpush.msra.mxu0 0.0
        %1511 = vmatpush.msra.mxu0 0.0
        %1512 = vmatpush.msra.mxu0 0.0
        %1513 = vmatpush.msra.mxu0 0.0
        %1514 = vmatpush.msra.mxu0 %v1483
        %1515 = vmatpush.msra.mxu0 %v1482
        %1516 = vmatpush.msra.mxu0 %v1481
        %1517 = vmatpush.msra.mxu0 %v1480
        %1518 = vmatmul.f32.gmra.mxu0 %v1500
        %v1519 = vpop.f32.mrf.mxu0
        %v1520 = vadd.f32 0.0, %v1519
        %1521 = vdwg.mxu0
        %v1523 = vperm.slane %v1479, 0
        %v1525 = vadd.f32 %v1523, %v1520
        %v1527 = vsel %vm1498, %v1475, 0
        %1529 = vmatpush.msra.mxu0 0.0
        %1530 = vmatpush.msra.mxu0 0.0
        %1531 = vmatpush.msra.mxu0 0.0
        %1532 = vmatpush.msra.mxu0 0.0
        %1533 = vmatpush.msra.mxu0 0.0
        %1534 = vmatpush.msra.mxu0 0.0
        %1535 = vmatpush.msra.mxu0 0.0
        %1536 = vmatpush.msra.mxu0 0.0
        %1537 = vmatpush.msra.mxu0 0.0
        %1538 = vmatpush.msra.mxu0 0.0
        %1539 = vmatpush.msra.mxu0 0.0
        %1540 = vmatpush.msra.mxu0 0.0
        %1541 = vmatpush.msra.mxu0 %v1488
        %1542 = vmatpush.msra.mxu0 %v1487
        %1543 = vmatpush.msra.mxu0 %v1486
        %1544 = vmatpush.msra.mxu0 %v1485
        %1545 = vmatmul.f32.gmra.mxu0 %v1527
        %v1546 = vpop.f32.mrf.mxu0
        %v1547 = vadd.f32 0.0, %v1546
        %1548 = vdwg.mxu0
        %v1549 = vadd.f32 %v1525, %v1547
        %v1551 = vsel %vm1498, %v1476, 0
        %1553 = vmatpush.msra.mxu0 0.0
        %1554 = vmatpush.msra.mxu0 0.0
        %1555 = vmatpush.msra.mxu0 0.0
        %1556 = vmatpush.msra.mxu0 0.0
        %1557 = vmatpush.msra.mxu0 0.0
        %1558 = vmatpush.msra.mxu0 0.0
        %1559 = vmatpush.msra.mxu0 0.0
        %1560 = vmatpush.msra.mxu0 0.0
        %1561 = vmatpush.msra.mxu0 0.0
        %1562 = vmatpush.msra.mxu0 0.0
        %1563 = vmatpush.msra.mxu0 0.0
        %1564 = vmatpush.msra.mxu0 0.0
        %1565 = vmatpush.msra.mxu0 %v1493
        %1566 = vmatpush.msra.mxu0 %v1492
        %1567 = vmatpush.msra.mxu0 %v1491
        %1568 = vmatpush.msra.mxu0 %v1490
        %1569 = vmatmul.f32.gmra.mxu0 %v1551
        %v1570 = vpop.f32.mrf.mxu0
        %v1571 = vadd.f32 0.0, %v1570
        %1572 = vdwg.mxu0
        %v1573 = vadd.f32 %v1549, %v1571
        %1574 = vmatpush.msra.mxu0 0.0
        %1575 = vmatpush.msra.mxu0 0.0
        %1576 = vmatpush.msra.mxu0 0.0
        %1577 = vmatpush.msra.mxu0 0.0
        %1578 = vmatpush.msra.mxu0 0.0
        %1579 = vmatpush.msra.mxu0 0.0
        %1580 = vmatpush.msra.mxu0 0.0
        %1581 = vmatpush.msra.mxu0 0.0
        %1582 = vmatpush.msra.mxu0 0.0
        %1583 = vmatpush.msra.mxu0 0.0
        %1584 = vmatpush.msra.mxu0 0.0
        %1585 = vmatpush.msra.mxu0 0.0
        %1586 = vmatpush.msra.mxu0 %v1483
        %1587 = vmatpush.msra.mxu0 %v1482
        %1588 = vmatpush.msra.mxu0 %v1481
        %1589 = vmatpush.msra.mxu0 %v1480
        %1590 = vmatmul.f32.gmra.mxu0 %v1527
        %v1591 = vpop.f32.mrf.mxu0
        %v1592 = vadd.f32 0.0, %v1591
        %1593 = vdwg.mxu0
        %v1594 = vadd.f32 %v1523, %v1592
        %1595 = vmatpush.msra.mxu0 0.0
        %1596 = vmatpush.msra.mxu0 0.0
        %1597 = vmatpush.msra.mxu0 0.0
        %1598 = vmatpush.msra.mxu0 0.0
        %1599 = vmatpush.msra.mxu0 0.0
        %1600 = vmatpush.msra.mxu0 0.0
        %1601 = vmatpush.msra.mxu0 0.0
        %1602 = vmatpush.msra.mxu0 0.0
        %1603 = vmatpush.msra.mxu0 0.0
        %1604 = vmatpush.msra.mxu0 0.0
        %1605 = vmatpush.msra.mxu0 0.0
        %1606 = vmatpush.msra.mxu0 0.0
        %1607 = vmatpush.msra.mxu0 %v1488
        %1608 = vmatpush.msra.mxu0 %v1487
        %1609 = vmatpush.msra.mxu0 %v1486
        %1610 = vmatpush.msra.mxu0 %v1485
        %1611 = vmatmul.f32.gmra.mxu0 %v1551
        %v1612 = vpop.f32.mrf.mxu0
        %v1613 = vadd.f32 0.0, %v1612
        %1614 = vdwg.mxu0
        %v1615 = vadd.f32 %v1594, %v1613
        %v1617 = vsel %vm1498, %v1477, 0
        %1619 = vmatpush.msra.mxu0 0.0
        %1620 = vmatpush.msra.mxu0 0.0
        %1621 = vmatpush.msra.mxu0 0.0
        %1622 = vmatpush.msra.mxu0 0.0
        %1623 = vmatpush.msra.mxu0 0.0
        %1624 = vmatpush.msra.mxu0 0.0
        %1625 = vmatpush.msra.mxu0 0.0
        %1626 = vmatpush.msra.mxu0 0.0
        %1627 = vmatpush.msra.mxu0 0.0
        %1628 = vmatpush.msra.mxu0 0.0
        %1629 = vmatpush.msra.mxu0 0.0
        %1630 = vmatpush.msra.mxu0 0.0
        %1631 = vmatpush.msra.mxu0 %v1493
        %1632 = vmatpush.msra.mxu0 %v1492
        %1633 = vmatpush.msra.mxu0 %v1491
        %1634 = vmatpush.msra.mxu0 %v1490
        %1635 = vmatmul.f32.gmra.mxu0 %v1617
        %v1636 = vpop.f32.mrf.mxu0
        %v1637 = vadd.f32 0.0, %v1636
        %1638 = vdwg.mxu0
        %v1639 = vadd.f32 %v1615, %v1637
        %1640 = vmatpush.msra.mxu0 0.0
        %1641 = vmatpush.msra.mxu0 0.0
        %1642 = vmatpush.msra.mxu0 0.0
        %1643 = vmatpush.msra.mxu0 0.0
        %1644 = vmatpush.msra.mxu0 0.0
        %1645 = vmatpush.msra.mxu0 0.0
        %1646 = vmatpush.msra.mxu0 0.0
        %1647 = vmatpush.msra.mxu0 0.0
        %1648 = vmatpush.msra.mxu0 0.0
        %1649 = vmatpush.msra.mxu0 0.0
        %1650 = vmatpush.msra.mxu0 0.0
        %1651 = vmatpush.msra.mxu0 0.0
        %1652 = vmatpush.msra.mxu0 %v1483
        %1653 = vmatpush.msra.mxu0 %v1482
        %1654 = vmatpush.msra.mxu0 %v1481
        %1655 = vmatpush.msra.mxu0 %v1480
        %1656 = vmatmul.f32.gmra.mxu0 %v1551
        %v1657 = vpop.f32.mrf.mxu0
        %v1658 = vadd.f32 0.0, %v1657
        %1659 = vdwg.mxu0
        %v1660 = vadd.f32 %v1523, %v1658
        %1661 = vmatpush.msra.mxu0 0.0
        %1662 = vmatpush.msra.mxu0 0.0
        %1663 = vmatpush.msra.mxu0 0.0
        %1664 = vmatpush.msra.mxu0 0.0
        %1665 = vmatpush.msra.mxu0 0.0
        %1666 = vmatpush.msra.mxu0 0.0
        %1667 = vmatpush.msra.mxu0 0.0
        %1668 = vmatpush.msra.mxu0 0.0
        %1669 = vmatpush.msra.mxu0 0.0
        %1670 = vmatpush.msra.mxu0 0.0
        %1671 = vmatpush.msra.mxu0 0.0
        %1672 = vmatpush.msra.mxu0 0.0
        %1673 = vmatpush.msra.mxu0 %v1488
        %1674 = vmatpush.msra.mxu0 %v1487
        %1675 = vmatpush.msra.mxu0 %v1486
        %1676 = vmatpush.msra.mxu0 %v1485
        %1677 = vmatmul.f32.gmra.mxu0 %v1617
        %v1678 = vpop.f32.mrf.mxu0
        %v1679 = vadd.f32 0.0, %v1678
        %1680 = vdwg.mxu0
        %v1681 = vadd.f32 %v1660, %v1679
        %v1682 = vsel %vm1498, %v1478, 0
        %1684 = vmatpush.msra.mxu0 0.0
        %1685 = vmatpush.msra.mxu0 0.0
        %1686 = vmatpush.msra.mxu0 0.0
        %1687 = vmatpush.msra.mxu0 0.0
        %1688 = vmatpush.msra.mxu0 0.0
        %1689 = vmatpush.msra.mxu0 0.0
        %1690 = vmatpush.msra.mxu0 0.0
        %1691 = vmatpush.msra.mxu0 0.0
        %1692 = vmatpush.msra.mxu0 0.0
        %1693 = vmatpush.msra.mxu0 0.0
        %1694 = vmatpush.msra.mxu0 0.0
        %1695 = vmatpush.msra.mxu0 0.0
        %1696 = vmatpush.msra.mxu0 %v1493
        %1697 = vmatpush.msra.mxu0 %v1492
        %1698 = vmatpush.msra.mxu0 %v1491
        %1699 = vmatpush.msra.mxu0 %v1490
        %1700 = vmatmul.f32.gmra.mxu0 %v1682
        %v1701 = vpop.f32.mrf.mxu0
        %v1702 = vadd.f32 0.0, %v1701
        %1703 = vdwg.mxu0
        %v1704 = vadd.f32 %v1681, %v1702
        %1705 = vmatpush.msra.mxu0 0.0
        %1706 = vmatpush.msra.mxu0 0.0
        %1707 = vmatpush.msra.mxu0 0.0
        %1708 = vmatpush.msra.mxu0 0.0
        %1709 = vmatpush.msra.mxu0 0.0
        %1710 = vmatpush.msra.mxu0 0.0
        %1711 = vmatpush.msra.mxu0 0.0
        %1712 = vmatpush.msra.mxu0 0.0
        %1713 = vmatpush.msra.mxu0 0.0
        %1714 = vmatpush.msra.mxu0 0.0
        %1715 = vmatpush.msra.mxu0 0.0
        %1716 = vmatpush.msra.mxu0 0.0
        %1717 = vmatpush.msra.mxu0 %v1483
        %1718 = vmatpush.msra.mxu0 %v1482
        %1719 = vmatpush.msra.mxu0 %v1481
        %1720 = vmatpush.msra.mxu0 %v1480
        %1721 = vmatmul.f32.gmra.mxu0 %v1617
        %v1722 = vpop.f32.mrf.mxu0
        %v1723 = vadd.f32 0.0, %v1722
        %1724 = vdwg.mxu0
        %v1725 = vadd.f32 %v1523, %v1723
        %1726 = vmatpush.msra.mxu0 0.0
        %1727 = vmatpush.msra.mxu0 0.0
        %1728 = vmatpush.msra.mxu0 0.0
        %1729 = vmatpush.msra.mxu0 0.0
        %1730 = vmatpush.msra.mxu0 0.0
        %1731 = vmatpush.msra.mxu0 0.0
        %1732 = vmatpush.msra.mxu0 0.0
        %1733 = vmatpush.msra.mxu0 0.0
        %1734 = vmatpush.msra.mxu0 0.0
        %1735 = vmatpush.msra.mxu0 0.0
        %1736 = vmatpush.msra.mxu0 0.0
        %1737 = vmatpush.msra.mxu0 0.0
        %1738 = vmatpush.msra.mxu0 %v1488
        %1739 = vmatpush.msra.mxu0 %v1487
        %1740 = vmatpush.msra.mxu0 %v1486
        %1741 = vmatpush.msra.mxu0 %v1485
        %1742 = vmatmul.f32.gmra.mxu0 %v1682
        %v1743 = vpop.f32.mrf.mxu0
        %v1744 = vadd.f32 0.0, %v1743
        %1745 = vdwg.mxu0
        %v1746 = vadd.f32 %v1725, %v1744
        %v1747 = vrot.slane %v1475, 1
        %v1749 = vsel %vm1193, %v1747, 0.0
        %v1751 = vsel %vm1498, %v1749, 0
        %1753 = vmatpush.msra.mxu0 0.0
        %1754 = vmatpush.msra.mxu0 0.0
        %1755 = vmatpush.msra.mxu0 0.0
        %1756 = vmatpush.msra.mxu0 0.0
        %1757 = vmatpush.msra.mxu0 0.0
        %1758 = vmatpush.msra.mxu0 0.0
        %1759 = vmatpush.msra.mxu0 0.0
        %1760 = vmatpush.msra.mxu0 0.0
        %1761 = vmatpush.msra.mxu0 0.0
        %1762 = vmatpush.msra.mxu0 0.0
        %1763 = vmatpush.msra.mxu0 0.0
        %1764 = vmatpush.msra.mxu0 0.0
        %1765 = vmatpush.msra.mxu0 %v1493
        %1766 = vmatpush.msra.mxu0 %v1492
        %1767 = vmatpush.msra.mxu0 %v1491
        %1768 = vmatpush.msra.mxu0 %v1490
        %1769 = vmatmul.f32.gmra.mxu0 %v1751
        %v1770 = vpop.f32.mrf.mxu0
        %v1771 = vadd.f32 0.0, %v1770
        %1772 = vdwg.mxu0
        %v1773 = vadd.f32 %v1746, %v1771
        %v1774 = vmax.f32 %v1573, 0.0
        %v1775 = vmax.f32 %v1639, 0.0
        %v1776 = vmax.f32 %v1704, 0.0
        %v1777 = vmax.f32 %v1773, 0.0
        %v1778 = vmax.f32 %v1774, %v1775
        %v1779 = vmax.f32 %v1776, %v1777
        %v1780 = vld [vmem:[%s13] sm:$0x1]
        %v1781 = vld [vmem:[#allocation8] sm:$0xff]
        %v1782 = vld [vmem:[#allocation8 + $0x8] sm:$0xff]
        %v1783 = vld [vmem:[#allocation8 + $0x10] sm:$0xff]
        %v1784 = vld [vmem:[#allocation8 + $0x18] sm:$0xff]
        %s1785 = scalar_lea.vmem [#allocation8], 32
        %v1786 = vld [vmem:[%s1785] sm:$0xff]
        %v1787 = vld [vmem:[%s1785 + $0x8] sm:$0xff]
        %v1788 = vld [vmem:[%s1785 + $0x10] sm:$0xff]
        %v1789 = vld [vmem:[%s1785 + $0x18] sm:$0xff]
        %s1790 = scalar_lea.vmem [#allocation8], 64
        %v1791 = vld [vmem:[%s1790] sm:$0xff]
        %v1792 = vld [vmem:[%s1790 + $0x8] sm:$0xff]
        %v1793 = vld [vmem:[%s1790 + $0x10] sm:$0xff]
        %v1794 = vld [vmem:[%s1790 + $0x18] sm:$0xff]
        %v1796 = vrot.slane %v1779, 7
        %v1798 = vsel %vm1187, 0.0, %v1796
        %v1800 = vsel %vm1498, %v1798, 0
        %1802 = vmatpush.msra.mxu0 0.0
        %1803 = vmatpush.msra.mxu0 0.0
        %1804 = vmatpush.msra.mxu0 0.0
        %1805 = vmatpush.msra.mxu0 0.0
        %1806 = vmatpush.msra.mxu0 0.0
        %1807 = vmatpush.msra.mxu0 0.0
        %1808 = vmatpush.msra.mxu0 0.0
        %1809 = vmatpush.msra.mxu0 0.0
        %1810 = vmatpush.msra.mxu0 0.0
        %1811 = vmatpush.msra.mxu0 0.0
        %1812 = vmatpush.msra.mxu0 0.0
        %1813 = vmatpush.msra.mxu0 0.0
        %1814 = vmatpush.msra.mxu0 %v1784
        %1815 = vmatpush.msra.mxu0 %v1783
        %1816 = vmatpush.msra.mxu0 %v1782
        %1817 = vmatpush.msra.mxu0 %v1781
        %1818 = vmatmul.f32.gmra.mxu0 %v1800
        %v1819 = vpop.f32.mrf.mxu0
        %v1820 = vadd.f32 0.0, %v1819
        %1821 = vdwg.mxu0
        %v1823 = vperm.slane %v1780, 0
        %v1825 = vadd.f32 %v1823, %v1820
        %v1827 = vsel %vm1498, %v1778, 0
        %1829 = vmatpush.msra.mxu0 0.0
        %1830 = vmatpush.msra.mxu0 0.0
        %1831 = vmatpush.msra.mxu0 0.0
        %1832 = vmatpush.msra.mxu0 0.0
        %1833 = vmatpush.msra.mxu0 0.0
        %1834 = vmatpush.msra.mxu0 0.0
        %1835 = vmatpush.msra.mxu0 0.0
        %1836 = vmatpush.msra.mxu0 0.0
        %1837 = vmatpush.msra.mxu0 0.0
        %1838 = vmatpush.msra.mxu0 0.0
        %1839 = vmatpush.msra.mxu0 0.0
        %1840 = vmatpush.msra.mxu0 0.0
        %1841 = vmatpush.msra.mxu0 %v1789
        %1842 = vmatpush.msra.mxu0 %v1788
        %1843 = vmatpush.msra.mxu0 %v1787
        %1844 = vmatpush.msra.mxu0 %v1786
        %1845 = vmatmul.f32.gmra.mxu0 %v1827
        %v1846 = vpop.f32.mrf.mxu0
        %v1847 = vadd.f32 0.0, %v1846
        %1848 = vdwg.mxu0
        %v1849 = vadd.f32 %v1825, %v1847
        %v1850 = vsel %vm1498, %v1779, 0
        %1852 = vmatpush.msra.mxu0 0.0
        %1853 = vmatpush.msra.mxu0 0.0
        %1854 = vmatpush.msra.mxu0 0.0
        %1855 = vmatpush.msra.mxu0 0.0
        %1856 = vmatpush.msra.mxu0 0.0
        %1857 = vmatpush.msra.mxu0 0.0
        %1858 = vmatpush.msra.mxu0 0.0
        %1859 = vmatpush.msra.mxu0 0.0
        %1860 = vmatpush.msra.mxu0 0.0
        %1861 = vmatpush.msra.mxu0 0.0
        %1862 = vmatpush.msra.mxu0 0.0
        %1863 = vmatpush.msra.mxu0 0.0
        %1864 = vmatpush.msra.mxu0 %v1794
        %1865 = vmatpush.msra.mxu0 %v1793
        %1866 = vmatpush.msra.mxu0 %v1792
        %1867 = vmatpush.msra.mxu0 %v1791
        %1868 = vmatmul.f32.gmra.mxu0 %v1850
        %v1869 = vpop.f32.mrf.mxu0
        %v1870 = vadd.f32 0.0, %v1869
        %1871 = vdwg.mxu0
        %v1872 = vadd.f32 %v1849, %v1870
        %1873 = vmatpush.msra.mxu0 0.0
        %1874 = vmatpush.msra.mxu0 0.0
        %1875 = vmatpush.msra.mxu0 0.0
        %1876 = vmatpush.msra.mxu0 0.0
        %1877 = vmatpush.msra.mxu0 0.0
        %1878 = vmatpush.msra.mxu0 0.0
        %1879 = vmatpush.msra.mxu0 0.0
        %1880 = vmatpush.msra.mxu0 0.0
        %1881 = vmatpush.msra.mxu0 0.0
        %1882 = vmatpush.msra.mxu0 0.0
        %1883 = vmatpush.msra.mxu0 0.0
        %1884 = vmatpush.msra.mxu0 0.0
        %1885 = vmatpush.msra.mxu0 %v1784
        %1886 = vmatpush.msra.mxu0 %v1783
        %1887 = vmatpush.msra.mxu0 %v1782
        %1888 = vmatpush.msra.mxu0 %v1781
        %1889 = vmatmul.f32.gmra.mxu0 %v1827
        %v1890 = vpop.f32.mrf.mxu0
        %v1891 = vadd.f32 0.0, %v1890
        %1892 = vdwg.mxu0
        %v1893 = vadd.f32 %v1823, %v1891
        %1894 = vmatpush.msra.mxu0 0.0
        %1895 = vmatpush.msra.mxu0 0.0
        %1896 = vmatpush.msra.mxu0 0.0
        %1897 = vmatpush.msra.mxu0 0.0
        %1898 = vmatpush.msra.mxu0 0.0
        %1899 = vmatpush.msra.mxu0 0.0
        %1900 = vmatpush.msra.mxu0 0.0
        %1901 = vmatpush.msra.mxu0 0.0
        %1902 = vmatpush.msra.mxu0 0.0
        %1903 = vmatpush.msra.mxu0 0.0
        %1904 = vmatpush.msra.mxu0 0.0
        %1905 = vmatpush.msra.mxu0 0.0
        %1906 = vmatpush.msra.mxu0 %v1789
        %1907 = vmatpush.msra.mxu0 %v1788
        %1908 = vmatpush.msra.mxu0 %v1787
        %1909 = vmatpush.msra.mxu0 %v1786
        %1910 = vmatmul.f32.gmra.mxu0 %v1850
        %v1911 = vpop.f32.mrf.mxu0
        %v1912 = vadd.f32 0.0, %v1911
        %1913 = vdwg.mxu0
        %v1914 = vadd.f32 %v1893, %v1912
        %v1915 = vrot.slane %v1778, 1
        %v1917 = vsel %vm1193, %v1915, 0.0
        %v1919 = vsel %vm1498, %v1917, 0
        %1921 = vmatpush.msra.mxu0 0.0
        %1922 = vmatpush.msra.mxu0 0.0
        %1923 = vmatpush.msra.mxu0 0.0
        %1924 = vmatpush.msra.mxu0 0.0
        %1925 = vmatpush.msra.mxu0 0.0
        %1926 = vmatpush.msra.mxu0 0.0
        %1927 = vmatpush.msra.mxu0 0.0
        %1928 = vmatpush.msra.mxu0 0.0
        %1929 = vmatpush.msra.mxu0 0.0
        %1930 = vmatpush.msra.mxu0 0.0
        %1931 = vmatpush.msra.mxu0 0.0
        %1932 = vmatpush.msra.mxu0 0.0
        %1933 = vmatpush.msra.mxu0 %v1794
        %1934 = vmatpush.msra.mxu0 %v1793
        %1935 = vmatpush.msra.mxu0 %v1792
        %1936 = vmatpush.msra.mxu0 %v1791
        %1937 = vmatmul.f32.gmra.mxu0 %v1919
        %v1938 = vpop.f32.mrf.mxu0
        %v1939 = vadd.f32 0.0, %v1938
        %1940 = vdwg.mxu0
        %v1941 = vadd.f32 %v1914, %v1939
        %v1942 = vmax.f32 %v1872, 0.0
        %v1943 = vmax.f32 %v1941, 0.0
        %v1944 = vld [vmem:[%s17] sm:$0x1]
        %v1945 = vld [vmem:[%s15] sm:$0xff]
        %v1946 = vld [vmem:[%s15 + $0x8] sm:$0xff]
        %v1947 = vld [vmem:[%s15 + $0x10] sm:$0xff]
        %v1948 = vld [vmem:[%s15 + $0x18] sm:$0xff]
        %v1949 = vld [vmem:[%s15 + $0x20] sm:$0xff]
        %v1950 = vld [vmem:[%s15 + $0x28] sm:$0xff]
        %v1951 = vld [vmem:[%s15 + $0x30] sm:$0xff]
        %v1952 = vld [vmem:[%s15 + $0x38] sm:$0xff]
        %s1953 = scalar_lea.vmem %s15, 64
        %v1954 = vld [vmem:[%s1953] sm:$0xff]
        %v1955 = vld [vmem:[%s1953 + $0x8] sm:$0xff]
        %v1956 = vld [vmem:[%s1953 + $0x10] sm:$0xff]
        %v1957 = vld [vmem:[%s1953 + $0x18] sm:$0xff]
        %v1958 = vld [vmem:[%s1953 + $0x20] sm:$0xff]
        %v1959 = vld [vmem:[%s1953 + $0x28] sm:$0xff]
        %v1960 = vld [vmem:[%s1953 + $0x30] sm:$0xff]
        %v1961 = vld [vmem:[%s1953 + $0x38] sm:$0xff]
        %s1962 = scalar_lea.vmem %s15, 128
        %v1963 = vld [vmem:[%s1962] sm:$0xff]
        %v1964 = vld [vmem:[%s1962 + $0x8] sm:$0xff]
        %v1965 = vld [vmem:[%s1962 + $0x10] sm:$0xff]
        %v1966 = vld [vmem:[%s1962 + $0x18] sm:$0xff]
        %v1967 = vld [vmem:[%s1962 + $0x20] sm:$0xff]
        %v1968 = vld [vmem:[%s1962 + $0x28] sm:$0xff]
        %v1969 = vld [vmem:[%s1962 + $0x30] sm:$0xff]
        %v1970 = vld [vmem:[%s1962 + $0x38] sm:$0xff]
        %v1972 = vrot.slane %v1943, 7
        %v1974 = vsel %vm1187, 0.0, %v1972
        %vm1975 = vcmask 523264
        %v1977 = vsel %vm1975, %v1974, 0
        %1979 = vmatpush.msra.mxu0 0.0
        %1980 = vmatpush.msra.mxu0 0.0
        %1981 = vmatpush.msra.mxu0 0.0
        %1982 = vmatpush.msra.mxu0 0.0
        %1983 = vmatpush.msra.mxu0 0.0
        %1984 = vmatpush.msra.mxu0 0.0
        %1985 = vmatpush.msra.mxu0 0.0
        %1986 = vmatpush.msra.mxu0 0.0
        %1987 = vmatpush.msra.mxu0 %v1952
        %1988 = vmatpush.msra.mxu0 %v1951
        %1989 = vmatpush.msra.mxu0 %v1950
        %1990 = vmatpush.msra.mxu0 %v1949
        %1991 = vmatpush.msra.mxu0 %v1948
        %1992 = vmatpush.msra.mxu0 %v1947
        %1993 = vmatpush.msra.mxu0 %v1946
        %1994 = vmatpush.msra.mxu0 %v1945
        %1995 = vmatmul.f32.gmra.mxu0 %v1977
        %v1996 = vpop.f32.mrf.mxu0
        %v1997 = vadd.f32 0.0, %v1996
        %1998 = vdwg.mxu0
        %v2000 = vperm.slane %v1944, 0
        %v2002 = vadd.f32 %v2000, %v1997
        %v2004 = vsel %vm1975, %v1942, 0
        %2006 = vmatpush.msra.mxu0 0.0
        %2007 = vmatpush.msra.mxu0 0.0
        %2008 = vmatpush.msra.mxu0 0.0
        %2009 = vmatpush.msra.mxu0 0.0
        %2010 = vmatpush.msra.mxu0 0.0
        %2011 = vmatpush.msra.mxu0 0.0
        %2012 = vmatpush.msra.mxu0 0.0
        %2013 = vmatpush.msra.mxu0 0.0
        %2014 = vmatpush.msra.mxu0 %v1961
        %2015 = vmatpush.msra.mxu0 %v1960
        %2016 = vmatpush.msra.mxu0 %v1959
        %2017 = vmatpush.msra.mxu0 %v1958
        %2018 = vmatpush.msra.mxu0 %v1957
        %2019 = vmatpush.msra.mxu0 %v1956
        %2020 = vmatpush.msra.mxu0 %v1955
        %2021 = vmatpush.msra.mxu0 %v1954
        %2022 = vmatmul.f32.gmra.mxu0 %v2004
        %v2023 = vpop.f32.mrf.mxu0
        %v2024 = vadd.f32 0.0, %v2023
        %2025 = vdwg.mxu0
        %v2026 = vadd.f32 %v2002, %v2024
        %v2027 = vsel %vm1975, %v1943, 0
        %2029 = vmatpush.msra.mxu0 0.0
        %2030 = vmatpush.msra.mxu0 0.0
        %2031 = vmatpush.msra.mxu0 0.0
        %2032 = vmatpush.msra.mxu0 0.0
        %2033 = vmatpush.msra.mxu0 0.0
        %2034 = vmatpush.msra.mxu0 0.0
        %2035 = vmatpush.msra.mxu0 0.0
        %2036 = vmatpush.msra.mxu0 0.0
        %2037 = vmatpush.msra.mxu0 %v1970
        %2038 = vmatpush.msra.mxu0 %v1969
        %2039 = vmatpush.msra.mxu0 %v1968
        %2040 = vmatpush.msra.mxu0 %v1967
        %2041 = vmatpush.msra.mxu0 %v1966
        %2042 = vmatpush.msra.mxu0 %v1965
        %2043 = vmatpush.msra.mxu0 %v1964
        %2044 = vmatpush.msra.mxu0 %v1963
        %2045 = vmatmul.f32.gmra.mxu0 %v2027
        %v2046 = vpop.f32.mrf.mxu0
        %v2047 = vadd.f32 0.0, %v2046
        %2048 = vdwg.mxu0
        %v2049 = vadd.f32 %v2026, %v2047
        %2050 = vmatpush.msra.mxu0 0.0
        %2051 = vmatpush.msra.mxu0 0.0
        %2052 = vmatpush.msra.mxu0 0.0
        %2053 = vmatpush.msra.mxu0 0.0
        %2054 = vmatpush.msra.mxu0 0.0
        %2055 = vmatpush.msra.mxu0 0.0
        %2056 = vmatpush.msra.mxu0 0.0
        %2057 = vmatpush.msra.mxu0 0.0
        %2058 = vmatpush.msra.mxu0 %v1952
        %2059 = vmatpush.msra.mxu0 %v1951
        %2060 = vmatpush.msra.mxu0 %v1950
        %2061 = vmatpush.msra.mxu0 %v1949
        %2062 = vmatpush.msra.mxu0 %v1948
        %2063 = vmatpush.msra.mxu0 %v1947
        %2064 = vmatpush.msra.mxu0 %v1946
        %2065 = vmatpush.msra.mxu0 %v1945
        %2066 = vmatmul.f32.gmra.mxu0 %v2004
        %v2067 = vpop.f32.mrf.mxu0
        %v2068 = vadd.f32 0.0, %v2067
        %2069 = vdwg.mxu0
        %v2070 = vadd.f32 %v2000, %v2068
        %2071 = vmatpush.msra.mxu0 0.0
        %2072 = vmatpush.msra.mxu0 0.0
        %2073 = vmatpush.msra.mxu0 0.0
        %2074 = vmatpush.msra.mxu0 0.0
        %2075 = vmatpush.msra.mxu0 0.0
        %2076 = vmatpush.msra.mxu0 0.0
        %2077 = vmatpush.msra.mxu0 0.0
        %2078 = vmatpush.msra.mxu0 0.0
        %2079 = vmatpush.msra.mxu0 %v1961
        %2080 = vmatpush.msra.mxu0 %v1960
        %2081 = vmatpush.msra.mxu0 %v1959
        %2082 = vmatpush.msra.mxu0 %v1958
        %2083 = vmatpush.msra.mxu0 %v1957
        %2084 = vmatpush.msra.mxu0 %v1956
        %2085 = vmatpush.msra.mxu0 %v1955
        %2086 = vmatpush.msra.mxu0 %v1954
        %2087 = vmatmul.f32.gmra.mxu0 %v2027
        %v2088 = vpop.f32.mrf.mxu0
        %v2089 = vadd.f32 0.0, %v2088
        %2090 = vdwg.mxu0
        %v2091 = vadd.f32 %v2070, %v2089
        %v2092 = vrot.slane %v1942, 1
        %v2094 = vsel %vm1193, %v2092, 0.0
        %v2096 = vsel %vm1975, %v2094, 0
        %2098 = vmatpush.msra.mxu0 0.0
        %2099 = vmatpush.msra.mxu0 0.0
        %2100 = vmatpush.msra.mxu0 0.0
        %2101 = vmatpush.msra.mxu0 0.0
        %2102 = vmatpush.msra.mxu0 0.0
        %2103 = vmatpush.msra.mxu0 0.0
        %2104 = vmatpush.msra.mxu0 0.0
        %2105 = vmatpush.msra.mxu0 0.0
        %2106 = vmatpush.msra.mxu0 %v1970
        %2107 = vmatpush.msra.mxu0 %v1969
        %2108 = vmatpush.msra.mxu0 %v1968
        %2109 = vmatpush.msra.mxu0 %v1967
        %2110 = vmatpush.msra.mxu0 %v1966
        %2111 = vmatpush.msra.mxu0 %v1965
        %2112 = vmatpush.msra.mxu0 %v1964
        %2113 = vmatpush.msra.mxu0 %v1963
        %2114 = vmatmul.f32.gmra.mxu0 %v2096
        %v2115 = vpop.f32.mrf.mxu0
        %v2116 = vadd.f32 0.0, %v2115
        %2117 = vdwg.mxu0
        %v2118 = vadd.f32 %v2091, %v2116
        %v2119 = vmax.f32 %v2049, 0.0
        %v2120 = vmax.f32 %v2118, 0.0
        %v2121 = vmax.f32 %v2119, %v2120
        %v2122 = vld [vmem:[#allocation9] sm:$0xff]
        %v2123 = vld [vmem:[#allocation9 + $0x8] sm:$0xff]
        %v2124 = vld [vmem:[#allocation9 + $0x10] sm:$0xff]
        %v2125 = vld [vmem:[#allocation9 + $0x18] sm:$0xff]
        %v2126 = vld [vmem:[#allocation9 + $0x20] sm:$0xff]
        %v2127 = vld [vmem:[#allocation9 + $0x28] sm:$0xff]
        %v2128 = vld [vmem:[#allocation9 + $0x30] sm:$0xff]
        %v2129 = vld [vmem:[#allocation9 + $0x38] sm:$0xff]
        %v2130 = vld [vmem:[%s23] sm:$0x1]
        %v2132 = vperm.slane %v2130, 0
        %v2135 = vsel %vm1975, %v2121, 0
        %2137 = vmatpush.msra.mxu0 0.0
        %2138 = vmatpush.msra.mxu0 0.0
        %2139 = vmatpush.msra.mxu0 0.0
        %2140 = vmatpush.msra.mxu0 0.0
        %2141 = vmatpush.msra.mxu0 0.0
        %2142 = vmatpush.msra.mxu0 0.0
        %2143 = vmatpush.msra.mxu0 0.0
        %2144 = vmatpush.msra.mxu0 0.0
        %2145 = vmatpush.msra.mxu0 %v2129
        %2146 = vmatpush.msra.mxu0 %v2128
        %2147 = vmatpush.msra.mxu0 %v2127
        %2148 = vmatpush.msra.mxu0 %v2126
        %2149 = vmatpush.msra.mxu0 %v2125
        %2150 = vmatpush.msra.mxu0 %v2124
        %2151 = vmatpush.msra.mxu0 %v2123
        %2152 = vmatpush.msra.mxu0 %v2122
        %2153 = vmatmul.f32.gmra.mxu0 %v2135
        %v2154 = vpop.f32.mrf.mxu0
        %v2155 = vadd.f32 %v2132, %v2154
        %2156 = vdwg.mxu0
        %2157 = vst [vmem:[#allocation2] sm:$0xf] %v2155
        loop: start=0, step=1, limit=4
        $region201: #{eeg_to_meg_unet_forward.1} parent=139 // loop_pre_header
          _
        $region202: #{eeg_to_meg_unet_forward.1} parent=139 // loop_header
          %s2159 = sphi 0, %s2163
          %p2160 = scmp.ge.s32.totalorder %s2159, 4
          %v2164 = vphi 0.0, %v2234
          %v2165 = vphi 0.0, %v2228
        $region203: #{eeg_to_meg_unet_forward.1} parent=139 // loop_header_branch
          %2162 = sbr.rel (%p2160) target = $region207
        $region204: #{eeg_to_meg_unet_forward.1} parent=139 // loop_body
          %s2166 = scalar_lea.vmem [#allocation2], %s2159
          %v2167 = vld [vmem:[%s2166] sm:$0x1]
          %v2168 = vld [vmem:[%s21] sm:$0xff]
          %v2169 = vld [vmem:[%s21 + $0x8] sm:$0xff]
          %v2170 = vld [vmem:[%s21 + $0x10] sm:$0xff]
          %v2171 = vld [vmem:[%s21 + $0x18] sm:$0xff]
          %2173 = vrot.lane.b32.xlu0 %v2164, 32
          %v2174 = vpop.permute.xlu0 %2173
          %v2175 = vsel %vm1498, %v2174, 0
          %2177 = vmatpush.msra.mxu0 0.0
          %2178 = vmatpush.msra.mxu0 0.0
          %2179 = vmatpush.msra.mxu0 0.0
          %2180 = vmatpush.msra.mxu0 0.0
          %2181 = vmatpush.msra.mxu0 0.0
          %2182 = vmatpush.msra.mxu0 0.0
          %2183 = vmatpush.msra.mxu0 0.0
          %2184 = vmatpush.msra.mxu0 0.0
          %2185 = vmatpush.msra.mxu0 0.0
          %2186 = vmatpush.msra.mxu0 0.0
          %2187 = vmatpush.msra.mxu0 0.0
          %2188 = vmatpush.msra.mxu0 0.0
          %2189 = vmatpush.msra.mxu0 %v2171
          %2190 = vmatpush.msra.mxu0 %v2170
          %2191 = vmatpush.msra.mxu0 %v2169
          %2192 = vmatpush.msra.mxu0 %v2168
          %2193 = vmatmul.f32.gmra.mxu0 %v2175
          %v2194 = vpop.f32.mrf.mxu0
          %v2195 = vadd.f32 0.0, %v2194
          %2196 = vdwg.mxu0
          %v2197 = vadd.f32 %v2167, %v2195
          %v2198 = vxor.u32 %v2197, 2147483648
          %v2199 = vmul.f32 %v2198, 1.442695
          %v2200 = vpow.pop %v2199
          %v2201 = vadd.f32 %v2200, 1.0
          %v2202 = vrcp.pop %v2201
          %v2203 = vmul.f32 %v2201, %v2202
          %v2204 = vsub.f32 1.0, %v2203
          %v2205 = vmul.f32 %v2202, %v2204
          %v2206 = vadd.f32 %v2202, %v2205
          %vm2207 = vweird.f32 %v2201
          %vm2208 = vweird.f32 %v2202
          %vm2209 = vmor %vm2207, %vm2208
          %v2210 = vsel %vm2209, %v2202, %v2206
          %v2211 = vand.u32 2147483647, %v2201
          %vm2212 = vcmp.eq.f32.partialorder %v2211, 8.507059e+37
          %v2213 = vand.u32 %v2201, 2147483648
          %v2214 = vor.u32 1.1754944e-38, %v2213
          %v2215 = vsel %vm2212, %v2214, %v2210
          %v2216 = vmul.f32 1.0, %v2215
          %v2217 = vtanh.pop %v2197
          %v2218 = vmul.f32 %v2216, %v2165
          %2220 = vrot.lane.b32.xlu0 %v2217, 64
          %v2221 = vpop.permute.xlu0 %2220
          %v2223 = vmul.f32 %v2216, %v2221
          %2225 = vrot.lane.b32.xlu0 %v2223, 32
          %v2226 = vpop.permute.xlu0 %2225
          %v2228 = vadd.f32 %v2218, %v2226
          %v2229 = vtanh.pop %v2228
          %2231 = vrot.lane.b32.xlu0 %v2229, 64
          %v2232 = vpop.permute.xlu0 %2231
          %v2234 = vmul.f32 %v2216, %v2232
          %2236 = vrot.lane.b32.xlu0 %v2234, 32
          %v2237 = vpop.permute.xlu0 %2236
          %s2239 = scalar_lea.vmem [#allocation3], %s2159
          %vm2240 = vcmask 253952
          %2241 = vst.msk [vmem:[%s2239] sm:$0x1] %vm2240, %v2237
        $region205: #{eeg_to_meg_unet_forward.1} parent=139 // loop_footer
          %s2163 = sadd.s32 1, %s2159
        $region206: #{eeg_to_meg_unet_forward.1} parent=139 // loop_footer_branch
          %2158 = sbr.rel target = $region202
        $region207: #{eeg_to_meg_unet_forward.1} parent=139 // loop_exit
          _
        %v2242 = vld [vmem:[#allocation3] sm:$0xf]
        %v2243 = vld [vmem:[%s25] sm:$0xff]
        %v2244 = vld [vmem:[%s25 + $0x8] sm:$0xff]
        %v2245 = vld [vmem:[%s25 + $0x10] sm:$0xff]
        %v2246 = vld [vmem:[%s25 + $0x18] sm:$0xff]
        %v2247 = vld [vmem:[%s27] sm:$0x1]
        %v2249 = vperm.slane %v2247, 0
        %v2252 = vsel %vm1498, %v2242, 0
        %2254 = vmatpush.msra.mxu0 0.0
        %2255 = vmatpush.msra.mxu0 0.0
        %2256 = vmatpush.msra.mxu0 0.0
        %2257 = vmatpush.msra.mxu0 0.0
        %2258 = vmatpush.msra.mxu0 0.0
        %2259 = vmatpush.msra.mxu0 0.0
        %2260 = vmatpush.msra.mxu0 0.0
        %2261 = vmatpush.msra.mxu0 0.0
        %2262 = vmatpush.msra.mxu0 0.0
        %2263 = vmatpush.msra.mxu0 0.0
        %2264 = vmatpush.msra.mxu0 0.0
        %2265 = vmatpush.msra.mxu0 0.0
        %2266 = vmatpush.msra.mxu0 %v2246
        %2267 = vmatpush.msra.mxu0 %v2245
        %2268 = vmatpush.msra.mxu0 %v2244
        %2269 = vmatpush.msra.mxu0 %v2243
        %2270 = vmatmul.f32.gmra.mxu0 %v2252
        %v2271 = vpop.f32.mrf.mxu0
        %v2272 = vadd.f32 %v2249, %v2271
        %2273 = vdwg.mxu0
        %v2274 = vld [vmem:[#allocation11] sm:$0xff]
        %v2275 = vld [vmem:[#allocation11 + $0x8] sm:$0xff]
        %v2276 = vld [vmem:[#allocation11 + $0x10] sm:$0xff]
        %v2277 = vld [vmem:[#allocation11 + $0x18] sm:$0xff]
        %v2278 = vld [vmem:[#allocation11 + $0x20] sm:$0xff]
        %v2279 = vld [vmem:[#allocation11 + $0x28] sm:$0xff]
        %v2280 = vld [vmem:[#allocation11 + $0x30] sm:$0xff]
        %v2281 = vld [vmem:[#allocation11 + $0x38] sm:$0xff]
        %v2282 = vld [vmem:[%s31] sm:$0x1]
        %v2284 = vperm.slane %v2282, 0
        %v2287 = vsel %vm1975, %v2272, 0
        %2289 = vmatpush.msra.mxu0 0.0
        %2290 = vmatpush.msra.mxu0 0.0
        %2291 = vmatpush.msra.mxu0 0.0
        %2292 = vmatpush.msra.mxu0 0.0
        %2293 = vmatpush.msra.mxu0 0.0
        %2294 = vmatpush.msra.mxu0 0.0
        %2295 = vmatpush.msra.mxu0 0.0
        %2296 = vmatpush.msra.mxu0 0.0
        %2297 = vmatpush.msra.mxu0 %v2281
        %2298 = vmatpush.msra.mxu0 %v2280
        %2299 = vmatpush.msra.mxu0 %v2279
        %2300 = vmatpush.msra.mxu0 %v2278
        %2301 = vmatpush.msra.mxu0 %v2277
        %2302 = vmatpush.msra.mxu0 %v2276
        %2303 = vmatpush.msra.mxu0 %v2275
        %2304 = vmatpush.msra.mxu0 %v2274
        %2305 = vmatmul.f32.gmra.mxu0 %v2287
        %v2306 = vpop.f32.mrf.mxu0
        %v2307 = vadd.f32 %v2284, %v2306
        %2308 = vdwg.mxu0
        %s2309 = scalar_lea.vmem [#allocation11], 64
        %v2310 = vld [vmem:[%s2309] sm:$0xff]
        %v2311 = vld [vmem:[%s2309 + $0x8] sm:$0xff]
        %v2312 = vld [vmem:[%s2309 + $0x10] sm:$0xff]
        %v2313 = vld [vmem:[%s2309 + $0x18] sm:$0xff]
        %v2314 = vld [vmem:[%s2309 + $0x20] sm:$0xff]
        %v2315 = vld [vmem:[%s2309 + $0x28] sm:$0xff]
        %v2316 = vld [vmem:[%s2309 + $0x30] sm:$0xff]
        %v2317 = vld [vmem:[%s2309 + $0x38] sm:$0xff]
        %2318 = vmatpush.msra.mxu0 0.0
        %2319 = vmatpush.msra.mxu0 0.0
        %2320 = vmatpush.msra.mxu0 0.0
        %2321 = vmatpush.msra.mxu0 0.0
        %2322 = vmatpush.msra.mxu0 0.0
        %2323 = vmatpush.msra.mxu0 0.0
        %2324 = vmatpush.msra.mxu0 0.0
        %2325 = vmatpush.msra.mxu0 0.0
        %2326 = vmatpush.msra.mxu0 %v2317
        %2327 = vmatpush.msra.mxu0 %v2316
        %2328 = vmatpush.msra.mxu0 %v2315
        %2329 = vmatpush.msra.mxu0 %v2314
        %2330 = vmatpush.msra.mxu0 %v2313
        %2331 = vmatpush.msra.mxu0 %v2312
        %2332 = vmatpush.msra.mxu0 %v2311
        %2333 = vmatpush.msra.mxu0 %v2310
        %2334 = vmatmul.f32.gmra.mxu0 %v2287
        %v2335 = vpop.f32.mrf.mxu0
        %v2336 = vadd.f32 %v2284, %v2335
        %2337 = vdwg.mxu0
        %v2338 = vld [vmem:[#allocation15] sm:$0x1]
        %v2339 = vld [vmem:[#allocation12] sm:$0xff]
        %v2340 = vld [vmem:[#allocation12 + $0x8] sm:$0xff]
        %v2341 = vld [vmem:[#allocation12 + $0x10] sm:$0xff]
        %v2342 = vld [vmem:[#allocation12 + $0x18] sm:$0xff]
        %v2343 = vld [vmem:[#allocation12 + $0x20] sm:$0xff]
        %v2344 = vld [vmem:[#allocation12 + $0x28] sm:$0xff]
        %v2345 = vld [vmem:[#allocation12 + $0x30] sm:$0xff]
        %v2346 = vld [vmem:[#allocation12 + $0x38] sm:$0xff]
        %s2347 = scalar_lea.vmem [#allocation12], 64
        %v2348 = vld [vmem:[%s2347] sm:$0xff]
        %v2349 = vld [vmem:[%s2347 + $0x8] sm:$0xff]
        %v2350 = vld [vmem:[%s2347 + $0x10] sm:$0xff]
        %v2351 = vld [vmem:[%s2347 + $0x18] sm:$0xff]
        %v2352 = vld [vmem:[%s2347 + $0x20] sm:$0xff]
        %v2353 = vld [vmem:[%s2347 + $0x28] sm:$0xff]
        %v2354 = vld [vmem:[%s2347 + $0x30] sm:$0xff]
        %v2355 = vld [vmem:[%s2347 + $0x38] sm:$0xff]
        %s2356 = scalar_lea.vmem [#allocation12], 128
        %v2357 = vld [vmem:[%s2356] sm:$0xff]
        %v2358 = vld [vmem:[%s2356 + $0x8] sm:$0xff]
        %v2359 = vld [vmem:[%s2356 + $0x10] sm:$0xff]
        %v2360 = vld [vmem:[%s2356 + $0x18] sm:$0xff]
        %v2361 = vld [vmem:[%s2356 + $0x20] sm:$0xff]
        %v2362 = vld [vmem:[%s2356 + $0x28] sm:$0xff]
        %v2363 = vld [vmem:[%s2356 + $0x30] sm:$0xff]
        %v2364 = vld [vmem:[%s2356 + $0x38] sm:$0xff]
        %v2366 = vrot.slane %v2336, 7
        %v2368 = vsel %vm1187, 0.0, %v2366
        %v2370 = vsel %vm1975, %v2368, 0
        %2372 = vmatpush.msra.mxu0 0.0
        %2373 = vmatpush.msra.mxu0 0.0
        %2374 = vmatpush.msra.mxu0 0.0
        %2375 = vmatpush.msra.mxu0 0.0
        %2376 = vmatpush.msra.mxu0 0.0
        %2377 = vmatpush.msra.mxu0 0.0
        %2378 = vmatpush.msra.mxu0 0.0
        %2379 = vmatpush.msra.mxu0 0.0
        %2380 = vmatpush.msra.mxu0 %v2346
        %2381 = vmatpush.msra.mxu0 %v2345
        %2382 = vmatpush.msra.mxu0 %v2344
        %2383 = vmatpush.msra.mxu0 %v2343
        %2384 = vmatpush.msra.mxu0 %v2342
        %2385 = vmatpush.msra.mxu0 %v2341
        %2386 = vmatpush.msra.mxu0 %v2340
        %2387 = vmatpush.msra.mxu0 %v2339
        %2388 = vmatmul.f32.gmra.mxu0 %v2370
        %v2389 = vpop.f32.mrf.mxu0
        %v2390 = vadd.f32 0.0, %v2389
        %2391 = vdwg.mxu0
        %v2393 = vperm.slane %v2338, 0
        %v2395 = vadd.f32 %v2393, %v2390
        %v2397 = vsel %vm1975, %v2307, 0
        %2399 = vmatpush.msra.mxu0 0.0
        %2400 = vmatpush.msra.mxu0 0.0
        %2401 = vmatpush.msra.mxu0 0.0
        %2402 = vmatpush.msra.mxu0 0.0
        %2403 = vmatpush.msra.mxu0 0.0
        %2404 = vmatpush.msra.mxu0 0.0
        %2405 = vmatpush.msra.mxu0 0.0
        %2406 = vmatpush.msra.mxu0 0.0
        %2407 = vmatpush.msra.mxu0 %v2355
        %2408 = vmatpush.msra.mxu0 %v2354
        %2409 = vmatpush.msra.mxu0 %v2353
        %2410 = vmatpush.msra.mxu0 %v2352
        %2411 = vmatpush.msra.mxu0 %v2351
        %2412 = vmatpush.msra.mxu0 %v2350
        %2413 = vmatpush.msra.mxu0 %v2349
        %2414 = vmatpush.msra.mxu0 %v2348
        %2415 = vmatmul.f32.gmra.mxu0 %v2397
        %v2416 = vpop.f32.mrf.mxu0
        %v2417 = vadd.f32 0.0, %v2416
        %2418 = vdwg.mxu0
        %v2419 = vadd.f32 %v2395, %v2417
        %v2420 = vsel %vm1975, %v2336, 0
        %2422 = vmatpush.msra.mxu0 0.0
        %2423 = vmatpush.msra.mxu0 0.0
        %2424 = vmatpush.msra.mxu0 0.0
        %2425 = vmatpush.msra.mxu0 0.0
        %2426 = vmatpush.msra.mxu0 0.0
        %2427 = vmatpush.msra.mxu0 0.0
        %2428 = vmatpush.msra.mxu0 0.0
        %2429 = vmatpush.msra.mxu0 0.0
        %2430 = vmatpush.msra.mxu0 %v2364
        %2431 = vmatpush.msra.mxu0 %v2363
        %2432 = vmatpush.msra.mxu0 %v2362
        %2433 = vmatpush.msra.mxu0 %v2361
        %2434 = vmatpush.msra.mxu0 %v2360
        %2435 = vmatpush.msra.mxu0 %v2359
        %2436 = vmatpush.msra.mxu0 %v2358
        %2437 = vmatpush.msra.mxu0 %v2357
        %2438 = vmatmul.f32.gmra.mxu0 %v2420
        %v2439 = vpop.f32.mrf.mxu0
        %v2440 = vadd.f32 0.0, %v2439
        %2441 = vdwg.mxu0
        %v2442 = vadd.f32 %v2419, %v2440
        %2443 = vmatpush.msra.mxu0 0.0
        %2444 = vmatpush.msra.mxu0 0.0
        %2445 = vmatpush.msra.mxu0 0.0
        %2446 = vmatpush.msra.mxu0 0.0
        %2447 = vmatpush.msra.mxu0 0.0
        %2448 = vmatpush.msra.mxu0 0.0
        %2449 = vmatpush.msra.mxu0 0.0
        %2450 = vmatpush.msra.mxu0 0.0
        %2451 = vmatpush.msra.mxu0 %v2346
        %2452 = vmatpush.msra.mxu0 %v2345
        %2453 = vmatpush.msra.mxu0 %v2344
        %2454 = vmatpush.msra.mxu0 %v2343
        %2455 = vmatpush.msra.mxu0 %v2342
        %2456 = vmatpush.msra.mxu0 %v2341
        %2457 = vmatpush.msra.mxu0 %v2340
        %2458 = vmatpush.msra.mxu0 %v2339
        %2459 = vmatmul.f32.gmra.mxu0 %v2397
        %v2460 = vpop.f32.mrf.mxu0
        %v2461 = vadd.f32 0.0, %v2460
        %2462 = vdwg.mxu0
        %v2463 = vadd.f32 %v2393, %v2461
        %2464 = vmatpush.msra.mxu0 0.0
        %2465 = vmatpush.msra.mxu0 0.0
        %2466 = vmatpush.msra.mxu0 0.0
        %2467 = vmatpush.msra.mxu0 0.0
        %2468 = vmatpush.msra.mxu0 0.0
        %2469 = vmatpush.msra.mxu0 0.0
        %2470 = vmatpush.msra.mxu0 0.0
        %2471 = vmatpush.msra.mxu0 0.0
        %2472 = vmatpush.msra.mxu0 %v2355
        %2473 = vmatpush.msra.mxu0 %v2354
        %2474 = vmatpush.msra.mxu0 %v2353
        %2475 = vmatpush.msra.mxu0 %v2352
        %2476 = vmatpush.msra.mxu0 %v2351
        %2477 = vmatpush.msra.mxu0 %v2350
        %2478 = vmatpush.msra.mxu0 %v2349
        %2479 = vmatpush.msra.mxu0 %v2348
        %2480 = vmatmul.f32.gmra.mxu0 %v2420
        %v2481 = vpop.f32.mrf.mxu0
        %v2482 = vadd.f32 0.0, %v2481
        %2483 = vdwg.mxu0
        %v2484 = vadd.f32 %v2463, %v2482
        %v2485 = vrot.slane %v2307, 1
        %v2487 = vsel %vm1193, %v2485, 0.0
        %v2489 = vsel %vm1975, %v2487, 0
        %2491 = vmatpush.msra.mxu0 0.0
        %2492 = vmatpush.msra.mxu0 0.0
        %2493 = vmatpush.msra.mxu0 0.0
        %2494 = vmatpush.msra.mxu0 0.0
        %2495 = vmatpush.msra.mxu0 0.0
        %2496 = vmatpush.msra.mxu0 0.0
        %2497 = vmatpush.msra.mxu0 0.0
        %2498 = vmatpush.msra.mxu0 0.0
        %2499 = vmatpush.msra.mxu0 %v2364
        %2500 = vmatpush.msra.mxu0 %v2363
        %2501 = vmatpush.msra.mxu0 %v2362
        %2502 = vmatpush.msra.mxu0 %v2361
        %2503 = vmatpush.msra.mxu0 %v2360
        %2504 = vmatpush.msra.mxu0 %v2359
        %2505 = vmatpush.msra.mxu0 %v2358
        %2506 = vmatpush.msra.mxu0 %v2357
        %2507 = vmatmul.f32.gmra.mxu0 %v2489
        %v2508 = vpop.f32.mrf.mxu0
        %v2509 = vadd.f32 0.0, %v2508
        %2510 = vdwg.mxu0
        %v2511 = vadd.f32 %v2484, %v2509
        %v2512 = vld [vmem:[#allocation14] sm:$0xff]
        %v2513 = vld [vmem:[#allocation14 + $0x8] sm:$0xff]
        %v2514 = vld [vmem:[#allocation14 + $0x10] sm:$0xff]
        %v2515 = vld [vmem:[#allocation14 + $0x18] sm:$0xff]
        %v2516 = vld [vmem:[#allocation14 + $0x20] sm:$0xff]
        %v2517 = vld [vmem:[#allocation14 + $0x28] sm:$0xff]
        %v2518 = vld [vmem:[#allocation14 + $0x30] sm:$0xff]
        %v2519 = vld [vmem:[#allocation14 + $0x38] sm:$0xff]
        %s2520 = scalar_lea.vmem [#allocation14], 64
        %v2521 = vld [vmem:[%s2520] sm:$0xff]
        %v2522 = vld [vmem:[%s2520 + $0x8] sm:$0xff]
        %v2523 = vld [vmem:[%s2520 + $0x10] sm:$0xff]
        %v2524 = vld [vmem:[%s2520 + $0x18] sm:$0xff]
        %v2525 = vld [vmem:[%s2520 + $0x20] sm:$0xff]
        %v2526 = vld [vmem:[%s2520 + $0x28] sm:$0xff]
        %v2527 = vld [vmem:[%s2520 + $0x30] sm:$0xff]
        %v2528 = vld [vmem:[%s2520 + $0x38] sm:$0xff]
        %s2529 = scalar_lea.vmem [#allocation14], 128
        %v2530 = vld [vmem:[%s2529] sm:$0xff]
        %v2531 = vld [vmem:[%s2529 + $0x8] sm:$0xff]
        %v2532 = vld [vmem:[%s2529 + $0x10] sm:$0xff]
        %v2533 = vld [vmem:[%s2529 + $0x18] sm:$0xff]
        %v2534 = vld [vmem:[%s2529 + $0x20] sm:$0xff]
        %v2535 = vld [vmem:[%s2529 + $0x28] sm:$0xff]
        %v2536 = vld [vmem:[%s2529 + $0x30] sm:$0xff]
        %v2537 = vld [vmem:[%s2529 + $0x38] sm:$0xff]
        %v2539 = vrot.slane %v2120, 7
        %v2541 = vsel %vm1187, 0.0, %v2539
        %v2543 = vsel %vm1975, %v2541, 0
        %2545 = vmatpush.msra.mxu0 0.0
        %2546 = vmatpush.msra.mxu0 0.0
        %2547 = vmatpush.msra.mxu0 0.0
        %2548 = vmatpush.msra.mxu0 0.0
        %2549 = vmatpush.msra.mxu0 0.0
        %2550 = vmatpush.msra.mxu0 0.0
        %2551 = vmatpush.msra.mxu0 0.0
        %2552 = vmatpush.msra.mxu0 0.0
        %2553 = vmatpush.msra.mxu0 %v2519
        %2554 = vmatpush.msra.mxu0 %v2518
        %2555 = vmatpush.msra.mxu0 %v2517
        %2556 = vmatpush.msra.mxu0 %v2516
        %2557 = vmatpush.msra.mxu0 %v2515
        %2558 = vmatpush.msra.mxu0 %v2514
        %2559 = vmatpush.msra.mxu0 %v2513
        %2560 = vmatpush.msra.mxu0 %v2512
        %2561 = vmatmul.f32.gmra.mxu0 %v2543
        %v2562 = vpop.f32.mrf.mxu0
        %v2563 = vadd.f32 0.0, %v2562
        %2564 = vdwg.mxu0
        %v2565 = vadd.f32 %v2442, %v2563
        %v2567 = vsel %vm1975, %v2119, 0
        %2569 = vmatpush.msra.mxu0 0.0
        %2570 = vmatpush.msra.mxu0 0.0
        %2571 = vmatpush.msra.mxu0 0.0
        %2572 = vmatpush.msra.mxu0 0.0
        %2573 = vmatpush.msra.mxu0 0.0
        %2574 = vmatpush.msra.mxu0 0.0
        %2575 = vmatpush.msra.mxu0 0.0
        %2576 = vmatpush.msra.mxu0 0.0
        %2577 = vmatpush.msra.mxu0 %v2528
        %2578 = vmatpush.msra.mxu0 %v2527
        %2579 = vmatpush.msra.mxu0 %v2526
        %2580 = vmatpush.msra.mxu0 %v2525
        %2581 = vmatpush.msra.mxu0 %v2524
        %2582 = vmatpush.msra.mxu0 %v2523
        %2583 = vmatpush.msra.mxu0 %v2522
        %2584 = vmatpush.msra.mxu0 %v2521
        %2585 = vmatmul.f32.gmra.mxu0 %v2567
        %v2586 = vpop.f32.mrf.mxu0
        %v2587 = vadd.f32 0.0, %v2586
        %2588 = vdwg.mxu0
        %v2589 = vadd.f32 %v2565, %v2587
        %v2590 = vsel %vm1975, %v2120, 0
        %2592 = vmatpush.msra.mxu0 0.0
        %2593 = vmatpush.msra.mxu0 0.0
        %2594 = vmatpush.msra.mxu0 0.0
        %2595 = vmatpush.msra.mxu0 0.0
        %2596 = vmatpush.msra.mxu0 0.0
        %2597 = vmatpush.msra.mxu0 0.0
        %2598 = vmatpush.msra.mxu0 0.0
        %2599 = vmatpush.msra.mxu0 0.0
        %2600 = vmatpush.msra.mxu0 %v2537
        %2601 = vmatpush.msra.mxu0 %v2536
        %2602 = vmatpush.msra.mxu0 %v2535
        %2603 = vmatpush.msra.mxu0 %v2534
        %2604 = vmatpush.msra.mxu0 %v2533
        %2605 = vmatpush.msra.mxu0 %v2532
        %2606 = vmatpush.msra.mxu0 %v2531
        %2607 = vmatpush.msra.mxu0 %v2530
        %2608 = vmatmul.f32.gmra.mxu0 %v2590
        %v2609 = vpop.f32.mrf.mxu0
        %v2610 = vadd.f32 0.0, %v2609
        %2611 = vdwg.mxu0
        %v2612 = vadd.f32 %v2589, %v2610
        %2613 = vmatpush.msra.mxu0 0.0
        %2614 = vmatpush.msra.mxu0 0.0
        %2615 = vmatpush.msra.mxu0 0.0
        %2616 = vmatpush.msra.mxu0 0.0
        %2617 = vmatpush.msra.mxu0 0.0
        %2618 = vmatpush.msra.mxu0 0.0
        %2619 = vmatpush.msra.mxu0 0.0
        %2620 = vmatpush.msra.mxu0 0.0
        %2621 = vmatpush.msra.mxu0 %v2519
        %2622 = vmatpush.msra.mxu0 %v2518
        %2623 = vmatpush.msra.mxu0 %v2517
        %2624 = vmatpush.msra.mxu0 %v2516
        %2625 = vmatpush.msra.mxu0 %v2515
        %2626 = vmatpush.msra.mxu0 %v2514
        %2627 = vmatpush.msra.mxu0 %v2513
        %2628 = vmatpush.msra.mxu0 %v2512
        %2629 = vmatmul.f32.gmra.mxu0 %v2567
        %v2630 = vpop.f32.mrf.mxu0
        %v2631 = vadd.f32 0.0, %v2630
        %2632 = vdwg.mxu0
        %v2633 = vadd.f32 %v2511, %v2631
        %2634 = vmatpush.msra.mxu0 0.0
        %2635 = vmatpush.msra.mxu0 0.0
        %2636 = vmatpush.msra.mxu0 0.0
        %2637 = vmatpush.msra.mxu0 0.0
        %2638 = vmatpush.msra.mxu0 0.0
        %2639 = vmatpush.msra.mxu0 0.0
        %2640 = vmatpush.msra.mxu0 0.0
        %2641 = vmatpush.msra.mxu0 0.0
        %2642 = vmatpush.msra.mxu0 %v2528
        %2643 = vmatpush.msra.mxu0 %v2527
        %2644 = vmatpush.msra.mxu0 %v2526
        %2645 = vmatpush.msra.mxu0 %v2525
        %2646 = vmatpush.msra.mxu0 %v2524
        %2647 = vmatpush.msra.mxu0 %v2523
        %2648 = vmatpush.msra.mxu0 %v2522
        %2649 = vmatpush.msra.mxu0 %v2521
        %2650 = vmatmul.f32.gmra.mxu0 %v2590
        %v2651 = vpop.f32.mrf.mxu0
        %v2652 = vadd.f32 0.0, %v2651
        %2653 = vdwg.mxu0
        %v2654 = vadd.f32 %v2633, %v2652
        %v2655 = vrot.slane %v2119, 1
        %v2657 = vsel %vm1193, %v2655, 0.0
        %v2659 = vsel %vm1975, %v2657, 0
        %2661 = vmatpush.msra.mxu0 0.0
        %2662 = vmatpush.msra.mxu0 0.0
        %2663 = vmatpush.msra.mxu0 0.0
        %2664 = vmatpush.msra.mxu0 0.0
        %2665 = vmatpush.msra.mxu0 0.0
        %2666 = vmatpush.msra.mxu0 0.0
        %2667 = vmatpush.msra.mxu0 0.0
        %2668 = vmatpush.msra.mxu0 0.0
        %2669 = vmatpush.msra.mxu0 %v2537
        %2670 = vmatpush.msra.mxu0 %v2536
        %2671 = vmatpush.msra.mxu0 %v2535
        %2672 = vmatpush.msra.mxu0 %v2534
        %2673 = vmatpush.msra.mxu0 %v2533
        %2674 = vmatpush.msra.mxu0 %v2532
        %2675 = vmatpush.msra.mxu0 %v2531
        %2676 = vmatpush.msra.mxu0 %v2530
        %2677 = vmatmul.f32.gmra.mxu0 %v2659
        %v2678 = vpop.f32.mrf.mxu0
        %v2679 = vadd.f32 0.0, %v2678
        %2680 = vdwg.mxu0
        %v2681 = vadd.f32 %v2654, %v2679
        %v2682 = vmax.f32 %v2612, 0.0
        %v2683 = vmax.f32 %v2681, 0.0
        %v2684 = vld [vmem:[#allocation18] sm:$0x1]
        %v2685 = vld [vmem:[#allocation17] sm:$0xff]
        %v2686 = vld [vmem:[#allocation17 + $0x8] sm:$0xff]
        %v2687 = vld [vmem:[#allocation17 + $0x10] sm:$0xff]
        %v2688 = vld [vmem:[#allocation17 + $0x18] sm:$0xff]
        %v2689 = vld [vmem:[#allocation17 + $0x20] sm:$0xff]
        %v2690 = vld [vmem:[#allocation17 + $0x28] sm:$0xff]
        %v2691 = vld [vmem:[#allocation17 + $0x30] sm:$0xff]
        %v2692 = vld [vmem:[#allocation17 + $0x38] sm:$0xff]
        %s2693 = scalar_lea.vmem [#allocation17], 64
        %v2694 = vld [vmem:[%s2693] sm:$0xff]
        %v2695 = vld [vmem:[%s2693 + $0x8] sm:$0xff]
        %v2696 = vld [vmem:[%s2693 + $0x10] sm:$0xff]
        %v2697 = vld [vmem:[%s2693 + $0x18] sm:$0xff]
        %v2698 = vld [vmem:[%s2693 + $0x20] sm:$0xff]
        %v2699 = vld [vmem:[%s2693 + $0x28] sm:$0xff]
        %v2700 = vld [vmem:[%s2693 + $0x30] sm:$0xff]
        %v2701 = vld [vmem:[%s2693 + $0x38] sm:$0xff]
        %s2702 = scalar_lea.vmem [#allocation17], 128
        %v2703 = vld [vmem:[%s2702] sm:$0xff]
        %v2704 = vld [vmem:[%s2702 + $0x8] sm:$0xff]
        %v2705 = vld [vmem:[%s2702 + $0x10] sm:$0xff]
        %v2706 = vld [vmem:[%s2702 + $0x18] sm:$0xff]
        %v2707 = vld [vmem:[%s2702 + $0x20] sm:$0xff]
        %v2708 = vld [vmem:[%s2702 + $0x28] sm:$0xff]
        %v2709 = vld [vmem:[%s2702 + $0x30] sm:$0xff]
        %v2710 = vld [vmem:[%s2702 + $0x38] sm:$0xff]
        %v2712 = vrot.slane %v2683, 7
        %v2714 = vsel %vm1187, 0.0, %v2712
        %v2716 = vsel %vm1975, %v2714, 0
        %2718 = vmatpush.msra.mxu0 0.0
        %2719 = vmatpush.msra.mxu0 0.0
        %2720 = vmatpush.msra.mxu0 0.0
        %2721 = vmatpush.msra.mxu0 0.0
        %2722 = vmatpush.msra.mxu0 0.0
        %2723 = vmatpush.msra.mxu0 0.0
        %2724 = vmatpush.msra.mxu0 0.0
        %2725 = vmatpush.msra.mxu0 0.0
        %2726 = vmatpush.msra.mxu0 %v2692
        %2727 = vmatpush.msra.mxu0 %v2691
        %2728 = vmatpush.msra.mxu0 %v2690
        %2729 = vmatpush.msra.mxu0 %v2689
        %2730 = vmatpush.msra.mxu0 %v2688
        %2731 = vmatpush.msra.mxu0 %v2687
        %2732 = vmatpush.msra.mxu0 %v2686
        %2733 = vmatpush.msra.mxu0 %v2685
        %2734 = vmatmul.f32.gmra.mxu0 %v2716
        %v2735 = vpop.f32.mrf.mxu0
        %v2736 = vadd.f32 0.0, %v2735
        %2737 = vdwg.mxu0
        %v2739 = vperm.slane %v2684, 0
        %v2741 = vadd.f32 %v2739, %v2736
        %v2743 = vsel %vm1975, %v2682, 0
        %2745 = vmatpush.msra.mxu0 0.0
        %2746 = vmatpush.msra.mxu0 0.0
        %2747 = vmatpush.msra.mxu0 0.0
        %2748 = vmatpush.msra.mxu0 0.0
        %2749 = vmatpush.msra.mxu0 0.0
        %2750 = vmatpush.msra.mxu0 0.0
        %2751 = vmatpush.msra.mxu0 0.0
        %2752 = vmatpush.msra.mxu0 0.0
        %2753 = vmatpush.msra.mxu0 %v2701
        %2754 = vmatpush.msra.mxu0 %v2700
        %2755 = vmatpush.msra.mxu0 %v2699
        %2756 = vmatpush.msra.mxu0 %v2698
        %2757 = vmatpush.msra.mxu0 %v2697
        %2758 = vmatpush.msra.mxu0 %v2696
        %2759 = vmatpush.msra.mxu0 %v2695
        %2760 = vmatpush.msra.mxu0 %v2694
        %2761 = vmatmul.f32.gmra.mxu0 %v2743
        %v2762 = vpop.f32.mrf.mxu0
        %v2763 = vadd.f32 0.0, %v2762
        %2764 = vdwg.mxu0
        %v2765 = vadd.f32 %v2741, %v2763
        %v2766 = vsel %vm1975, %v2683, 0
        %2768 = vmatpush.msra.mxu0 0.0
        %2769 = vmatpush.msra.mxu0 0.0
        %2770 = vmatpush.msra.mxu0 0.0
        %2771 = vmatpush.msra.mxu0 0.0
        %2772 = vmatpush.msra.mxu0 0.0
        %2773 = vmatpush.msra.mxu0 0.0
        %2774 = vmatpush.msra.mxu0 0.0
        %2775 = vmatpush.msra.mxu0 0.0
        %2776 = vmatpush.msra.mxu0 %v2710
        %2777 = vmatpush.msra.mxu0 %v2709
        %2778 = vmatpush.msra.mxu0 %v2708
        %2779 = vmatpush.msra.mxu0 %v2707
        %2780 = vmatpush.msra.mxu0 %v2706
        %2781 = vmatpush.msra.mxu0 %v2705
        %2782 = vmatpush.msra.mxu0 %v2704
        %2783 = vmatpush.msra.mxu0 %v2703
        %2784 = vmatmul.f32.gmra.mxu0 %v2766
        %v2785 = vpop.f32.mrf.mxu0
        %v2786 = vadd.f32 0.0, %v2785
        %2787 = vdwg.mxu0
        %v2788 = vadd.f32 %v2765, %v2786
        %2789 = vmatpush.msra.mxu0 0.0
        %2790 = vmatpush.msra.mxu0 0.0
        %2791 = vmatpush.msra.mxu0 0.0
        %2792 = vmatpush.msra.mxu0 0.0
        %2793 = vmatpush.msra.mxu0 0.0
        %2794 = vmatpush.msra.mxu0 0.0
        %2795 = vmatpush.msra.mxu0 0.0
        %2796 = vmatpush.msra.mxu0 0.0
        %2797 = vmatpush.msra.mxu0 %v2692
        %2798 = vmatpush.msra.mxu0 %v2691
        %2799 = vmatpush.msra.mxu0 %v2690
        %2800 = vmatpush.msra.mxu0 %v2689
        %2801 = vmatpush.msra.mxu0 %v2688
        %2802 = vmatpush.msra.mxu0 %v2687
        %2803 = vmatpush.msra.mxu0 %v2686
        %2804 = vmatpush.msra.mxu0 %v2685
        %2805 = vmatmul.f32.gmra.mxu0 %v2743
        %v2806 = vpop.f32.mrf.mxu0
        %v2807 = vadd.f32 0.0, %v2806
        %2808 = vdwg.mxu0
        %v2809 = vadd.f32 %v2739, %v2807
        %2810 = vmatpush.msra.mxu0 0.0
        %2811 = vmatpush.msra.mxu0 0.0
        %2812 = vmatpush.msra.mxu0 0.0
        %2813 = vmatpush.msra.mxu0 0.0
        %2814 = vmatpush.msra.mxu0 0.0
        %2815 = vmatpush.msra.mxu0 0.0
        %2816 = vmatpush.msra.mxu0 0.0
        %2817 = vmatpush.msra.mxu0 0.0
        %2818 = vmatpush.msra.mxu0 %v2701
        %2819 = vmatpush.msra.mxu0 %v2700
        %2820 = vmatpush.msra.mxu0 %v2699
        %2821 = vmatpush.msra.mxu0 %v2698
        %2822 = vmatpush.msra.mxu0 %v2697
        %2823 = vmatpush.msra.mxu0 %v2696
        %2824 = vmatpush.msra.mxu0 %v2695
        %2825 = vmatpush.msra.mxu0 %v2694
        %2826 = vmatmul.f32.gmra.mxu0 %v2766
        %v2827 = vpop.f32.mrf.mxu0
        %v2828 = vadd.f32 0.0, %v2827
        %2829 = vdwg.mxu0
        %v2830 = vadd.f32 %v2809, %v2828
        %v2831 = vrot.slane %v2682, 1
        %v2833 = vsel %vm1193, %v2831, 0.0
        %v2835 = vsel %vm1975, %v2833, 0
        %2837 = vmatpush.msra.mxu0 0.0
        %2838 = vmatpush.msra.mxu0 0.0
        %2839 = vmatpush.msra.mxu0 0.0
        %2840 = vmatpush.msra.mxu0 0.0
        %2841 = vmatpush.msra.mxu0 0.0
        %2842 = vmatpush.msra.mxu0 0.0
        %2843 = vmatpush.msra.mxu0 0.0
        %2844 = vmatpush.msra.mxu0 0.0
        %2845 = vmatpush.msra.mxu0 %v2710
        %2846 = vmatpush.msra.mxu0 %v2709
        %2847 = vmatpush.msra.mxu0 %v2708
        %2848 = vmatpush.msra.mxu0 %v2707
        %2849 = vmatpush.msra.mxu0 %v2706
        %2850 = vmatpush.msra.mxu0 %v2705
        %2851 = vmatpush.msra.mxu0 %v2704
        %2852 = vmatpush.msra.mxu0 %v2703
        %2853 = vmatmul.f32.gmra.mxu0 %v2835
        %v2854 = vpop.f32.mrf.mxu0
        %v2855 = vadd.f32 0.0, %v2854
        %2856 = vdwg.mxu0
        %v2857 = vadd.f32 %v2830, %v2855
        %v2858 = vmax.f32 %v2788, 0.0
        %v2859 = vmax.f32 %v2857, 0.0
        %v2860 = vld [vmem:[%s43] sm:$0xff]
        %v2861 = vld [vmem:[%s43 + $0x8] sm:$0xff]
        %v2862 = vld [vmem:[%s43 + $0x10] sm:$0xff]
        %v2863 = vld [vmem:[%s43 + $0x18] sm:$0xff]
        %v2864 = vld [vmem:[%s43 + $0x20] sm:$0xff]
        %v2865 = vld [vmem:[%s43 + $0x28] sm:$0xff]
        %v2866 = vld [vmem:[%s43 + $0x30] sm:$0xff]
        %v2867 = vld [vmem:[%s43 + $0x38] sm:$0xff]
        %v2868 = vld [vmem:[%s45] sm:$0x1]
        %v2870 = vperm.slane %v2868, 0
        %v2873 = vsel %vm1975, %v2858, 0
        %2875 = vmatpush.msra.mxu0 0.0
        %2876 = vmatpush.msra.mxu0 0.0
        %2877 = vmatpush.msra.mxu0 0.0
        %2878 = vmatpush.msra.mxu0 0.0
        %2879 = vmatpush.msra.mxu0 0.0
        %2880 = vmatpush.msra.mxu0 0.0
        %2881 = vmatpush.msra.mxu0 0.0
        %2882 = vmatpush.msra.mxu0 0.0
        %2883 = vmatpush.msra.mxu0 %v2867
        %2884 = vmatpush.msra.mxu0 %v2866
        %2885 = vmatpush.msra.mxu0 %v2865
        %2886 = vmatpush.msra.mxu0 %v2864
        %2887 = vmatpush.msra.mxu0 %v2863
        %2888 = vmatpush.msra.mxu0 %v2862
        %2889 = vmatpush.msra.mxu0 %v2861
        %2890 = vmatpush.msra.mxu0 %v2860
        %2891 = vmatmul.f32.gmra.mxu0 %v2873
        %v2892 = vpop.f32.mrf.mxu0
        %v2893 = vadd.f32 %v2870, %v2892
        %2894 = vdwg.mxu0
        %s2895 = scalar_lea.vmem %s43, 64
        %v2896 = vld [vmem:[%s2895] sm:$0xff]
        %v2897 = vld [vmem:[%s2895 + $0x8] sm:$0xff]
        %v2898 = vld [vmem:[%s2895 + $0x10] sm:$0xff]
        %v2899 = vld [vmem:[%s2895 + $0x18] sm:$0xff]
        %v2900 = vld [vmem:[%s2895 + $0x20] sm:$0xff]
        %v2901 = vld [vmem:[%s2895 + $0x28] sm:$0xff]
        %v2902 = vld [vmem:[%s2895 + $0x30] sm:$0xff]
        %v2903 = vld [vmem:[%s2895 + $0x38] sm:$0xff]
        %2904 = vmatpush.msra.mxu0 0.0
        %2905 = vmatpush.msra.mxu0 0.0
        %2906 = vmatpush.msra.mxu0 0.0
        %2907 = vmatpush.msra.mxu0 0.0
        %2908 = vmatpush.msra.mxu0 0.0
        %2909 = vmatpush.msra.mxu0 0.0
        %2910 = vmatpush.msra.mxu0 0.0
        %2911 = vmatpush.msra.mxu0 0.0
        %2912 = vmatpush.msra.mxu0 %v2903
        %2913 = vmatpush.msra.mxu0 %v2902
        %2914 = vmatpush.msra.mxu0 %v2901
        %2915 = vmatpush.msra.mxu0 %v2900
        %2916 = vmatpush.msra.mxu0 %v2899
        %2917 = vmatpush.msra.mxu0 %v2898
        %2918 = vmatpush.msra.mxu0 %v2897
        %2919 = vmatpush.msra.mxu0 %v2896
        %2920 = vmatmul.f32.gmra.mxu0 %v2873
        %v2921 = vpop.f32.mrf.mxu0
        %v2922 = vadd.f32 %v2870, %v2921
        %2923 = vdwg.mxu0
        %v2925 = vsel %vm1975, %v2859, 0
        %2927 = vmatpush.msra.mxu0 0.0
        %2928 = vmatpush.msra.mxu0 0.0
        %2929 = vmatpush.msra.mxu0 0.0
        %2930 = vmatpush.msra.mxu0 0.0
        %2931 = vmatpush.msra.mxu0 0.0
        %2932 = vmatpush.msra.mxu0 0.0
        %2933 = vmatpush.msra.mxu0 0.0
        %2934 = vmatpush.msra.mxu0 0.0
        %2935 = vmatpush.msra.mxu0 %v2867
        %2936 = vmatpush.msra.mxu0 %v2866
        %2937 = vmatpush.msra.mxu0 %v2865
        %2938 = vmatpush.msra.mxu0 %v2864
        %2939 = vmatpush.msra.mxu0 %v2863
        %2940 = vmatpush.msra.mxu0 %v2862
        %2941 = vmatpush.msra.mxu0 %v2861
        %2942 = vmatpush.msra.mxu0 %v2860
        %2943 = vmatmul.f32.gmra.mxu0 %v2925
        %v2944 = vpop.f32.mrf.mxu0
        %v2945 = vadd.f32 %v2870, %v2944
        %2946 = vdwg.mxu0
        %2947 = vmatpush.msra.mxu0 0.0
        %2948 = vmatpush.msra.mxu0 0.0
        %2949 = vmatpush.msra.mxu0 0.0
        %2950 = vmatpush.msra.mxu0 0.0
        %2951 = vmatpush.msra.mxu0 0.0
        %2952 = vmatpush.msra.mxu0 0.0
        %2953 = vmatpush.msra.mxu0 0.0
        %2954 = vmatpush.msra.mxu0 0.0
        %2955 = vmatpush.msra.mxu0 %v2903
        %2956 = vmatpush.msra.mxu0 %v2902
        %2957 = vmatpush.msra.mxu0 %v2901
        %2958 = vmatpush.msra.mxu0 %v2900
        %2959 = vmatpush.msra.mxu0 %v2899
        %2960 = vmatpush.msra.mxu0 %v2898
        %2961 = vmatpush.msra.mxu0 %v2897
        %2962 = vmatpush.msra.mxu0 %v2896
        %2963 = vmatmul.f32.gmra.mxu0 %v2925
        %v2964 = vpop.f32.mrf.mxu0
        %v2965 = vadd.f32 %v2870, %v2964
        %2966 = vdwg.mxu0
        %v2967 = vld [vmem:[#allocation23] sm:$0x1]
        %v2968 = vld [vmem:[#allocation20] sm:$0xff]
        %v2969 = vld [vmem:[#allocation20 + $0x8] sm:$0xff]
        %v2970 = vld [vmem:[#allocation20 + $0x10] sm:$0xff]
        %v2971 = vld [vmem:[#allocation20 + $0x18] sm:$0xff]
        %s2972 = scalar_lea.vmem [#allocation20], 32
        %v2973 = vld [vmem:[%s2972] sm:$0xff]
        %v2974 = vld [vmem:[%s2972 + $0x8] sm:$0xff]
        %v2975 = vld [vmem:[%s2972 + $0x10] sm:$0xff]
        %v2976 = vld [vmem:[%s2972 + $0x18] sm:$0xff]
        %s2977 = scalar_lea.vmem [#allocation20], 64
        %v2978 = vld [vmem:[%s2977] sm:$0xff]
        %v2979 = vld [vmem:[%s2977 + $0x8] sm:$0xff]
        %v2980 = vld [vmem:[%s2977 + $0x10] sm:$0xff]
        %v2981 = vld [vmem:[%s2977 + $0x18] sm:$0xff]
        %v2983 = vrot.slane %v2965, 7
        %v2985 = vsel %vm1187, 0.0, %v2983
        %v2987 = vsel %vm1498, %v2985, 0
        %2989 = vmatpush.msra.mxu0 0.0
        %2990 = vmatpush.msra.mxu0 0.0
        %2991 = vmatpush.msra.mxu0 0.0
        %2992 = vmatpush.msra.mxu0 0.0
        %2993 = vmatpush.msra.mxu0 0.0
        %2994 = vmatpush.msra.mxu0 0.0
        %2995 = vmatpush.msra.mxu0 0.0
        %2996 = vmatpush.msra.mxu0 0.0
        %2997 = vmatpush.msra.mxu0 0.0
        %2998 = vmatpush.msra.mxu0 0.0
        %2999 = vmatpush.msra.mxu0 0.0
        %3000 = vmatpush.msra.mxu0 0.0
        %3001 = vmatpush.msra.mxu0 %v2971
        %3002 = vmatpush.msra.mxu0 %v2970
        %3003 = vmatpush.msra.mxu0 %v2969
        %3004 = vmatpush.msra.mxu0 %v2968
        %3005 = vmatmul.f32.gmra.mxu0 %v2987
        %v3006 = vpop.f32.mrf.mxu0
        %v3007 = vadd.f32 0.0, %v3006
        %3008 = vdwg.mxu0
        %v3010 = vperm.slane %v2967, 0
        %v3012 = vadd.f32 %v3010, %v3007
        %v3014 = vsel %vm1498, %v2893, 0
        %3016 = vmatpush.msra.mxu0 0.0
        %3017 = vmatpush.msra.mxu0 0.0
        %3018 = vmatpush.msra.mxu0 0.0
        %3019 = vmatpush.msra.mxu0 0.0
        %3020 = vmatpush.msra.mxu0 0.0
        %3021 = vmatpush.msra.mxu0 0.0
        %3022 = vmatpush.msra.mxu0 0.0
        %3023 = vmatpush.msra.mxu0 0.0
        %3024 = vmatpush.msra.mxu0 0.0
        %3025 = vmatpush.msra.mxu0 0.0
        %3026 = vmatpush.msra.mxu0 0.0
        %3027 = vmatpush.msra.mxu0 0.0
        %3028 = vmatpush.msra.mxu0 %v2976
        %3029 = vmatpush.msra.mxu0 %v2975
        %3030 = vmatpush.msra.mxu0 %v2974
        %3031 = vmatpush.msra.mxu0 %v2973
        %3032 = vmatmul.f32.gmra.mxu0 %v3014
        %v3033 = vpop.f32.mrf.mxu0
        %v3034 = vadd.f32 0.0, %v3033
        %3035 = vdwg.mxu0
        %v3036 = vadd.f32 %v3012, %v3034
        %v3038 = vsel %vm1498, %v2922, 0
        %3040 = vmatpush.msra.mxu0 0.0
        %3041 = vmatpush.msra.mxu0 0.0
        %3042 = vmatpush.msra.mxu0 0.0
        %3043 = vmatpush.msra.mxu0 0.0
        %3044 = vmatpush.msra.mxu0 0.0
        %3045 = vmatpush.msra.mxu0 0.0
        %3046 = vmatpush.msra.mxu0 0.0
        %3047 = vmatpush.msra.mxu0 0.0
        %3048 = vmatpush.msra.mxu0 0.0
        %3049 = vmatpush.msra.mxu0 0.0
        %3050 = vmatpush.msra.mxu0 0.0
        %3051 = vmatpush.msra.mxu0 0.0
        %3052 = vmatpush.msra.mxu0 %v2981
        %3053 = vmatpush.msra.mxu0 %v2980
        %3054 = vmatpush.msra.mxu0 %v2979
        %3055 = vmatpush.msra.mxu0 %v2978
        %3056 = vmatmul.f32.gmra.mxu0 %v3038
        %v3057 = vpop.f32.mrf.mxu0
        %v3058 = vadd.f32 0.0, %v3057
        %3059 = vdwg.mxu0
        %v3060 = vadd.f32 %v3036, %v3058
        %3061 = vmatpush.msra.mxu0 0.0
        %3062 = vmatpush.msra.mxu0 0.0
        %3063 = vmatpush.msra.mxu0 0.0
        %3064 = vmatpush.msra.mxu0 0.0
        %3065 = vmatpush.msra.mxu0 0.0
        %3066 = vmatpush.msra.mxu0 0.0
        %3067 = vmatpush.msra.mxu0 0.0
        %3068 = vmatpush.msra.mxu0 0.0
        %3069 = vmatpush.msra.mxu0 0.0
        %3070 = vmatpush.msra.mxu0 0.0
        %3071 = vmatpush.msra.mxu0 0.0
        %3072 = vmatpush.msra.mxu0 0.0
        %3073 = vmatpush.msra.mxu0 %v2971
        %3074 = vmatpush.msra.mxu0 %v2970
        %3075 = vmatpush.msra.mxu0 %v2969
        %3076 = vmatpush.msra.mxu0 %v2968
        %3077 = vmatmul.f32.gmra.mxu0 %v3014
        %v3078 = vpop.f32.mrf.mxu0
        %v3079 = vadd.f32 0.0, %v3078
        %3080 = vdwg.mxu0
        %v3081 = vadd.f32 %v3010, %v3079
        %3082 = vmatpush.msra.mxu0 0.0
        %3083 = vmatpush.msra.mxu0 0.0
        %3084 = vmatpush.msra.mxu0 0.0
        %3085 = vmatpush.msra.mxu0 0.0
        %3086 = vmatpush.msra.mxu0 0.0
        %3087 = vmatpush.msra.mxu0 0.0
        %3088 = vmatpush.msra.mxu0 0.0
        %3089 = vmatpush.msra.mxu0 0.0
        %3090 = vmatpush.msra.mxu0 0.0
        %3091 = vmatpush.msra.mxu0 0.0
        %3092 = vmatpush.msra.mxu0 0.0
        %3093 = vmatpush.msra.mxu0 0.0
        %3094 = vmatpush.msra.mxu0 %v2976
        %3095 = vmatpush.msra.mxu0 %v2975
        %3096 = vmatpush.msra.mxu0 %v2974
        %3097 = vmatpush.msra.mxu0 %v2973
        %3098 = vmatmul.f32.gmra.mxu0 %v3038
        %v3099 = vpop.f32.mrf.mxu0
        %v3100 = vadd.f32 0.0, %v3099
        %3101 = vdwg.mxu0
        %v3102 = vadd.f32 %v3081, %v3100
        %v3104 = vsel %vm1498, %v2945, 0
        %3106 = vmatpush.msra.mxu0 0.0
        %3107 = vmatpush.msra.mxu0 0.0
        %3108 = vmatpush.msra.mxu0 0.0
        %3109 = vmatpush.msra.mxu0 0.0
        %3110 = vmatpush.msra.mxu0 0.0
        %3111 = vmatpush.msra.mxu0 0.0
        %3112 = vmatpush.msra.mxu0 0.0
        %3113 = vmatpush.msra.mxu0 0.0
        %3114 = vmatpush.msra.mxu0 0.0
        %3115 = vmatpush.msra.mxu0 0.0
        %3116 = vmatpush.msra.mxu0 0.0
        %3117 = vmatpush.msra.mxu0 0.0
        %3118 = vmatpush.msra.mxu0 %v2981
        %3119 = vmatpush.msra.mxu0 %v2980
        %3120 = vmatpush.msra.mxu0 %v2979
        %3121 = vmatpush.msra.mxu0 %v2978
        %3122 = vmatmul.f32.gmra.mxu0 %v3104
        %v3123 = vpop.f32.mrf.mxu0
        %v3124 = vadd.f32 0.0, %v3123
        %3125 = vdwg.mxu0
        %v3126 = vadd.f32 %v3102, %v3124
        %3127 = vmatpush.msra.mxu0 0.0
        %3128 = vmatpush.msra.mxu0 0.0
        %3129 = vmatpush.msra.mxu0 0.0
        %3130 = vmatpush.msra.mxu0 0.0
        %3131 = vmatpush.msra.mxu0 0.0
        %3132 = vmatpush.msra.mxu0 0.0
        %3133 = vmatpush.msra.mxu0 0.0
        %3134 = vmatpush.msra.mxu0 0.0
        %3135 = vmatpush.msra.mxu0 0.0
        %3136 = vmatpush.msra.mxu0 0.0
        %3137 = vmatpush.msra.mxu0 0.0
        %3138 = vmatpush.msra.mxu0 0.0
        %3139 = vmatpush.msra.mxu0 %v2971
        %3140 = vmatpush.msra.mxu0 %v2970
        %3141 = vmatpush.msra.mxu0 %v2969
        %3142 = vmatpush.msra.mxu0 %v2968
        %3143 = vmatmul.f32.gmra.mxu0 %v3038
        %v3144 = vpop.f32.mrf.mxu0
        %v3145 = vadd.f32 0.0, %v3144
        %3146 = vdwg.mxu0
        %v3147 = vadd.f32 %v3010, %v3145
        %3148 = vmatpush.msra.mxu0 0.0
        %3149 = vmatpush.msra.mxu0 0.0
        %3150 = vmatpush.msra.mxu0 0.0
        %3151 = vmatpush.msra.mxu0 0.0
        %3152 = vmatpush.msra.mxu0 0.0
        %3153 = vmatpush.msra.mxu0 0.0
        %3154 = vmatpush.msra.mxu0 0.0
        %3155 = vmatpush.msra.mxu0 0.0
        %3156 = vmatpush.msra.mxu0 0.0
        %3157 = vmatpush.msra.mxu0 0.0
        %3158 = vmatpush.msra.mxu0 0.0
        %3159 = vmatpush.msra.mxu0 0.0
        %3160 = vmatpush.msra.mxu0 %v2976
        %3161 = vmatpush.msra.mxu0 %v2975
        %3162 = vmatpush.msra.mxu0 %v2974
        %3163 = vmatpush.msra.mxu0 %v2973
        %3164 = vmatmul.f32.gmra.mxu0 %v3104
        %v3165 = vpop.f32.mrf.mxu0
        %v3166 = vadd.f32 0.0, %v3165
        %3167 = vdwg.mxu0
        %v3168 = vadd.f32 %v3147, %v3166
        %v3169 = vsel %vm1498, %v2965, 0
        %3171 = vmatpush.msra.mxu0 0.0
        %3172 = vmatpush.msra.mxu0 0.0
        %3173 = vmatpush.msra.mxu0 0.0
        %3174 = vmatpush.msra.mxu0 0.0
        %3175 = vmatpush.msra.mxu0 0.0
        %3176 = vmatpush.msra.mxu0 0.0
        %3177 = vmatpush.msra.mxu0 0.0
        %3178 = vmatpush.msra.mxu0 0.0
        %3179 = vmatpush.msra.mxu0 0.0
        %3180 = vmatpush.msra.mxu0 0.0
        %3181 = vmatpush.msra.mxu0 0.0
        %3182 = vmatpush.msra.mxu0 0.0
        %3183 = vmatpush.msra.mxu0 %v2981
        %3184 = vmatpush.msra.mxu0 %v2980
        %3185 = vmatpush.msra.mxu0 %v2979
        %3186 = vmatpush.msra.mxu0 %v2978
        %3187 = vmatmul.f32.gmra.mxu0 %v3169
        %v3188 = vpop.f32.mrf.mxu0
        %v3189 = vadd.f32 0.0, %v3188
        %3190 = vdwg.mxu0
        %v3191 = vadd.f32 %v3168, %v3189
        %3192 = vmatpush.msra.mxu0 0.0
        %3193 = vmatpush.msra.mxu0 0.0
        %3194 = vmatpush.msra.mxu0 0.0
        %3195 = vmatpush.msra.mxu0 0.0
        %3196 = vmatpush.msra.mxu0 0.0
        %3197 = vmatpush.msra.mxu0 0.0
        %3198 = vmatpush.msra.mxu0 0.0
        %3199 = vmatpush.msra.mxu0 0.0
        %3200 = vmatpush.msra.mxu0 0.0
        %3201 = vmatpush.msra.mxu0 0.0
        %3202 = vmatpush.msra.mxu0 0.0
        %3203 = vmatpush.msra.mxu0 0.0
        %3204 = vmatpush.msra.mxu0 %v2971
        %3205 = vmatpush.msra.mxu0 %v2970
        %3206 = vmatpush.msra.mxu0 %v2969
        %3207 = vmatpush.msra.mxu0 %v2968
        %3208 = vmatmul.f32.gmra.mxu0 %v3104
        %v3209 = vpop.f32.mrf.mxu0
        %v3210 = vadd.f32 0.0, %v3209
        %3211 = vdwg.mxu0
        %v3212 = vadd.f32 %v3010, %v3210
        %3213 = vmatpush.msra.mxu0 0.0
        %3214 = vmatpush.msra.mxu0 0.0
        %3215 = vmatpush.msra.mxu0 0.0
        %3216 = vmatpush.msra.mxu0 0.0
        %3217 = vmatpush.msra.mxu0 0.0
        %3218 = vmatpush.msra.mxu0 0.0
        %3219 = vmatpush.msra.mxu0 0.0
        %3220 = vmatpush.msra.mxu0 0.0
        %3221 = vmatpush.msra.mxu0 0.0
        %3222 = vmatpush.msra.mxu0 0.0
        %3223 = vmatpush.msra.mxu0 0.0
        %3224 = vmatpush.msra.mxu0 0.0
        %3225 = vmatpush.msra.mxu0 %v2976
        %3226 = vmatpush.msra.mxu0 %v2975
        %3227 = vmatpush.msra.mxu0 %v2974
        %3228 = vmatpush.msra.mxu0 %v2973
        %3229 = vmatmul.f32.gmra.mxu0 %v3169
        %v3230 = vpop.f32.mrf.mxu0
        %v3231 = vadd.f32 0.0, %v3230
        %3232 = vdwg.mxu0
        %v3233 = vadd.f32 %v3212, %v3231
        %v3234 = vrot.slane %v2893, 1
        %v3236 = vsel %vm1193, %v3234, 0.0
        %v3238 = vsel %vm1498, %v3236, 0
        %3240 = vmatpush.msra.mxu0 0.0
        %3241 = vmatpush.msra.mxu0 0.0
        %3242 = vmatpush.msra.mxu0 0.0
        %3243 = vmatpush.msra.mxu0 0.0
        %3244 = vmatpush.msra.mxu0 0.0
        %3245 = vmatpush.msra.mxu0 0.0
        %3246 = vmatpush.msra.mxu0 0.0
        %3247 = vmatpush.msra.mxu0 0.0
        %3248 = vmatpush.msra.mxu0 0.0
        %3249 = vmatpush.msra.mxu0 0.0
        %3250 = vmatpush.msra.mxu0 0.0
        %3251 = vmatpush.msra.mxu0 0.0
        %3252 = vmatpush.msra.mxu0 %v2981
        %3253 = vmatpush.msra.mxu0 %v2980
        %3254 = vmatpush.msra.mxu0 %v2979
        %3255 = vmatpush.msra.mxu0 %v2978
        %3256 = vmatmul.f32.gmra.mxu0 %v3238
        %v3257 = vpop.f32.mrf.mxu0
        %v3258 = vadd.f32 0.0, %v3257
        %3259 = vdwg.mxu0
        %v3260 = vadd.f32 %v3233, %v3258
        %v3261 = vld [vmem:[#allocation21] sm:$0xff]
        %v3262 = vld [vmem:[#allocation21 + $0x8] sm:$0xff]
        %v3263 = vld [vmem:[#allocation21 + $0x10] sm:$0xff]
        %v3264 = vld [vmem:[#allocation21 + $0x18] sm:$0xff]
        %s3265 = scalar_lea.vmem [#allocation21], 32
        %v3266 = vld [vmem:[%s3265] sm:$0xff]
        %v3267 = vld [vmem:[%s3265 + $0x8] sm:$0xff]
        %v3268 = vld [vmem:[%s3265 + $0x10] sm:$0xff]
        %v3269 = vld [vmem:[%s3265 + $0x18] sm:$0xff]
        %s3270 = scalar_lea.vmem [#allocation21], 64
        %v3271 = vld [vmem:[%s3270] sm:$0xff]
        %v3272 = vld [vmem:[%s3270 + $0x8] sm:$0xff]
        %v3273 = vld [vmem:[%s3270 + $0x10] sm:$0xff]
        %v3274 = vld [vmem:[%s3270 + $0x18] sm:$0xff]
        %v3276 = vrot.slane %v1777, 7
        %v3278 = vsel %vm1187, 0.0, %v3276
        %v3280 = vsel %vm1498, %v3278, 0
        %3282 = vmatpush.msra.mxu0 0.0
        %3283 = vmatpush.msra.mxu0 0.0
        %3284 = vmatpush.msra.mxu0 0.0
        %3285 = vmatpush.msra.mxu0 0.0
        %3286 = vmatpush.msra.mxu0 0.0
        %3287 = vmatpush.msra.mxu0 0.0
        %3288 = vmatpush.msra.mxu0 0.0
        %3289 = vmatpush.msra.mxu0 0.0
        %3290 = vmatpush.msra.mxu0 0.0
        %3291 = vmatpush.msra.mxu0 0.0
        %3292 = vmatpush.msra.mxu0 0.0
        %3293 = vmatpush.msra.mxu0 0.0
        %3294 = vmatpush.msra.mxu0 %v3264
        %3295 = vmatpush.msra.mxu0 %v3263
        %3296 = vmatpush.msra.mxu0 %v3262
        %3297 = vmatpush.msra.mxu0 %v3261
        %3298 = vmatmul.f32.gmra.mxu0 %v3280
        %v3299 = vpop.f32.mrf.mxu0
        %v3300 = vadd.f32 0.0, %v3299
        %3301 = vdwg.mxu0
        %v3302 = vadd.f32 %v3060, %v3300
        %v3304 = vsel %vm1498, %v1774, 0
        %3306 = vmatpush.msra.mxu0 0.0
        %3307 = vmatpush.msra.mxu0 0.0
        %3308 = vmatpush.msra.mxu0 0.0
        %3309 = vmatpush.msra.mxu0 0.0
        %3310 = vmatpush.msra.mxu0 0.0
        %3311 = vmatpush.msra.mxu0 0.0
        %3312 = vmatpush.msra.mxu0 0.0
        %3313 = vmatpush.msra.mxu0 0.0
        %3314 = vmatpush.msra.mxu0 0.0
        %3315 = vmatpush.msra.mxu0 0.0
        %3316 = vmatpush.msra.mxu0 0.0
        %3317 = vmatpush.msra.mxu0 0.0
        %3318 = vmatpush.msra.mxu0 %v3269
        %3319 = vmatpush.msra.mxu0 %v3268
        %3320 = vmatpush.msra.mxu0 %v3267
        %3321 = vmatpush.msra.mxu0 %v3266
        %3322 = vmatmul.f32.gmra.mxu0 %v3304
        %v3323 = vpop.f32.mrf.mxu0
        %v3324 = vadd.f32 0.0, %v3323
        %3325 = vdwg.mxu0
        %v3326 = vadd.f32 %v3302, %v3324
        %v3328 = vsel %vm1498, %v1775, 0
        %3330 = vmatpush.msra.mxu0 0.0
        %3331 = vmatpush.msra.mxu0 0.0
        %3332 = vmatpush.msra.mxu0 0.0
        %3333 = vmatpush.msra.mxu0 0.0
        %3334 = vmatpush.msra.mxu0 0.0
        %3335 = vmatpush.msra.mxu0 0.0
        %3336 = vmatpush.msra.mxu0 0.0
        %3337 = vmatpush.msra.mxu0 0.0
        %3338 = vmatpush.msra.mxu0 0.0
        %3339 = vmatpush.msra.mxu0 0.0
        %3340 = vmatpush.msra.mxu0 0.0
        %3341 = vmatpush.msra.mxu0 0.0
        %3342 = vmatpush.msra.mxu0 %v3274
        %3343 = vmatpush.msra.mxu0 %v3273
        %3344 = vmatpush.msra.mxu0 %v3272
        %3345 = vmatpush.msra.mxu0 %v3271
        %3346 = vmatmul.f32.gmra.mxu0 %v3328
        %v3347 = vpop.f32.mrf.mxu0
        %v3348 = vadd.f32 0.0, %v3347
        %3349 = vdwg.mxu0
        %v3350 = vadd.f32 %v3326, %v3348
        %3351 = vmatpush.msra.mxu0 0.0
        %3352 = vmatpush.msra.mxu0 0.0
        %3353 = vmatpush.msra.mxu0 0.0
        %3354 = vmatpush.msra.mxu0 0.0
        %3355 = vmatpush.msra.mxu0 0.0
        %3356 = vmatpush.msra.mxu0 0.0
        %3357 = vmatpush.msra.mxu0 0.0
        %3358 = vmatpush.msra.mxu0 0.0
        %3359 = vmatpush.msra.mxu0 0.0
        %3360 = vmatpush.msra.mxu0 0.0
        %3361 = vmatpush.msra.mxu0 0.0
        %3362 = vmatpush.msra.mxu0 0.0
        %3363 = vmatpush.msra.mxu0 %v3264
        %3364 = vmatpush.msra.mxu0 %v3263
        %3365 = vmatpush.msra.mxu0 %v3262
        %3366 = vmatpush.msra.mxu0 %v3261
        %3367 = vmatmul.f32.gmra.mxu0 %v3304
        %v3368 = vpop.f32.mrf.mxu0
        %v3369 = vadd.f32 0.0, %v3368
        %3370 = vdwg.mxu0
        %v3371 = vadd.f32 %v3126, %v3369
        %3372 = vmatpush.msra.mxu0 0.0
        %3373 = vmatpush.msra.mxu0 0.0
        %3374 = vmatpush.msra.mxu0 0.0
        %3375 = vmatpush.msra.mxu0 0.0
        %3376 = vmatpush.msra.mxu0 0.0
        %3377 = vmatpush.msra.mxu0 0.0
        %3378 = vmatpush.msra.mxu0 0.0
        %3379 = vmatpush.msra.mxu0 0.0
        %3380 = vmatpush.msra.mxu0 0.0
        %3381 = vmatpush.msra.mxu0 0.0
        %3382 = vmatpush.msra.mxu0 0.0
        %3383 = vmatpush.msra.mxu0 0.0
        %3384 = vmatpush.msra.mxu0 %v3269
        %3385 = vmatpush.msra.mxu0 %v3268
        %3386 = vmatpush.msra.mxu0 %v3267
        %3387 = vmatpush.msra.mxu0 %v3266
        %3388 = vmatmul.f32.gmra.mxu0 %v3328
        %v3389 = vpop.f32.mrf.mxu0
        %v3390 = vadd.f32 0.0, %v3389
        %3391 = vdwg.mxu0
        %v3392 = vadd.f32 %v3371, %v3390
        %v3394 = vsel %vm1498, %v1776, 0
        %3396 = vmatpush.msra.mxu0 0.0
        %3397 = vmatpush.msra.mxu0 0.0
        %3398 = vmatpush.msra.mxu0 0.0
        %3399 = vmatpush.msra.mxu0 0.0
        %3400 = vmatpush.msra.mxu0 0.0
        %3401 = vmatpush.msra.mxu0 0.0
        %3402 = vmatpush.msra.mxu0 0.0
        %3403 = vmatpush.msra.mxu0 0.0
        %3404 = vmatpush.msra.mxu0 0.0
        %3405 = vmatpush.msra.mxu0 0.0
        %3406 = vmatpush.msra.mxu0 0.0
        %3407 = vmatpush.msra.mxu0 0.0
        %3408 = vmatpush.msra.mxu0 %v3274
        %3409 = vmatpush.msra.mxu0 %v3273
        %3410 = vmatpush.msra.mxu0 %v3272
        %3411 = vmatpush.msra.mxu0 %v3271
        %3412 = vmatmul.f32.gmra.mxu0 %v3394
        %v3413 = vpop.f32.mrf.mxu0
        %v3414 = vadd.f32 0.0, %v3413
        %3415 = vdwg.mxu0
        %v3416 = vadd.f32 %v3392, %v3414
        %3417 = vmatpush.msra.mxu0 0.0
        %3418 = vmatpush.msra.mxu0 0.0
        %3419 = vmatpush.msra.mxu0 0.0
        %3420 = vmatpush.msra.mxu0 0.0
        %3421 = vmatpush.msra.mxu0 0.0
        %3422 = vmatpush.msra.mxu0 0.0
        %3423 = vmatpush.msra.mxu0 0.0
        %3424 = vmatpush.msra.mxu0 0.0
        %3425 = vmatpush.msra.mxu0 0.0
        %3426 = vmatpush.msra.mxu0 0.0
        %3427 = vmatpush.msra.mxu0 0.0
        %3428 = vmatpush.msra.mxu0 0.0
        %3429 = vmatpush.msra.mxu0 %v3264
        %3430 = vmatpush.msra.mxu0 %v3263
        %3431 = vmatpush.msra.mxu0 %v3262
        %3432 = vmatpush.msra.mxu0 %v3261
        %3433 = vmatmul.f32.gmra.mxu0 %v3328
        %v3434 = vpop.f32.mrf.mxu0
        %v3435 = vadd.f32 0.0, %v3434
        %3436 = vdwg.mxu0
        %v3437 = vadd.f32 %v3191, %v3435
        %3438 = vmatpush.msra.mxu0 0.0
        %3439 = vmatpush.msra.mxu0 0.0
        %3440 = vmatpush.msra.mxu0 0.0
        %3441 = vmatpush.msra.mxu0 0.0
        %3442 = vmatpush.msra.mxu0 0.0
        %3443 = vmatpush.msra.mxu0 0.0
        %3444 = vmatpush.msra.mxu0 0.0
        %3445 = vmatpush.msra.mxu0 0.0
        %3446 = vmatpush.msra.mxu0 0.0
        %3447 = vmatpush.msra.mxu0 0.0
        %3448 = vmatpush.msra.mxu0 0.0
        %3449 = vmatpush.msra.mxu0 0.0
        %3450 = vmatpush.msra.mxu0 %v3269
        %3451 = vmatpush.msra.mxu0 %v3268
        %3452 = vmatpush.msra.mxu0 %v3267
        %3453 = vmatpush.msra.mxu0 %v3266
        %3454 = vmatmul.f32.gmra.mxu0 %v3394
        %v3455 = vpop.f32.mrf.mxu0
        %v3456 = vadd.f32 0.0, %v3455
        %3457 = vdwg.mxu0
        %v3458 = vadd.f32 %v3437, %v3456
        %v3459 = vsel %vm1498, %v1777, 0
        %3461 = vmatpush.msra.mxu0 0.0
        %3462 = vmatpush.msra.mxu0 0.0
        %3463 = vmatpush.msra.mxu0 0.0
        %3464 = vmatpush.msra.mxu0 0.0
        %3465 = vmatpush.msra.mxu0 0.0
        %3466 = vmatpush.msra.mxu0 0.0
        %3467 = vmatpush.msra.mxu0 0.0
        %3468 = vmatpush.msra.mxu0 0.0
        %3469 = vmatpush.msra.mxu0 0.0
        %3470 = vmatpush.msra.mxu0 0.0
        %3471 = vmatpush.msra.mxu0 0.0
        %3472 = vmatpush.msra.mxu0 0.0
        %3473 = vmatpush.msra.mxu0 %v3274
        %3474 = vmatpush.msra.mxu0 %v3273
        %3475 = vmatpush.msra.mxu0 %v3272
        %3476 = vmatpush.msra.mxu0 %v3271
        %3477 = vmatmul.f32.gmra.mxu0 %v3459
        %v3478 = vpop.f32.mrf.mxu0
        %v3479 = vadd.f32 0.0, %v3478
        %3480 = vdwg.mxu0
        %v3481 = vadd.f32 %v3458, %v3479
        %3482 = vmatpush.msra.mxu0 0.0
        %3483 = vmatpush.msra.mxu0 0.0
        %3484 = vmatpush.msra.mxu0 0.0
        %3485 = vmatpush.msra.mxu0 0.0
        %3486 = vmatpush.msra.mxu0 0.0
        %3487 = vmatpush.msra.mxu0 0.0
        %3488 = vmatpush.msra.mxu0 0.0
        %3489 = vmatpush.msra.mxu0 0.0
        %3490 = vmatpush.msra.mxu0 0.0
        %3491 = vmatpush.msra.mxu0 0.0
        %3492 = vmatpush.msra.mxu0 0.0
        %3493 = vmatpush.msra.mxu0 0.0
        %3494 = vmatpush.msra.mxu0 %v3264
        %3495 = vmatpush.msra.mxu0 %v3263
        %3496 = vmatpush.msra.mxu0 %v3262
        %3497 = vmatpush.msra.mxu0 %v3261
        %3498 = vmatmul.f32.gmra.mxu0 %v3394
        %v3499 = vpop.f32.mrf.mxu0
        %v3500 = vadd.f32 0.0, %v3499
        %3501 = vdwg.mxu0
        %v3502 = vadd.f32 %v3260, %v3500
        %3503 = vmatpush.msra.mxu0 0.0
        %3504 = vmatpush.msra.mxu0 0.0
        %3505 = vmatpush.msra.mxu0 0.0
        %3506 = vmatpush.msra.mxu0 0.0
        %3507 = vmatpush.msra.mxu0 0.0
        %3508 = vmatpush.msra.mxu0 0.0
        %3509 = vmatpush.msra.mxu0 0.0
        %3510 = vmatpush.msra.mxu0 0.0
        %3511 = vmatpush.msra.mxu0 0.0
        %3512 = vmatpush.msra.mxu0 0.0
        %3513 = vmatpush.msra.mxu0 0.0
        %3514 = vmatpush.msra.mxu0 0.0
        %3515 = vmatpush.msra.mxu0 %v3269
        %3516 = vmatpush.msra.mxu0 %v3268
        %3517 = vmatpush.msra.mxu0 %v3267
        %3518 = vmatpush.msra.mxu0 %v3266
        %3519 = vmatmul.f32.gmra.mxu0 %v3459
        %v3520 = vpop.f32.mrf.mxu0
        %v3521 = vadd.f32 0.0, %v3520
        %3522 = vdwg.mxu0
        %v3523 = vadd.f32 %v3502, %v3521
        %v3524 = vrot.slane %v1774, 1
        %v3526 = vsel %vm1193, %v3524, 0.0
        %v3528 = vsel %vm1498, %v3526, 0
        %3530 = vmatpush.msra.mxu0 0.0
        %3531 = vmatpush.msra.mxu0 0.0
        %3532 = vmatpush.msra.mxu0 0.0
        %3533 = vmatpush.msra.mxu0 0.0
        %3534 = vmatpush.msra.mxu0 0.0
        %3535 = vmatpush.msra.mxu0 0.0
        %3536 = vmatpush.msra.mxu0 0.0
        %3537 = vmatpush.msra.mxu0 0.0
        %3538 = vmatpush.msra.mxu0 0.0
        %3539 = vmatpush.msra.mxu0 0.0
        %3540 = vmatpush.msra.mxu0 0.0
        %3541 = vmatpush.msra.mxu0 0.0
        %3542 = vmatpush.msra.mxu0 %v3274
        %3543 = vmatpush.msra.mxu0 %v3273
        %3544 = vmatpush.msra.mxu0 %v3272
        %3545 = vmatpush.msra.mxu0 %v3271
        %3546 = vmatmul.f32.gmra.mxu0 %v3528
        %v3547 = vpop.f32.mrf.mxu0
        %v3548 = vadd.f32 0.0, %v3547
        %3549 = vdwg.mxu0
        %v3550 = vadd.f32 %v3523, %v3548
        %v3551 = vmax.f32 %v3350, 0.0
        %v3552 = vmax.f32 %v3416, 0.0
        %v3553 = vmax.f32 %v3481, 0.0
        %v3554 = vmax.f32 %v3550, 0.0
        %v3555 = vld [vmem:[#allocation26] sm:$0x1]
        %v3556 = vld [vmem:[#allocation24] sm:$0xff]
        %v3557 = vld [vmem:[#allocation24 + $0x8] sm:$0xff]
        %v3558 = vld [vmem:[#allocation24 + $0x10] sm:$0xff]
        %v3559 = vld [vmem:[#allocation24 + $0x18] sm:$0xff]
        %s3560 = scalar_lea.vmem [#allocation24], 32
        %v3561 = vld [vmem:[%s3560] sm:$0xff]
        %v3562 = vld [vmem:[%s3560 + $0x8] sm:$0xff]
        %v3563 = vld [vmem:[%s3560 + $0x10] sm:$0xff]
        %v3564 = vld [vmem:[%s3560 + $0x18] sm:$0xff]
        %s3565 = scalar_lea.vmem [#allocation24], 64
        %v3566 = vld [vmem:[%s3565] sm:$0xff]
        %v3567 = vld [vmem:[%s3565 + $0x8] sm:$0xff]
        %v3568 = vld [vmem:[%s3565 + $0x10] sm:$0xff]
        %v3569 = vld [vmem:[%s3565 + $0x18] sm:$0xff]
        %v3571 = vrot.slane %v3554, 7
        %v3573 = vsel %vm1187, 0.0, %v3571
        %v3575 = vsel %vm1498, %v3573, 0
        %3577 = vmatpush.msra.mxu0 0.0
        %3578 = vmatpush.msra.mxu0 0.0
        %3579 = vmatpush.msra.mxu0 0.0
        %3580 = vmatpush.msra.mxu0 0.0
        %3581 = vmatpush.msra.mxu0 0.0
        %3582 = vmatpush.msra.mxu0 0.0
        %3583 = vmatpush.msra.mxu0 0.0
        %3584 = vmatpush.msra.mxu0 0.0
        %3585 = vmatpush.msra.mxu0 0.0
        %3586 = vmatpush.msra.mxu0 0.0
        %3587 = vmatpush.msra.mxu0 0.0
        %3588 = vmatpush.msra.mxu0 0.0
        %3589 = vmatpush.msra.mxu0 %v3559
        %3590 = vmatpush.msra.mxu0 %v3558
        %3591 = vmatpush.msra.mxu0 %v3557
        %3592 = vmatpush.msra.mxu0 %v3556
        %3593 = vmatmul.f32.gmra.mxu0 %v3575
        %v3594 = vpop.f32.mrf.mxu0
        %v3595 = vadd.f32 0.0, %v3594
        %3596 = vdwg.mxu0
        %v3598 = vperm.slane %v3555, 0
        %v3600 = vadd.f32 %v3598, %v3595
        %v3602 = vsel %vm1498, %v3551, 0
        %3604 = vmatpush.msra.mxu0 0.0
        %3605 = vmatpush.msra.mxu0 0.0
        %3606 = vmatpush.msra.mxu0 0.0
        %3607 = vmatpush.msra.mxu0 0.0
        %3608 = vmatpush.msra.mxu0 0.0
        %3609 = vmatpush.msra.mxu0 0.0
        %3610 = vmatpush.msra.mxu0 0.0
        %3611 = vmatpush.msra.mxu0 0.0
        %3612 = vmatpush.msra.mxu0 0.0
        %3613 = vmatpush.msra.mxu0 0.0
        %3614 = vmatpush.msra.mxu0 0.0
        %3615 = vmatpush.msra.mxu0 0.0
        %3616 = vmatpush.msra.mxu0 %v3564
        %3617 = vmatpush.msra.mxu0 %v3563
        %3618 = vmatpush.msra.mxu0 %v3562
        %3619 = vmatpush.msra.mxu0 %v3561
        %3620 = vmatmul.f32.gmra.mxu0 %v3602
        %v3621 = vpop.f32.mrf.mxu0
        %v3622 = vadd.f32 0.0, %v3621
        %3623 = vdwg.mxu0
        %v3624 = vadd.f32 %v3600, %v3622
        %v3626 = vsel %vm1498, %v3552, 0
        %3628 = vmatpush.msra.mxu0 0.0
        %3629 = vmatpush.msra.mxu0 0.0
        %3630 = vmatpush.msra.mxu0 0.0
        %3631 = vmatpush.msra.mxu0 0.0
        %3632 = vmatpush.msra.mxu0 0.0
        %3633 = vmatpush.msra.mxu0 0.0
        %3634 = vmatpush.msra.mxu0 0.0
        %3635 = vmatpush.msra.mxu0 0.0
        %3636 = vmatpush.msra.mxu0 0.0
        %3637 = vmatpush.msra.mxu0 0.0
        %3638 = vmatpush.msra.mxu0 0.0
        %3639 = vmatpush.msra.mxu0 0.0
        %3640 = vmatpush.msra.mxu0 %v3569
        %3641 = vmatpush.msra.mxu0 %v3568
        %3642 = vmatpush.msra.mxu0 %v3567
        %3643 = vmatpush.msra.mxu0 %v3566
        %3644 = vmatmul.f32.gmra.mxu0 %v3626
        %v3645 = vpop.f32.mrf.mxu0
        %v3646 = vadd.f32 0.0, %v3645
        %3647 = vdwg.mxu0
        %v3648 = vadd.f32 %v3624, %v3646
        %3649 = vmatpush.msra.mxu0 0.0
        %3650 = vmatpush.msra.mxu0 0.0
        %3651 = vmatpush.msra.mxu0 0.0
        %3652 = vmatpush.msra.mxu0 0.0
        %3653 = vmatpush.msra.mxu0 0.0
        %3654 = vmatpush.msra.mxu0 0.0
        %3655 = vmatpush.msra.mxu0 0.0
        %3656 = vmatpush.msra.mxu0 0.0
        %3657 = vmatpush.msra.mxu0 0.0
        %3658 = vmatpush.msra.mxu0 0.0
        %3659 = vmatpush.msra.mxu0 0.0
        %3660 = vmatpush.msra.mxu0 0.0
        %3661 = vmatpush.msra.mxu0 %v3559
        %3662 = vmatpush.msra.mxu0 %v3558
        %3663 = vmatpush.msra.mxu0 %v3557
        %3664 = vmatpush.msra.mxu0 %v3556
        %3665 = vmatmul.f32.gmra.mxu0 %v3602
        %v3666 = vpop.f32.mrf.mxu0
        %v3667 = vadd.f32 0.0, %v3666
        %3668 = vdwg.mxu0
        %v3669 = vadd.f32 %v3598, %v3667
        %3670 = vmatpush.msra.mxu0 0.0
        %3671 = vmatpush.msra.mxu0 0.0
        %3672 = vmatpush.msra.mxu0 0.0
        %3673 = vmatpush.msra.mxu0 0.0
        %3674 = vmatpush.msra.mxu0 0.0
        %3675 = vmatpush.msra.mxu0 0.0
        %3676 = vmatpush.msra.mxu0 0.0
        %3677 = vmatpush.msra.mxu0 0.0
        %3678 = vmatpush.msra.mxu0 0.0
        %3679 = vmatpush.msra.mxu0 0.0
        %3680 = vmatpush.msra.mxu0 0.0
        %3681 = vmatpush.msra.mxu0 0.0
        %3682 = vmatpush.msra.mxu0 %v3564
        %3683 = vmatpush.msra.mxu0 %v3563
        %3684 = vmatpush.msra.mxu0 %v3562
        %3685 = vmatpush.msra.mxu0 %v3561
        %3686 = vmatmul.f32.gmra.mxu0 %v3626
        %v3687 = vpop.f32.mrf.mxu0
        %v3688 = vadd.f32 0.0, %v3687
        %3689 = vdwg.mxu0
        %v3690 = vadd.f32 %v3669, %v3688
        %v3692 = vsel %vm1498, %v3553, 0
        %3694 = vmatpush.msra.mxu0 0.0
        %3695 = vmatpush.msra.mxu0 0.0
        %3696 = vmatpush.msra.mxu0 0.0
        %3697 = vmatpush.msra.mxu0 0.0
        %3698 = vmatpush.msra.mxu0 0.0
        %3699 = vmatpush.msra.mxu0 0.0
        %3700 = vmatpush.msra.mxu0 0.0
        %3701 = vmatpush.msra.mxu0 0.0
        %3702 = vmatpush.msra.mxu0 0.0
        %3703 = vmatpush.msra.mxu0 0.0
        %3704 = vmatpush.msra.mxu0 0.0
        %3705 = vmatpush.msra.mxu0 0.0
        %3706 = vmatpush.msra.mxu0 %v3569
        %3707 = vmatpush.msra.mxu0 %v3568
        %3708 = vmatpush.msra.mxu0 %v3567
        %3709 = vmatpush.msra.mxu0 %v3566
        %3710 = vmatmul.f32.gmra.mxu0 %v3692
        %v3711 = vpop.f32.mrf.mxu0
        %v3712 = vadd.f32 0.0, %v3711
        %3713 = vdwg.mxu0
        %v3714 = vadd.f32 %v3690, %v3712
        %3715 = vmatpush.msra.mxu0 0.0
        %3716 = vmatpush.msra.mxu0 0.0
        %3717 = vmatpush.msra.mxu0 0.0
        %3718 = vmatpush.msra.mxu0 0.0
        %3719 = vmatpush.msra.mxu0 0.0
        %3720 = vmatpush.msra.mxu0 0.0
        %3721 = vmatpush.msra.mxu0 0.0
        %3722 = vmatpush.msra.mxu0 0.0
        %3723 = vmatpush.msra.mxu0 0.0
        %3724 = vmatpush.msra.mxu0 0.0
        %3725 = vmatpush.msra.mxu0 0.0
        %3726 = vmatpush.msra.mxu0 0.0
        %3727 = vmatpush.msra.mxu0 %v3559
        %3728 = vmatpush.msra.mxu0 %v3558
        %3729 = vmatpush.msra.mxu0 %v3557
        %3730 = vmatpush.msra.mxu0 %v3556
        %3731 = vmatmul.f32.gmra.mxu0 %v3626
        %v3732 = vpop.f32.mrf.mxu0
        %v3733 = vadd.f32 0.0, %v3732
        %3734 = vdwg.mxu0
        %v3735 = vadd.f32 %v3598, %v3733
        %3736 = vmatpush.msra.mxu0 0.0
        %3737 = vmatpush.msra.mxu0 0.0
        %3738 = vmatpush.msra.mxu0 0.0
        %3739 = vmatpush.msra.mxu0 0.0
        %3740 = vmatpush.msra.mxu0 0.0
        %3741 = vmatpush.msra.mxu0 0.0
        %3742 = vmatpush.msra.mxu0 0.0
        %3743 = vmatpush.msra.mxu0 0.0
        %3744 = vmatpush.msra.mxu0 0.0
        %3745 = vmatpush.msra.mxu0 0.0
        %3746 = vmatpush.msra.mxu0 0.0
        %3747 = vmatpush.msra.mxu0 0.0
        %3748 = vmatpush.msra.mxu0 %v3564
        %3749 = vmatpush.msra.mxu0 %v3563
        %3750 = vmatpush.msra.mxu0 %v3562
        %3751 = vmatpush.msra.mxu0 %v3561
        %3752 = vmatmul.f32.gmra.mxu0 %v3692
        %v3753 = vpop.f32.mrf.mxu0
        %v3754 = vadd.f32 0.0, %v3753
        %3755 = vdwg.mxu0
        %v3756 = vadd.f32 %v3735, %v3754
        %v3757 = vsel %vm1498, %v3554, 0
        %3759 = vmatpush.msra.mxu0 0.0
        %3760 = vmatpush.msra.mxu0 0.0
        %3761 = vmatpush.msra.mxu0 0.0
        %3762 = vmatpush.msra.mxu0 0.0
        %3763 = vmatpush.msra.mxu0 0.0
        %3764 = vmatpush.msra.mxu0 0.0
        %3765 = vmatpush.msra.mxu0 0.0
        %3766 = vmatpush.msra.mxu0 0.0
        %3767 = vmatpush.msra.mxu0 0.0
        %3768 = vmatpush.msra.mxu0 0.0
        %3769 = vmatpush.msra.mxu0 0.0
        %3770 = vmatpush.msra.mxu0 0.0
        %3771 = vmatpush.msra.mxu0 %v3569
        %3772 = vmatpush.msra.mxu0 %v3568
        %3773 = vmatpush.msra.mxu0 %v3567
        %3774 = vmatpush.msra.mxu0 %v3566
        %3775 = vmatmul.f32.gmra.mxu0 %v3757
        %v3776 = vpop.f32.mrf.mxu0
        %v3777 = vadd.f32 0.0, %v3776
        %3778 = vdwg.mxu0
        %v3779 = vadd.f32 %v3756, %v3777
        %3780 = vmatpush.msra.mxu0 0.0
        %3781 = vmatpush.msra.mxu0 0.0
        %3782 = vmatpush.msra.mxu0 0.0
        %3783 = vmatpush.msra.mxu0 0.0
        %3784 = vmatpush.msra.mxu0 0.0
        %3785 = vmatpush.msra.mxu0 0.0
        %3786 = vmatpush.msra.mxu0 0.0
        %3787 = vmatpush.msra.mxu0 0.0
        %3788 = vmatpush.msra.mxu0 0.0
        %3789 = vmatpush.msra.mxu0 0.0
        %3790 = vmatpush.msra.mxu0 0.0
        %3791 = vmatpush.msra.mxu0 0.0
        %3792 = vmatpush.msra.mxu0 %v3559
        %3793 = vmatpush.msra.mxu0 %v3558
        %3794 = vmatpush.msra.mxu0 %v3557
        %3795 = vmatpush.msra.mxu0 %v3556
        %3796 = vmatmul.f32.gmra.mxu0 %v3692
        %v3797 = vpop.f32.mrf.mxu0
        %v3798 = vadd.f32 0.0, %v3797
        %3799 = vdwg.mxu0
        %v3800 = vadd.f32 %v3598, %v3798
        %3801 = vmatpush.msra.mxu0 0.0
        %3802 = vmatpush.msra.mxu0 0.0
        %3803 = vmatpush.msra.mxu0 0.0
        %3804 = vmatpush.msra.mxu0 0.0
        %3805 = vmatpush.msra.mxu0 0.0
        %3806 = vmatpush.msra.mxu0 0.0
        %3807 = vmatpush.msra.mxu0 0.0
        %3808 = vmatpush.msra.mxu0 0.0
        %3809 = vmatpush.msra.mxu0 0.0
        %3810 = vmatpush.msra.mxu0 0.0
        %3811 = vmatpush.msra.mxu0 0.0
        %3812 = vmatpush.msra.mxu0 0.0
        %3813 = vmatpush.msra.mxu0 %v3564
        %3814 = vmatpush.msra.mxu0 %v3563
        %3815 = vmatpush.msra.mxu0 %v3562
        %3816 = vmatpush.msra.mxu0 %v3561
        %3817 = vmatmul.f32.gmra.mxu0 %v3757
        %v3818 = vpop.f32.mrf.mxu0
        %v3819 = vadd.f32 0.0, %v3818
        %3820 = vdwg.mxu0
        %v3821 = vadd.f32 %v3800, %v3819
        %v3822 = vrot.slane %v3551, 1
        %v3824 = vsel %vm1193, %v3822, 0.0
        %v3826 = vsel %vm1498, %v3824, 0
        %3828 = vmatpush.msra.mxu0 0.0
        %3829 = vmatpush.msra.mxu0 0.0
        %3830 = vmatpush.msra.mxu0 0.0
        %3831 = vmatpush.msra.mxu0 0.0
        %3832 = vmatpush.msra.mxu0 0.0
        %3833 = vmatpush.msra.mxu0 0.0
        %3834 = vmatpush.msra.mxu0 0.0
        %3835 = vmatpush.msra.mxu0 0.0
        %3836 = vmatpush.msra.mxu0 0.0
        %3837 = vmatpush.msra.mxu0 0.0
        %3838 = vmatpush.msra.mxu0 0.0
        %3839 = vmatpush.msra.mxu0 0.0
        %3840 = vmatpush.msra.mxu0 %v3569
        %3841 = vmatpush.msra.mxu0 %v3568
        %3842 = vmatpush.msra.mxu0 %v3567
        %3843 = vmatpush.msra.mxu0 %v3566
        %3844 = vmatmul.f32.gmra.mxu0 %v3826
        %v3845 = vpop.f32.mrf.mxu0
        %v3846 = vadd.f32 0.0, %v3845
        %3847 = vdwg.mxu0
        %v3848 = vadd.f32 %v3821, %v3846
        %v3849 = vmax.f32 %v3648, 0.0
        %v3850 = vmax.f32 %v3714, 0.0
        %v3851 = vmax.f32 %v3779, 0.0
        %v3852 = vmax.f32 %v3848, 0.0
        %v3853 = vld [vmem:[%s57] sm:$0xff]
        %v3854 = vld [vmem:[%s57 + $0x8] sm:$0xff]
        %v3855 = vld [vmem:[%s57 + $0x10] sm:$0xff]
        %v3856 = vld [vmem:[%s57 + $0x18] sm:$0xff]
        %v3857 = vld [vmem:[%s59] sm:$0x1]
        %v3859 = vperm.slane %v3857, 0
        %v3862 = vsel %vm1498, %v3849, 0
        %3864 = vmatpush.msra.mxu0 0.0
        %3865 = vmatpush.msra.mxu0 0.0
        %3866 = vmatpush.msra.mxu0 0.0
        %3867 = vmatpush.msra.mxu0 0.0
        %3868 = vmatpush.msra.mxu0 0.0
        %3869 = vmatpush.msra.mxu0 0.0
        %3870 = vmatpush.msra.mxu0 0.0
        %3871 = vmatpush.msra.mxu0 0.0
        %3872 = vmatpush.msra.mxu0 0.0
        %3873 = vmatpush.msra.mxu0 0.0
        %3874 = vmatpush.msra.mxu0 0.0
        %3875 = vmatpush.msra.mxu0 0.0
        %3876 = vmatpush.msra.mxu0 %v3856
        %3877 = vmatpush.msra.mxu0 %v3855
        %3878 = vmatpush.msra.mxu0 %v3854
        %3879 = vmatpush.msra.mxu0 %v3853
        %3880 = vmatmul.f32.gmra.mxu0 %v3862
        %v3881 = vpop.f32.mrf.mxu0
        %v3882 = vadd.f32 %v3859, %v3881
        %3883 = vdwg.mxu0
        %vm3884 = vcmask 19456
        %3885 = vst.msk [vmem:[%s1170] sm:$0xf] %vm3884, %v3882
        %v3886 = vld [vmem:[%s57] sm:$0xff]
        %v3887 = vld [vmem:[%s57 + $0x8] sm:$0xff]
        %v3888 = vld [vmem:[%s57 + $0x10] sm:$0xff]
        %v3889 = vld [vmem:[%s57 + $0x18] sm:$0xff]
        %v3890 = vld [vmem:[%s59] sm:$0x1]
        %v3892 = vperm.slane %v3890, 0
        %v3895 = vsel %vm1498, %v3850, 0
        %3897 = vmatpush.msra.mxu0 0.0
        %3898 = vmatpush.msra.mxu0 0.0
        %3899 = vmatpush.msra.mxu0 0.0
        %3900 = vmatpush.msra.mxu0 0.0
        %3901 = vmatpush.msra.mxu0 0.0
        %3902 = vmatpush.msra.mxu0 0.0
        %3903 = vmatpush.msra.mxu0 0.0
        %3904 = vmatpush.msra.mxu0 0.0
        %3905 = vmatpush.msra.mxu0 0.0
        %3906 = vmatpush.msra.mxu0 0.0
        %3907 = vmatpush.msra.mxu0 0.0
        %3908 = vmatpush.msra.mxu0 0.0
        %3909 = vmatpush.msra.mxu0 %v3889
        %3910 = vmatpush.msra.mxu0 %v3888
        %3911 = vmatpush.msra.mxu0 %v3887
        %3912 = vmatpush.msra.mxu0 %v3886
        %3913 = vmatmul.f32.gmra.mxu0 %v3895
        %v3914 = vpop.f32.mrf.mxu0
        %v3915 = vadd.f32 %v3892, %v3914
        %3916 = vdwg.mxu0
        %s3917 = scalar_lea.vmem %s1170, 4
        %3918 = vst.msk [vmem:[%s3917] sm:$0xf] %vm3884, %v3915
        %v3919 = vld [vmem:[%s57] sm:$0xff]
        %v3920 = vld [vmem:[%s57 + $0x8] sm:$0xff]
        %v3921 = vld [vmem:[%s57 + $0x10] sm:$0xff]
        %v3922 = vld [vmem:[%s57 + $0x18] sm:$0xff]
        %v3923 = vld [vmem:[%s59] sm:$0x1]
        %v3925 = vperm.slane %v3923, 0
        %v3928 = vsel %vm1498, %v3851, 0
        %3930 = vmatpush.msra.mxu0 0.0
        %3931 = vmatpush.msra.mxu0 0.0
        %3932 = vmatpush.msra.mxu0 0.0
        %3933 = vmatpush.msra.mxu0 0.0
        %3934 = vmatpush.msra.mxu0 0.0
        %3935 = vmatpush.msra.mxu0 0.0
        %3936 = vmatpush.msra.mxu0 0.0
        %3937 = vmatpush.msra.mxu0 0.0
        %3938 = vmatpush.msra.mxu0 0.0
        %3939 = vmatpush.msra.mxu0 0.0
        %3940 = vmatpush.msra.mxu0 0.0
        %3941 = vmatpush.msra.mxu0 0.0
        %3942 = vmatpush.msra.mxu0 %v3922
        %3943 = vmatpush.msra.mxu0 %v3921
        %3944 = vmatpush.msra.mxu0 %v3920
        %3945 = vmatpush.msra.mxu0 %v3919
        %3946 = vmatmul.f32.gmra.mxu0 %v3928
        %v3947 = vpop.f32.mrf.mxu0
        %v3948 = vadd.f32 %v3925, %v3947
        %3949 = vdwg.mxu0
        %s3950 = scalar_lea.vmem %s1170, 8
        %3951 = vst.msk [vmem:[%s3950] sm:$0xf] %vm3884, %v3948
        %v3952 = vld [vmem:[%s57] sm:$0xff]
        %v3953 = vld [vmem:[%s57 + $0x8] sm:$0xff]
        %v3954 = vld [vmem:[%s57 + $0x10] sm:$0xff]
        %v3955 = vld [vmem:[%s57 + $0x18] sm:$0xff]
        %v3956 = vld [vmem:[%s59] sm:$0x1]
        %v3958 = vperm.slane %v3956, 0
        %v3961 = vsel %vm1498, %v3852, 0
        %3963 = vmatpush.msra.mxu0 0.0
        %3964 = vmatpush.msra.mxu0 0.0
        %3965 = vmatpush.msra.mxu0 0.0
        %3966 = vmatpush.msra.mxu0 0.0
        %3967 = vmatpush.msra.mxu0 0.0
        %3968 = vmatpush.msra.mxu0 0.0
        %3969 = vmatpush.msra.mxu0 0.0
        %3970 = vmatpush.msra.mxu0 0.0
        %3971 = vmatpush.msra.mxu0 0.0
        %3972 = vmatpush.msra.mxu0 0.0
        %3973 = vmatpush.msra.mxu0 0.0
        %3974 = vmatpush.msra.mxu0 0.0
        %3975 = vmatpush.msra.mxu0 %v3955
        %3976 = vmatpush.msra.mxu0 %v3954
        %3977 = vmatpush.msra.mxu0 %v3953
        %3978 = vmatpush.msra.mxu0 %v3952
        %3979 = vmatmul.f32.gmra.mxu0 %v3961
        %v3980 = vpop.f32.mrf.mxu0
        %v3981 = vadd.f32 %v3958, %v3980
        %3982 = vdwg.mxu0
        %s3983 = scalar_lea.vmem %s1170, 12
        %3984 = vst.msk [vmem:[%s3983] sm:$0xf] %vm3884, %v3981
        %p3985 = scmp.lt.s32.totalorder %s80, 1
        %s3986 = scalar_select %p3985, %s80, 1
        %s3987 = smul.addr %s3986, 4
        %s3988 = smul.addr %s3987, 4
        %s3989 = scalar_lea.vmem %s61, %s3988
        // Predicated region
        $region208: #{eeg_to_meg_unet_forward.1} parent=139 // pred_check
          %p3990 = pneg %p733
        $region209: #{eeg_to_meg_unet_forward.1} parent=139 // pred_check_branch
          %3992 = sbr.rel (%p3990) target = $region211
        $region210: #{eeg_to_meg_unet_forward.1} parent=139 // pred_region
          _
        $region211: #{eeg_to_meg_unet_forward.1} parent=139 // pred_fallthru
          _
      $region140: #{eeg_to_meg_unet_forward.1} parent=5 // pred_fallthru
        _
      %p3993 = scmp.le.s32.totalorder 2, %s75
      // Predicated region
      $region212: #{eeg_to_meg_unet_forward.1} parent=5 // pred_check
        %p3994 = pneg %p3993
      $region213: #{eeg_to_meg_unet_forward.1} parent=5 // pred_check_branch
        %3996 = sbr.rel (%p3994) target = $region215
      $region214: #{eeg_to_meg_unet_forward.1} parent=5 // pred_region
        %s3997 = ssub.s32 %s75, 2
        // Predicated region
        $region216: #{eeg_to_meg_unet_forward.1} parent=214 // pred_check
          %p3998 = pneg %p739
        $region217: #{eeg_to_meg_unet_forward.1} parent=214 // pred_check_branch
          %4000 = sbr.rel (%p3998) target = $region219
        $region218: #{eeg_to_meg_unet_forward.1} parent=214 // pred_region
          %p4001 = scmp.lt.s32.totalorder %s81, 1
          %s4002 = scalar_select %p4001, %s81, 1
          %s4003 = smul.addr %s4002, 4
          %s4004 = smul.addr %s4003, 4
          %s4005 = scalar_lea.vmem %s61, %s4004
        $region219: #{eeg_to_meg_unet_forward.1} parent=214 // pred_fallthru
          _
      $region215: #{eeg_to_meg_unet_forward.1} parent=5 // pred_fallthru
        _
    $region6: #{eeg_to_meg_unet_forward.1} parent=1 // loop_footer
      %s79 = sadd.s32 1, %s75
    $region7: #{eeg_to_meg_unet_forward.1} parent=1 // loop_footer_branch
      %74 = sbr.rel target = $region3
    $region8: #{eeg_to_meg_unet_forward.1} parent=1 // loop_exit
      _
    %4006 = vsyncpa [#allocation5], 1
    %s4007 = scalar_lea.sflag [#allocation5], 1
    %4008 = vsyncpa %s4007, 1
    %4009 = vsyncpa [#allocation7], 1
    %4010 = vsyncpa [#allocation10], 1
    %4011 = vsyncpa [#allocation13], 1
    %4012 = vsyncpa [#allocation16], 1
    %4013 = vsyncpa [#allocation19], 1
    %4014 = vsyncpa [#allocation22], 1
    %4015 = vsyncpa [#allocation25], 1

</llo_original>
